<compile_context>
chip_gen: v7x
topology: tpu7x:2x2x1
jax: 0.10.0
libtpu: 0.0.40
codegen_flags: <defaults>
</compile_context>

<pallas_src>
import jax
import jax.numpy as jnp
from jax.experimental import pallas as pl
from jax.experimental.pallas import tpu as pltpu

# Hyper-params consistent with DevignModel(input_dim, output_dim, n_etypes, num_steps)
IN_DIM = 16
OUT_DIM = 32
N_ETYPES = 2
NUM_STEPS = 2
CONCAT_DIM = IN_DIM + OUT_DIM        # 48
B = 2                                 # batch of graphs
N_NODES = 16                          # nodes per graph == Conv1d sequence length

# Readout sequence lengths (PyTorch floor-mode pooling).
_L1 = N_NODES - 2                     # after Conv1d(k=3, valid): 14
_LP1 = (_L1 - 3) // 2 + 1             # after MaxPool1d(3, 2): 6
_LP2 = (_LP1 - 2) // 2 + 1            # after MaxPool1d(2, 2): 3


# ----------------------------------------------------------------------------
# Host-side helpers (also used by the plain-JAX reference)
# ----------------------------------------------------------------------------
def _sel_matrix(rows, cols):
    """0/1 matrix S with S[i, 2*i] = 1 -> stride-2 row selection via matmul."""
    i = jax.lax.broadcasted_iota(jnp.int32, (rows, cols), 0)
    j = jax.lax.broadcasted_iota(jnp.int32, (rows, cols), 1)
    return (j == 2 * i).astype(jnp.float32)


def _conv_relu_pool_path(x, w1, b1, w2, b2):
    """Reference: Conv1d(k=3) -> ReLU -> MaxPool1d(3,2) -> Conv1d(k=1) -> ReLU -> MaxPool1d(2,2).

    x: [L, C] channels-last, w1: [3, C, C] (w1[k] == torch_conv.weight[:, :, k].T),
    b1: [1, C], w2: [C, C], b2: [1, C].
    """
    f32 = jnp.float32
    L = x.shape[0]
    t = (jnp.dot(x[0:L - 2], w1[0], preferred_element_type=f32)
         + jnp.dot(x[1:L - 1], w1[1], preferred_element_type=f32)
         + jnp.dot(x[2:L], w1[2], preferred_element_type=f32) + b1)
    t = jnp.maximum(t, 0.0)
    L1 = L - 2
    Lp1 = (L1 - 3) // 2 + 1
    m = jnp.maximum(t[0:L1 - 2], jnp.maximum(t[1:L1 - 1], t[2:L1]))
    p1 = jnp.dot(_sel_matrix(Lp1, L1 - 2), m, preferred_element_type=f32)
    t2 = jnp.maximum(jnp.dot(p1, w2, preferred_element_type=f32) + b2, 0.0)
    Lp2 = (Lp1 - 2) // 2 + 1
    m2 = jnp.maximum(t2[0:Lp1 - 1], t2[1:Lp1])
    p2 = jnp.dot(_sel_matrix(Lp2, Lp1 - 1), m2, preferred_element_type=f32)
    return p2


def _ggnn_steps(h, adj, wmsg, bmsg, wih, bih, whh, bhh):
    """Reference DGL GatedGraphConv on one dense graph.

    h: [N, D]; adj: [E, N, N] (adj[e, dst, src]); wmsg: [E, D, D]; bmsg: [E, 1, D]
    wih/whh: [3, D, D]; bih/bhh: [3, 1, D]   (torch GRUCell gate order: r, z, n;
    wih[g] == GRUCell.weight_ih[g*D:(g+1)*D, :].T, wmsg[e] == linears[e].weight.T)
    """
    f32 = jnp.float32
    for _ in range(NUM_STEPS):
        a = jnp.zeros_like(h)
        for e in range(N_ETYPES):
            msg = jnp.dot(h, wmsg[e], preferred_element_type=f32) + bmsg[e]
            a = a + jnp.dot(adj[e], msg, preferred_element_type=f32)
        r = jax.nn.sigmoid(jnp.dot(a, wih[0], preferred_element_type=f32) + bih[0]
                           + jnp.dot(h, whh[0], preferred_element_type=f32) + bhh[0])
        z = jax.nn.sigmoid(jnp.dot(a, wih[1], preferred_element_type=f32) + bih[1]
                           + jnp.dot(h, whh[1], preferred_element_type=f32) + bhh[1])
        n = jnp.tanh(jnp.dot(a, wih[2], preferred_element_type=f32) + bih[2]
                     + r * (jnp.dot(h, whh[2], preferred_element_type=f32) + bhh[2]))
        h = (1.0 - z) * n + z * h
    return h


# ----------------------------------------------------------------------------
# Fused Pallas kernel: one grid step processes `chunk` whole graphs
# ----------------------------------------------------------------------------
def _make_devign_kernel(chunk):
    def kernel(hpad_ref, adj_ref,
               wmsg_ref, bmsg_ref, wih_ref, bih_ref, whh_ref, bhh_ref,
               w1y_ref, b1y_ref, w2y_ref, b2y_ref,
               w1zh_ref, w1zh0_ref, b1z_ref, w2z_ref, b2z_ref,
               wy_ref, by_ref, wz_ref, bz_ref,
               sel1_ref, sel2_ref,
               out_ref):
        f32 = jnp.float32
        N, D, E, L1 = N_NODES, OUT_DIM, N_ETYPES, _L1

        h0p = hpad_ref[...]                       # [chunk*N, D] host-zero-padded h0
        adj = adj_ref[...]                        # [chunk, E, N, N] (adj[b, e, dst, src])
        h = h0p

        # --- GGNN steps (unrolled).  Message / gate matmuls are batched over all graphs
        # in the chunk (batch rides the MXU M dimension); only the adjacency aggregation
        # is per-graph (static, aligned row slices). ---
        for _ in range(NUM_STEPS):
            msgs = [jnp.dot(h, wmsg_ref[e], preferred_element_type=f32) + bmsg_ref[e]
                    for e in range(E)]                                   # each [chunk*N, D]
            a_parts = []
            for b in range(chunk):
                o = b * N
                acc = jnp.dot(adj[b, 0], msgs[0][o:o + N], preferred_element_type=f32)
                for e in range(1, E):
                    acc = acc + jnp.dot(adj[b, e], msgs[e][o:o + N],
                                        preferred_element_type=f32)
                a_parts.append(acc)
            a = jnp.concatenate(a_parts, axis=0) if chunk > 1 else a_parts[0]

            # GRUCell (gate order r, z, n); gates un-fused so every result is lane-aligned
            # at offset 0 (no 32/64-lane sub-stripe slices; MXU has slack, XLU does not).
            r = jax.nn.sigmoid(jnp.dot(a, wih_ref[0], preferred_element_type=f32) + bih_ref[0]
                               + jnp.dot(h, whh_ref[0], preferred_element_type=f32) + bhh_ref[0])
            z = jax.nn.sigmoid(jnp.dot(a, wih_ref[1], preferred_element_type=f32) + bih_ref[1]
                               + jnp.dot(h, whh_ref[1], preferred_element_type=f32) + bhh_ref[1])
            n = jnp.tanh(jnp.dot(a, wih_ref[2], preferred_element_type=f32) + bih_ref[2]
                         + r * (jnp.dot(h, whh_ref[2], preferred_element_type=f32) + bhh_ref[2]))
            h = (1.0 - z) * n + z * h                                    # h_next

        # --- Readout: Conv1d(k=3) as matmul-then-shift (no im2col scratch).
        # The concat path consumes c = [h_next | h0] via split weights: the h0 part uses the
        # zero-padded h0 against a row-zero-padded weight, so no concat is materialized. ---
        ty_taps = [jnp.dot(h, w1y_ref[k], preferred_element_type=f32)
                   for k in range(3)]                                    # each [chunk*N, D]
        tz_taps = [jnp.dot(h, w1zh_ref[k], preferred_element_type=f32)
                   + jnp.dot(h0p, w1zh0_ref[k], preferred_element_type=f32)
                   for k in range(3)]                                    # each [chunk*N, C]

        sel1 = sel1_ref[...]                      # [LP1, L1-2] host-precomputed selector
        sel2 = sel2_ref[...]                      # [LP2, LP1-1]
        b1y = b1y_ref[...]; w2y = w2y_ref[...]; b2y = b2y_ref[...]
        b1z = b1z_ref[...]; w2z = w2z_ref[...]; b2z = b2z_ref[...]
        wy = wy_ref[...]; by = by_ref[...]; wz = wz_ref[...]; bz = bz_ref[...]

        def pool_conv_pool(t, w2, b2):
            # MaxPool1d(3, 2) -> Conv1d(k=1) + ReLU -> MaxPool1d(2, 2)
            m = jnp.maximum(t[0:L1 - 2], jnp.maximum(t[1:L1 - 1], t[2:L1]))
            p1 = jnp.dot(sel1, m, preferred_element_type=f32)            # [LP1, C]
            t2 = jnp.maximum(jnp.dot(p1, w2, preferred_element_type=f32) + b2, 0.0)
            m2 = jnp.maximum(t2[0:_LP1 - 1], t2[1:_LP1])
            return jnp.dot(sel2, m2, preferred_element_type=f32)         # [LP2, C]

        for b in range(chunk):
            o = b * N
            ty = jnp.maximum(ty_taps[0][o:o + L1] + ty_taps[1][o + 1:o + 1 + L1]
                             + ty_taps[2][o + 2:o + 2 + L1] + b1y, 0.0)  # [L1, D]
            tz = jnp.maximum(tz_taps[0][o:o + L1] + tz_taps[1][o + 1:o + 1 + L1]
                             + tz_taps[2][o + 2:o + 2 + L1] + b1z, 0.0)  # [L1, C]
            y2 = pool_conv_pool(ty, w2y, b2y)                            # [LP2, OUT_DIM]
            z2 = pool_conv_pool(tz, w2z, b2z)                            # [LP2, CONCAT_DIM]

            # mlp_y / mlp_z (out_features=1) as lane reductions, then mean + sigmoid.
            ys = jnp.sum(y2 * wy, axis=-1, keepdims=True) + by           # [LP2, 1]
            zs = jnp.sum(z2 * wz, axis=-1, keepdims=True) + bz           # [LP2, 1]
            avg = jnp.sum(ys * zs, axis=0, keepdims=True) / jnp.float32(_LP2)
            res = jax.nn.sigmoid(avg)                                    # [1, 1]
            out_ref[b] = jnp.broadcast_to(res, (8, 128))                 # lane-dense store

    return kernel


# ----------------------------------------------------------------------------
# Wrapper
# ----------------------------------------------------------------------------
def devign_forward(h0, adj, packed, batch_chunk=None):
    """batch_chunk=None processes the whole batch in a single grid step (best for
    single-TC v5e/v6e); on v7x pass batch_chunk = B // 2 so the 'parallel' grid axis
    of length 2 can shard across the two TensorCores."""
    bsz, n, _ = h0.shape
    D, C, E = OUT_DIM, CONCAT_DIM, N_ETYPES
    chunk = bsz if batch_chunk is None else batch_chunk
    assert bsz % chunk == 0
    num_chunks = bsz // chunk

    # Host-side zero-pad of h0 to out_feats (DGL GatedGraphConv input padding) and
    # flatten to [B*N, D] so the batch rides the matmul M dimension.
    hpad = jnp.concatenate(
        [h0, jnp.zeros((bsz, n, D - IN_DIM), h0.dtype)], axis=-1).reshape(bsz * n, D)

    def full(shape):
        nd = len(shape)
        return pl.BlockSpec(shape, lambda c, _nd=nd: (0,) * _nd)

    out = pl.pallas_call(
        _make_devign_kernel(chunk),
        grid=(num_chunks,),
        in_specs=[
            pl.BlockSpec((chunk * n, D), lambda c: (c, 0)),
            pl.BlockSpec((chunk, E, n, n), lambda c: (c, 0, 0, 0)),
            full((E, D, D)), full((E, 1, D)),
            full((3, D, D)), full((3, 1, D)),
            full((3, D, D)), full((3, 1, D)),
            full((3, D, D)), full((1, D)), full((D, D)), full((1, D)),
            full((3, D, C)), full((3, D, C)), full((1, C)),
            full((C, C)), full((1, C)),
            full((1, D)), full((1, 1)), full((1, C)), full((1, 1)),
            full((_LP1, _L1 - 2)), full((_LP2, _LP1 - 1)),
        ],
        out_specs=pl.BlockSpec((chunk, 8, 128), lambda c: (c, 0, 0)),
        out_shape=jax.ShapeDtypeStruct((bsz, 8, 128), jnp.float32),
        compiler_params=pltpu.CompilerParams(dimension_semantics=("parallel",)),
    )(hpad, adj,
      packed["wmsg"], packed["bmsg"],
      packed["wih"], packed["bih"], packed["whh"], packed["bhh"],
      packed["w1y"], packed["b1y"], packed["w2y"], packed["b2y"],
      packed["w1z_h"], packed["w1z_h0p"], packed["b1z"],
      packed["w2z"], packed["b2z"],
      packed["wy"], packed["by"], packed["wz"], packed["bz"],
      packed["sel1"], packed["sel2"])

    return out[:, 0, 0]                                   # [B], like result.squeeze(-1)


def pack_params(p):
    """One-time host-side weight packing for the fused kernel."""
    D, C = OUT_DIM, CONCAT_DIM
    w1z = p["c1z_w"]                                      # [3, C, C] per-tap (in, out)
    # conv_l1_for_concat split: rows acting on h_next and rows acting on h0.  The h0 part
    # is zero-padded to D rows so the (host-padded) [h0 | 0] features can be used directly:
    # c @ W == h_next @ W[:D] + h0_pad @ pad(W[D:]).
    w1z_h0p = jnp.concatenate(
        [w1z[:, D:, :], jnp.zeros((3, D - IN_DIM, C), jnp.float32)], axis=1)
    return dict(
        # GGNN weights kept per-etype / per-gate (un-fused) so every matmul result is
        # lane-aligned at offset 0.
        wmsg=p["wmsg"], bmsg=p["bmsg"],
        wih=p["wih"], bih=p["bih"], whh=p["whh"], bhh=p["bhh"],
        # conv_l1 / conv_l2 (y path): per-tap weights for matmul-then-shift
        w1y=p["c1y_w"], b1y=p["c1y_b"], w2y=p["c2y_w"], b2y=p["c2y_b"],
        # conv_l1_for_concat / conv_l2_for_concat (z path)
        w1z_h=w1z[:, :D, :], w1z_h0p=w1z_h0p,
        b1z=p["c1z_b"], w2z=p["c2z_w"], b2z=p["c2z_b"],
        wy=p["wy"], by=p["by"], wz=p["wz"], bz=p["bz"],
        # stride-2 maxpool row-selection matrices (compile-time constants)
        sel1=_sel_matrix(_LP1, _L1 - 2),
        sel2=_sel_matrix(_LP2, _LP1 - 1),
    )


# ----------------------------------------------------------------------------
# Plain-JAX reference with identical math (for verification)
# ----------------------------------------------------------------------------
def devign_reference(h0, adj, params):
    bsz, n, _ = h0.shape
    D = OUT_DIM
    h_pad = jnp.concatenate([h0, jnp.zeros((bsz, n, D - IN_DIM), h0.dtype)], axis=-1)
    ggnn = jax.vmap(lambda h, a: _ggnn_steps(h, a, params["wmsg"], params["bmsg"],
                                             params["wih"], params["bih"],
                                             params["whh"], params["bhh"]))
    h_next = ggnn(h_pad, adj)
    c = jnp.concatenate([h_next, h0], axis=-1)
    path = jax.vmap(_conv_relu_pool_path, in_axes=(0, None, None, None, None))
    y2 = path(h_next, params["c1y_w"], params["c1y_b"], params["c2y_w"], params["c2y_b"])
    z2 = path(c, params["c1z_w"], params["c1z_b"], params["c2z_w"], params["c2z_b"])
    ys = jnp.sum(y2 * params["wy"], axis=-1, keepdims=True) + params["by"]
    zs = jnp.sum(z2 * params["wz"], axis=-1, keepdims=True) + params["bz"]
    avg = (ys * zs).mean(axis=1)
    return jax.nn.sigmoid(avg)[:, 0]


def init_params(key):
    """Deterministic synthetic parameters (shapes from DevignModel.__init__)."""
    D, C, E = OUT_DIM, CONCAT_DIM, N_ETYPES
    keys = jax.random.split(key, 16)
    s = 0.2
    u = lambda k, shape: jax.random.uniform(k, shape, jnp.float32, -s, s)
    return dict(
        # GatedGraphConv: per-etype Linear(D, D) + GRUCell(D, D)
        wmsg=u(keys[0], (E, D, D)), bmsg=u(keys[1], (E, 1, D)),
        wih=u(keys[2], (3, D, D)), bih=u(keys[3], (3, 1, D)),
        whh=u(keys[4], (3, D, D)), bhh=u(keys[5], (3, 1, D)),
        # conv_l1 (D,D,3), conv_l2 (D,D,1)
        c1y_w=u(keys[6], (3, D, D)), c1y_b=u(keys[7], (1, D)),
        c2y_w=u(keys[8], (D, D)), c2y_b=u(keys[9], (1, D)),
        # conv_l1_for_concat (C,C,3), conv_l2_for_concat (C,C,1)
        c1z_w=u(keys[10], (3, C, C)), c1z_b=u(keys[11], (1, C)),
        c2z_w=u(keys[12], (C, C)), c2z_b=u(keys[13], (1, C)),
        # mlp_y: Linear(D, 1), mlp_z: Linear(C, 1)
        wy=u(keys[14], (1, D)), by=jnp.zeros((1, 1), jnp.float32),
        wz=u(keys[15], (1, C)), bz=jnp.zeros((1, 1), jnp.float32),
    )


if __name__ == "__main__":
    key = jax.random.PRNGKey(0)
    k_h, k_adj, k_p = jax.random.split(key, 3)
    # Synthetic batched graph: node features + dense per-etype adjacency.
    # TODO(synk): ragged graphs (fewer than N_NODES real nodes per graph) would need a node
    # mask to exactly match DGL unbatching; this setup assumes dense fixed-size graphs.
    h0 = jax.random.normal(k_h, (B, N_NODES, IN_DIM), jnp.float32)
    adj = (jax.random.uniform(k_adj, (B, N_ETYPES, N_NODES, N_NODES)) < 0.3).astype(jnp.float32)
    params = init_params(k_p)
    packed = pack_params(params)

    out = jax.block_until_ready(devign_forward(h0, adj, packed))
    ref = jax.block_until_ready(devign_reference(h0, adj, params))
    assert out.shape == (B,), out.shape
    if not jnp.allclose(out, ref, atol=2e-3, rtol=1e-2):
        raise AssertionError(f"kernel/reference mismatch: {out} vs {ref}")
    print("KERNEL_OK")
</pallas_src>

<mosaic_0001>
module attributes {stable_mosaic.version = 11 : i64} {
  func.func @kernel(%arg0: i32, %arg1: memref<32x32xf32, #tpu.memory_space<vmem>>, %arg2: memref<2x2x16x16xf32, #tpu.memory_space<vmem>>, %arg3: memref<2x32x32xf32, #tpu.memory_space<vmem>>, %arg4: memref<2x1x32xf32, #tpu.memory_space<vmem>>, %arg5: memref<3x32x32xf32, #tpu.memory_space<vmem>>, %arg6: memref<3x1x32xf32, #tpu.memory_space<vmem>>, %arg7: memref<3x32x32xf32, #tpu.memory_space<vmem>>, %arg8: memref<3x1x32xf32, #tpu.memory_space<vmem>>, %arg9: memref<3x32x32xf32, #tpu.memory_space<vmem>>, %arg10: memref<1x32xf32, #tpu.memory_space<vmem>>, %arg11: memref<32x32xf32, #tpu.memory_space<vmem>>, %arg12: memref<1x32xf32, #tpu.memory_space<vmem>>, %arg13: memref<3x32x48xf32, #tpu.memory_space<vmem>>, %arg14: memref<3x32x48xf32, #tpu.memory_space<vmem>>, %arg15: memref<1x48xf32, #tpu.memory_space<vmem>>, %arg16: memref<48x48xf32, #tpu.memory_space<vmem>>, %arg17: memref<1x48xf32, #tpu.memory_space<vmem>>, %arg18: memref<1x32xf32, #tpu.memory_space<vmem>>, %arg19: memref<1x1xf32, #tpu.memory_space<vmem>>, %arg20: memref<1x48xf32, #tpu.memory_space<vmem>>, %arg21: memref<1x1xf32, #tpu.memory_space<vmem>>, %arg22: memref<6x12xf32, #tpu.memory_space<vmem>>, %arg23: memref<3x5xf32, #tpu.memory_space<vmem>>, %arg24: memref<2x8x128xf32, #tpu.memory_space<vmem>>) attributes {dimension_semantics = [#tpu.dimension_semantics<parallel>], iteration_bounds = array<i64: 1>, scalar_prefetch = 0 : i64, scratch_operands = 0 : i64, tpu.core_type = #tpu.core_type<tc>, window_params = [{transform_indices = @transform_0, window_bounds = array<i64: 32, 32>}, {transform_indices = @transform_1, window_bounds = array<i64: 2, 2, 16, 16>}, {pipeline_mode = #tpu.pipeline_mode<synchronous>, transform_indices = @transform_2, window_bounds = array<i64: 2, 32, 32>}, {pipeline_mode = #tpu.pipeline_mode<synchronous>, transform_indices = @transform_3, window_bounds = array<i64: 2, 1, 32>}, {pipeline_mode = #tpu.pipeline_mode<synchronous>, transform_indices = @transform_4, window_bounds = array<i64: 3, 32, 32>}, {pipeline_mode = #tpu.pipeline_mode<synchronous>, transform_indices = @transform_5, window_bounds = array<i64: 3, 1, 32>}, {pipeline_mode = #tpu.pipeline_mode<synchronous>, transform_indices = @transform_6, window_bounds = array<i64: 3, 32, 32>}, {pipeline_mode = #tpu.pipeline_mode<synchronous>, transform_indices = @transform_7, window_bounds = array<i64: 3, 1, 32>}, {pipeline_mode = #tpu.pipeline_mode<synchronous>, transform_indices = @transform_8, window_bounds = array<i64: 3, 32, 32>}, {pipeline_mode = #tpu.pipeline_mode<synchronous>, transform_indices = @transform_9, window_bounds = array<i64: 1, 32>}, {pipeline_mode = #tpu.pipeline_mode<synchronous>, transform_indices = @transform_10, window_bounds = array<i64: 32, 32>}, {pipeline_mode = #tpu.pipeline_mode<synchronous>, transform_indices = @transform_11, window_bounds = array<i64: 1, 32>}, {pipeline_mode = #tpu.pipeline_mode<synchronous>, transform_indices = @transform_12, window_bounds = array<i64: 3, 32, 48>}, {pipeline_mode = #tpu.pipeline_mode<synchronous>, transform_indices = @transform_13, window_bounds = array<i64: 3, 32, 48>}, {pipeline_mode = #tpu.pipeline_mode<synchronous>, transform_indices = @transform_14, window_bounds = array<i64: 1, 48>}, {pipeline_mode = #tpu.pipeline_mode<synchronous>, transform_indices = @transform_15, window_bounds = array<i64: 48, 48>}, {pipeline_mode = #tpu.pipeline_mode<synchronous>, transform_indices = @transform_16, window_bounds = array<i64: 1, 48>}, {pipeline_mode = #tpu.pipeline_mode<synchronous>, transform_indices = @transform_17, window_bounds = array<i64: 1, 32>}, {pipeline_mode = #tpu.pipeline_mode<synchronous>, transform_indices = @transform_18, window_bounds = array<i64: 1, 1>}, {pipeline_mode = #tpu.pipeline_mode<synchronous>, transform_indices = @transform_19, window_bounds = array<i64: 1, 48>}, {pipeline_mode = #tpu.pipeline_mode<synchronous>, transform_indices = @transform_20, window_bounds = array<i64: 1, 1>}, {pipeline_mode = #tpu.pipeline_mode<synchronous>, transform_indices = @transform_21, window_bounds = array<i64: 6, 12>}, {pipeline_mode = #tpu.pipeline_mode<synchronous>, transform_indices = @transform_22, window_bounds = array<i64: 3, 5>}, {transform_indices = @transform_23, window_bounds = array<i64: 2, 8, 128>}]} {
    %c0 = arith.constant 0 : index
    %c0_0 = arith.constant 0 : index
    %0 = vector.load %arg1[%c0, %c0_0] : memref<32x32xf32, #tpu.memory_space<vmem>>, vector<32x32xf32>
    %c0_1 = arith.constant 0 : index
    %c0_2 = arith.constant 0 : index
    %c0_3 = arith.constant 0 : index
    %c0_4 = arith.constant 0 : index
    %1 = vector.load %arg2[%c0_1, %c0_2, %c0_3, %c0_4] : memref<2x2x16x16xf32, #tpu.memory_space<vmem>>, vector<2x2x16x16xf32>
    %c0_5 = arith.constant 0 : index
    %c0_6 = arith.constant 0 : index
    %c0_7 = arith.constant 0 : index
    %2 = vector.load %arg3[%c0_5, %c0_6, %c0_7] : memref<2x32x32xf32, #tpu.memory_space<vmem>>, vector<1x32x32xf32>
    %3 = vector.shape_cast %2 : vector<1x32x32xf32> to vector<32x32xf32>
    %cst = arith.constant dense<0.000000e+00> : vector<32x32xf32>
    %4 = tpu.matmul %0, %3, %cst {dimension_numbers = #tpu.dot_dimension_numbers<[1], [0], [0], [1], [0, 0, 1, 1], [], []>} : vector<32x32xf32>, vector<32x32xf32>, vector<32x32xf32> -> vector<32x32xf32>
    %c0_8 = arith.constant 0 : index
    %c0_9 = arith.constant 0 : index
    %c0_10 = arith.constant 0 : index
    %5 = vector.load %arg4[%c0_8, %c0_9, %c0_10] : memref<2x1x32xf32, #tpu.memory_space<vmem>>, vector<1x1x32xf32>
    %6 = vector.shape_cast %5 : vector<1x1x32xf32> to vector<1x32xf32>
    %7 = vector.broadcast %6 : vector<1x32xf32> to vector<32x32xf32>
    %8 = arith.addf %4, %7 : vector<32x32xf32>
    %c1 = arith.constant 1 : index
    %c0_11 = arith.constant 0 : index
    %c0_12 = arith.constant 0 : index
    %9 = vector.load %arg3[%c1, %c0_11, %c0_12] : memref<2x32x32xf32, #tpu.memory_space<vmem>>, vector<1x32x32xf32>
    %10 = vector.shape_cast %9 : vector<1x32x32xf32> to vector<32x32xf32>
    %cst_13 = arith.constant dense<0.000000e+00> : vector<32x32xf32>
    %11 = tpu.matmul %0, %10, %cst_13 {dimension_numbers = #tpu.dot_dimension_numbers<[1], [0], [0], [1], [0, 0, 1, 1], [], []>} : vector<32x32xf32>, vector<32x32xf32>, vector<32x32xf32> -> vector<32x32xf32>
    %c1_14 = arith.constant 1 : index
    %c0_15 = arith.constant 0 : index
    %c0_16 = arith.constant 0 : index
    %12 = vector.load %arg4[%c1_14, %c0_15, %c0_16] : memref<2x1x32xf32, #tpu.memory_space<vmem>>, vector<1x1x32xf32>
    %13 = vector.shape_cast %12 : vector<1x1x32xf32> to vector<1x32xf32>
    %14 = vector.broadcast %13 : vector<1x32xf32> to vector<32x32xf32>
    %15 = arith.addf %11, %14 : vector<32x32xf32>
    %16 = vector.extract_strided_slice %1 {offsets = [0, 0, 0, 0], sizes = [1, 1, 16, 16], strides = [1, 1, 1, 1]} : vector<2x2x16x16xf32> to vector<1x1x16x16xf32>
    %17 = vector.shape_cast %16 : vector<1x1x16x16xf32> to vector<16x16xf32>
    %18 = vector.extract_strided_slice %8 {offsets = [0, 0], sizes = [16, 32], strides = [1, 1]} : vector<32x32xf32> to vector<16x32xf32>
    %cst_17 = arith.constant dense<0.000000e+00> : vector<16x32xf32>
    %19 = tpu.matmul %17, %18, %cst_17 {dimension_numbers = #tpu.dot_dimension_numbers<[1], [0], [0], [1], [0, 0, 1, 1], [], []>} : vector<16x16xf32>, vector<16x32xf32>, vector<16x32xf32> -> vector<16x32xf32>
    %20 = vector.extract_strided_slice %1 {offsets = [0, 1, 0, 0], sizes = [1, 1, 16, 16], strides = [1, 1, 1, 1]} : vector<2x2x16x16xf32> to vector<1x1x16x16xf32>
    %21 = vector.shape_cast %20 : vector<1x1x16x16xf32> to vector<16x16xf32>
    %22 = vector.extract_strided_slice %15 {offsets = [0, 0], sizes = [16, 32], strides = [1, 1]} : vector<32x32xf32> to vector<16x32xf32>
    %cst_18 = arith.constant dense<0.000000e+00> : vector<16x32xf32>
    %23 = tpu.matmul %21, %22, %cst_18 {dimension_numbers = #tpu.dot_dimension_numbers<[1], [0], [0], [1], [0, 0, 1, 1], [], []>} : vector<16x16xf32>, vector<16x32xf32>, vector<16x32xf32> -> vector<16x32xf32>
    %24 = arith.addf %19, %23 : vector<16x32xf32>
    %25 = vector.extract_strided_slice %1 {offsets = [1, 0, 0, 0], sizes = [1, 1, 16, 16], strides = [1, 1, 1, 1]} : vector<2x2x16x16xf32> to vector<1x1x16x16xf32>
    %26 = vector.shape_cast %25 : vector<1x1x16x16xf32> to vector<16x16xf32>
    %27 = vector.extract_strided_slice %8 {offsets = [16, 0], sizes = [16, 32], strides = [1, 1]} : vector<32x32xf32> to vector<16x32xf32>
    %cst_19 = arith.constant dense<0.000000e+00> : vector<16x32xf32>
    %28 = tpu.matmul %26, %27, %cst_19 {dimension_numbers = #tpu.dot_dimension_numbers<[1], [0], [0], [1], [0, 0, 1, 1], [], []>} : vector<16x16xf32>, vector<16x32xf32>, vector<16x32xf32> -> vector<16x32xf32>
    %29 = vector.extract_strided_slice %1 {offsets = [1, 1, 0, 0], sizes = [1, 1, 16, 16], strides = [1, 1, 1, 1]} : vector<2x2x16x16xf32> to vector<1x1x16x16xf32>
    %30 = vector.shape_cast %29 : vector<1x1x16x16xf32> to vector<16x16xf32>
    %31 = vector.extract_strided_slice %15 {offsets = [16, 0], sizes = [16, 32], strides = [1, 1]} : vector<32x32xf32> to vector<16x32xf32>
    %cst_20 = arith.constant dense<0.000000e+00> : vector<16x32xf32>
    %32 = tpu.matmul %30, %31, %cst_20 {dimension_numbers = #tpu.dot_dimension_numbers<[1], [0], [0], [1], [0, 0, 1, 1], [], []>} : vector<16x16xf32>, vector<16x32xf32>, vector<16x32xf32> -> vector<16x32xf32>
    %33 = arith.addf %28, %32 : vector<16x32xf32>
    %34 = tpu.concatenate %24, %33 in 0 : vector<16x32xf32>, vector<16x32xf32> -> vector<32x32xf32>
    %c0_21 = arith.constant 0 : index
    %c0_22 = arith.constant 0 : index
    %c0_23 = arith.constant 0 : index
    %35 = vector.load %arg5[%c0_21, %c0_22, %c0_23] : memref<3x32x32xf32, #tpu.memory_space<vmem>>, vector<1x32x32xf32>
    %36 = vector.shape_cast %35 : vector<1x32x32xf32> to vector<32x32xf32>
    %cst_24 = arith.constant dense<0.000000e+00> : vector<32x32xf32>
    %37 = tpu.matmul %34, %36, %cst_24 {dimension_numbers = #tpu.dot_dimension_numbers<[1], [0], [0], [1], [0, 0, 1, 1], [], []>} : vector<32x32xf32>, vector<32x32xf32>, vector<32x32xf32> -> vector<32x32xf32>
    %c0_25 = arith.constant 0 : index
    %c0_26 = arith.constant 0 : index
    %c0_27 = arith.constant 0 : index
    %38 = vector.load %arg6[%c0_25, %c0_26, %c0_27] : memref<3x1x32xf32, #tpu.memory_space<vmem>>, vector<1x1x32xf32>
    %39 = vector.shape_cast %38 : vector<1x1x32xf32> to vector<1x32xf32>
    %40 = vector.broadcast %39 : vector<1x32xf32> to vector<32x32xf32>
    %41 = arith.addf %37, %40 : vector<32x32xf32>
    %c0_28 = arith.constant 0 : index
    %c0_29 = arith.constant 0 : index
    %c0_30 = arith.constant 0 : index
    %42 = vector.load %arg7[%c0_28, %c0_29, %c0_30] : memref<3x32x32xf32, #tpu.memory_space<vmem>>, vector<1x32x32xf32>
    %43 = vector.shape_cast %42 : vector<1x32x32xf32> to vector<32x32xf32>
    %cst_31 = arith.constant dense<0.000000e+00> : vector<32x32xf32>
    %44 = tpu.matmul %0, %43, %cst_31 {dimension_numbers = #tpu.dot_dimension_numbers<[1], [0], [0], [1], [0, 0, 1, 1], [], []>} : vector<32x32xf32>, vector<32x32xf32>, vector<32x32xf32> -> vector<32x32xf32>
    %45 = arith.addf %41, %44 : vector<32x32xf32>
    %c0_32 = arith.constant 0 : index
    %c0_33 = arith.constant 0 : index
    %c0_34 = arith.constant 0 : index
    %46 = vector.load %arg8[%c0_32, %c0_33, %c0_34] : memref<3x1x32xf32, #tpu.memory_space<vmem>>, vector<1x1x32xf32>
    %47 = vector.shape_cast %46 : vector<1x1x32xf32> to vector<1x32xf32>
    %48 = vector.broadcast %47 : vector<1x32xf32> to vector<32x32xf32>
    %49 = arith.addf %45, %48 : vector<32x32xf32>
    %50 = arith.negf %49 : vector<32x32xf32>
    %51 = math.exp %50 : vector<32x32xf32>
    %cst_35 = arith.constant 1.000000e+00 : f32
    %52 = vector.broadcast %cst_35 : f32 to vector<32x32xf32>
    %53 = arith.addf %52, %51 : vector<32x32xf32>
    %54 = arith.divf %52, %53 : vector<32x32xf32>
    %c1_36 = arith.constant 1 : index
    %c0_37 = arith.constant 0 : index
    %c0_38 = arith.constant 0 : index
    %55 = vector.load %arg5[%c1_36, %c0_37, %c0_38] : memref<3x32x32xf32, #tpu.memory_space<vmem>>, vector<1x32x32xf32>
    %56 = vector.shape_cast %55 : vector<1x32x32xf32> to vector<32x32xf32>
    %cst_39 = arith.constant dense<0.000000e+00> : vector<32x32xf32>
    %57 = tpu.matmul %34, %56, %cst_39 {dimension_numbers = #tpu.dot_dimension_numbers<[1], [0], [0], [1], [0, 0, 1, 1], [], []>} : vector<32x32xf32>, vector<32x32xf32>, vector<32x32xf32> -> vector<32x32xf32>
    %c1_40 = arith.constant 1 : index
    %c0_41 = arith.constant 0 : index
    %c0_42 = arith.constant 0 : index
    %58 = vector.load %arg6[%c1_40, %c0_41, %c0_42] : memref<3x1x32xf32, #tpu.memory_space<vmem>>, vector<1x1x32xf32>
    %59 = vector.shape_cast %58 : vector<1x1x32xf32> to vector<1x32xf32>
    %60 = vector.broadcast %59 : vector<1x32xf32> to vector<32x32xf32>
    %61 = arith.addf %57, %60 : vector<32x32xf32>
    %c1_43 = arith.constant 1 : index
    %c0_44 = arith.constant 0 : index
    %c0_45 = arith.constant 0 : index
    %62 = vector.load %arg7[%c1_43, %c0_44, %c0_45] : memref<3x32x32xf32, #tpu.memory_space<vmem>>, vector<1x32x32xf32>
    %63 = vector.shape_cast %62 : vector<1x32x32xf32> to vector<32x32xf32>
    %cst_46 = arith.constant dense<0.000000e+00> : vector<32x32xf32>
    %64 = tpu.matmul %0, %63, %cst_46 {dimension_numbers = #tpu.dot_dimension_numbers<[1], [0], [0], [1], [0, 0, 1, 1], [], []>} : vector<32x32xf32>, vector<32x32xf32>, vector<32x32xf32> -> vector<32x32xf32>
    %65 = arith.addf %61, %64 : vector<32x32xf32>
    %c1_47 = arith.constant 1 : index
    %c0_48 = arith.constant 0 : index
    %c0_49 = arith.constant 0 : index
    %66 = vector.load %arg8[%c1_47, %c0_48, %c0_49] : memref<3x1x32xf32, #tpu.memory_space<vmem>>, vector<1x1x32xf32>
    %67 = vector.shape_cast %66 : vector<1x1x32xf32> to vector<1x32xf32>
    %68 = vector.broadcast %67 : vector<1x32xf32> to vector<32x32xf32>
    %69 = arith.addf %65, %68 : vector<32x32xf32>
    %70 = arith.negf %69 : vector<32x32xf32>
    %71 = math.exp %70 : vector<32x32xf32>
    %cst_50 = arith.constant 1.000000e+00 : f32
    %72 = vector.broadcast %cst_50 : f32 to vector<32x32xf32>
    %73 = arith.addf %72, %71 : vector<32x32xf32>
    %74 = arith.divf %72, %73 : vector<32x32xf32>
    %c2 = arith.constant 2 : index
    %c0_51 = arith.constant 0 : index
    %c0_52 = arith.constant 0 : index
    %75 = vector.load %arg5[%c2, %c0_51, %c0_52] : memref<3x32x32xf32, #tpu.memory_space<vmem>>, vector<1x32x32xf32>
    %76 = vector.shape_cast %75 : vector<1x32x32xf32> to vector<32x32xf32>
    %cst_53 = arith.constant dense<0.000000e+00> : vector<32x32xf32>
    %77 = tpu.matmul %34, %76, %cst_53 {dimension_numbers = #tpu.dot_dimension_numbers<[1], [0], [0], [1], [0, 0, 1, 1], [], []>} : vector<32x32xf32>, vector<32x32xf32>, vector<32x32xf32> -> vector<32x32xf32>
    %c2_54 = arith.constant 2 : index
    %c0_55 = arith.constant 0 : index
    %c0_56 = arith.constant 0 : index
    %78 = vector.load %arg6[%c2_54, %c0_55, %c0_56] : memref<3x1x32xf32, #tpu.memory_space<vmem>>, vector<1x1x32xf32>
    %79 = vector.shape_cast %78 : vector<1x1x32xf32> to vector<1x32xf32>
    %80 = vector.broadcast %79 : vector<1x32xf32> to vector<32x32xf32>
    %81 = arith.addf %77, %80 : vector<32x32xf32>
    %c2_57 = arith.constant 2 : index
    %c0_58 = arith.constant 0 : index
    %c0_59 = arith.constant 0 : index
    %82 = vector.load %arg7[%c2_57, %c0_58, %c0_59] : memref<3x32x32xf32, #tpu.memory_space<vmem>>, vector<1x32x32xf32>
    %83 = vector.shape_cast %82 : vector<1x32x32xf32> to vector<32x32xf32>
    %cst_60 = arith.constant dense<0.000000e+00> : vector<32x32xf32>
    %84 = tpu.matmul %0, %83, %cst_60 {dimension_numbers = #tpu.dot_dimension_numbers<[1], [0], [0], [1], [0, 0, 1, 1], [], []>} : vector<32x32xf32>, vector<32x32xf32>, vector<32x32xf32> -> vector<32x32xf32>
    %c2_61 = arith.constant 2 : index
    %c0_62 = arith.constant 0 : index
    %c0_63 = arith.constant 0 : index
    %85 = vector.load %arg8[%c2_61, %c0_62, %c0_63] : memref<3x1x32xf32, #tpu.memory_space<vmem>>, vector<1x1x32xf32>
    %86 = vector.shape_cast %85 : vector<1x1x32xf32> to vector<1x32xf32>
    %87 = vector.broadcast %86 : vector<1x32xf32> to vector<32x32xf32>
    %88 = arith.addf %84, %87 : vector<32x32xf32>
    %89 = arith.mulf %54, %88 : vector<32x32xf32>
    %90 = arith.addf %81, %89 : vector<32x32xf32>
    %91 = math.tanh %90 : vector<32x32xf32>
    %cst_64 = arith.constant 1.000000e+00 : f32
    %92 = vector.broadcast %cst_64 : f32 to vector<32x32xf32>
    %93 = arith.subf %92, %74 : vector<32x32xf32>
    %94 = arith.mulf %93, %91 : vector<32x32xf32>
    %95 = arith.mulf %74, %0 : vector<32x32xf32>
    %96 = arith.addf %94, %95 : vector<32x32xf32>
    %c0_65 = arith.constant 0 : index
    %c0_66 = arith.constant 0 : index
    %c0_67 = arith.constant 0 : index
    %97 = vector.load %arg3[%c0_65, %c0_66, %c0_67] : memref<2x32x32xf32, #tpu.memory_space<vmem>>, vector<1x32x32xf32>
    %98 = vector.shape_cast %97 : vector<1x32x32xf32> to vector<32x32xf32>
    %cst_68 = arith.constant dense<0.000000e+00> : vector<32x32xf32>
    %99 = tpu.matmul %96, %98, %cst_68 {dimension_numbers = #tpu.dot_dimension_numbers<[1], [0], [0], [1], [0, 0, 1, 1], [], []>} : vector<32x32xf32>, vector<32x32xf32>, vector<32x32xf32> -> vector<32x32xf32>
    %c0_69 = arith.constant 0 : index
    %c0_70 = arith.constant 0 : index
    %c0_71 = arith.constant 0 : index
    %100 = vector.load %arg4[%c0_69, %c0_70, %c0_71] : memref<2x1x32xf32, #tpu.memory_space<vmem>>, vector<1x1x32xf32>
    %101 = vector.shape_cast %100 : vector<1x1x32xf32> to vector<1x32xf32>
    %102 = vector.broadcast %101 : vector<1x32xf32> to vector<32x32xf32>
    %103 = arith.addf %99, %102 : vector<32x32xf32>
    %c1_72 = arith.constant 1 : index
    %c0_73 = arith.constant 0 : index
    %c0_74 = arith.constant 0 : index
    %104 = vector.load %arg3[%c1_72, %c0_73, %c0_74] : memref<2x32x32xf32, #tpu.memory_space<vmem>>, vector<1x32x32xf32>
    %105 = vector.shape_cast %104 : vector<1x32x32xf32> to vector<32x32xf32>
    %cst_75 = arith.constant dense<0.000000e+00> : vector<32x32xf32>
    %106 = tpu.matmul %96, %105, %cst_75 {dimension_numbers = #tpu.dot_dimension_numbers<[1], [0], [0], [1], [0, 0, 1, 1], [], []>} : vector<32x32xf32>, vector<32x32xf32>, vector<32x32xf32> -> vector<32x32xf32>
    %c1_76 = arith.constant 1 : index
    %c0_77 = arith.constant 0 : index
    %c0_78 = arith.constant 0 : index
    %107 = vector.load %arg4[%c1_76, %c0_77, %c0_78] : memref<2x1x32xf32, #tpu.memory_space<vmem>>, vector<1x1x32xf32>
    %108 = vector.shape_cast %107 : vector<1x1x32xf32> to vector<1x32xf32>
    %109 = vector.broadcast %108 : vector<1x32xf32> to vector<32x32xf32>
    %110 = arith.addf %106, %109 : vector<32x32xf32>
    %111 = vector.extract_strided_slice %1 {offsets = [0, 0, 0, 0], sizes = [1, 1, 16, 16], strides = [1, 1, 1, 1]} : vector<2x2x16x16xf32> to vector<1x1x16x16xf32>
    %112 = vector.shape_cast %111 : vector<1x1x16x16xf32> to vector<16x16xf32>
    %113 = vector.extract_strided_slice %103 {offsets = [0, 0], sizes = [16, 32], strides = [1, 1]} : vector<32x32xf32> to vector<16x32xf32>
    %cst_79 = arith.constant dense<0.000000e+00> : vector<16x32xf32>
    %114 = tpu.matmul %112, %113, %cst_79 {dimension_numbers = #tpu.dot_dimension_numbers<[1], [0], [0], [1], [0, 0, 1, 1], [], []>} : vector<16x16xf32>, vector<16x32xf32>, vector<16x32xf32> -> vector<16x32xf32>
    %115 = vector.extract_strided_slice %1 {offsets = [0, 1, 0, 0], sizes = [1, 1, 16, 16], strides = [1, 1, 1, 1]} : vector<2x2x16x16xf32> to vector<1x1x16x16xf32>
    %116 = vector.shape_cast %115 : vector<1x1x16x16xf32> to vector<16x16xf32>
    %117 = vector.extract_strided_slice %110 {offsets = [0, 0], sizes = [16, 32], strides = [1, 1]} : vector<32x32xf32> to vector<16x32xf32>
    %cst_80 = arith.constant dense<0.000000e+00> : vector<16x32xf32>
    %118 = tpu.matmul %116, %117, %cst_80 {dimension_numbers = #tpu.dot_dimension_numbers<[1], [0], [0], [1], [0, 0, 1, 1], [], []>} : vector<16x16xf32>, vector<16x32xf32>, vector<16x32xf32> -> vector<16x32xf32>
    %119 = arith.addf %114, %118 : vector<16x32xf32>
    %120 = vector.extract_strided_slice %1 {offsets = [1, 0, 0, 0], sizes = [1, 1, 16, 16], strides = [1, 1, 1, 1]} : vector<2x2x16x16xf32> to vector<1x1x16x16xf32>
    %121 = vector.shape_cast %120 : vector<1x1x16x16xf32> to vector<16x16xf32>
    %122 = vector.extract_strided_slice %103 {offsets = [16, 0], sizes = [16, 32], strides = [1, 1]} : vector<32x32xf32> to vector<16x32xf32>
    %cst_81 = arith.constant dense<0.000000e+00> : vector<16x32xf32>
    %123 = tpu.matmul %121, %122, %cst_81 {dimension_numbers = #tpu.dot_dimension_numbers<[1], [0], [0], [1], [0, 0, 1, 1], [], []>} : vector<16x16xf32>, vector<16x32xf32>, vector<16x32xf32> -> vector<16x32xf32>
    %124 = vector.extract_strided_slice %1 {offsets = [1, 1, 0, 0], sizes = [1, 1, 16, 16], strides = [1, 1, 1, 1]} : vector<2x2x16x16xf32> to vector<1x1x16x16xf32>
    %125 = vector.shape_cast %124 : vector<1x1x16x16xf32> to vector<16x16xf32>
    %126 = vector.extract_strided_slice %110 {offsets = [16, 0], sizes = [16, 32], strides = [1, 1]} : vector<32x32xf32> to vector<16x32xf32>
    %cst_82 = arith.constant dense<0.000000e+00> : vector<16x32xf32>
    %127 = tpu.matmul %125, %126, %cst_82 {dimension_numbers = #tpu.dot_dimension_numbers<[1], [0], [0], [1], [0, 0, 1, 1], [], []>} : vector<16x16xf32>, vector<16x32xf32>, vector<16x32xf32> -> vector<16x32xf32>
    %128 = arith.addf %123, %127 : vector<16x32xf32>
    %129 = tpu.concatenate %119, %128 in 0 : vector<16x32xf32>, vector<16x32xf32> -> vector<32x32xf32>
    %c0_83 = arith.constant 0 : index
    %c0_84 = arith.constant 0 : index
    %c0_85 = arith.constant 0 : index
    %130 = vector.load %arg5[%c0_83, %c0_84, %c0_85] : memref<3x32x32xf32, #tpu.memory_space<vmem>>, vector<1x32x32xf32>
    %131 = vector.shape_cast %130 : vector<1x32x32xf32> to vector<32x32xf32>
    %cst_86 = arith.constant dense<0.000000e+00> : vector<32x32xf32>
    %132 = tpu.matmul %129, %131, %cst_86 {dimension_numbers = #tpu.dot_dimension_numbers<[1], [0], [0], [1], [0, 0, 1, 1], [], []>} : vector<32x32xf32>, vector<32x32xf32>, vector<32x32xf32> -> vector<32x32xf32>
    %c0_87 = arith.constant 0 : index
    %c0_88 = arith.constant 0 : index
    %c0_89 = arith.constant 0 : index
    %133 = vector.load %arg6[%c0_87, %c0_88, %c0_89] : memref<3x1x32xf32, #tpu.memory_space<vmem>>, vector<1x1x32xf32>
    %134 = vector.shape_cast %133 : vector<1x1x32xf32> to vector<1x32xf32>
    %135 = vector.broadcast %134 : vector<1x32xf32> to vector<32x32xf32>
    %136 = arith.addf %132, %135 : vector<32x32xf32>
    %c0_90 = arith.constant 0 : index
    %c0_91 = arith.constant 0 : index
    %c0_92 = arith.constant 0 : index
    %137 = vector.load %arg7[%c0_90, %c0_91, %c0_92] : memref<3x32x32xf32, #tpu.memory_space<vmem>>, vector<1x32x32xf32>
    %138 = vector.shape_cast %137 : vector<1x32x32xf32> to vector<32x32xf32>
    %cst_93 = arith.constant dense<0.000000e+00> : vector<32x32xf32>
    %139 = tpu.matmul %96, %138, %cst_93 {dimension_numbers = #tpu.dot_dimension_numbers<[1], [0], [0], [1], [0, 0, 1, 1], [], []>} : vector<32x32xf32>, vector<32x32xf32>, vector<32x32xf32> -> vector<32x32xf32>
    %140 = arith.addf %136, %139 : vector<32x32xf32>
    %c0_94 = arith.constant 0 : index
    %c0_95 = arith.constant 0 : index
    %c0_96 = arith.constant 0 : index
    %141 = vector.load %arg8[%c0_94, %c0_95, %c0_96] : memref<3x1x32xf32, #tpu.memory_space<vmem>>, vector<1x1x32xf32>
    %142 = vector.shape_cast %141 : vector<1x1x32xf32> to vector<1x32xf32>
    %143 = vector.broadcast %142 : vector<1x32xf32> to vector<32x32xf32>
    %144 = arith.addf %140, %143 : vector<32x32xf32>
    %145 = arith.negf %144 : vector<32x32xf32>
    %146 = math.exp %145 : vector<32x32xf32>
    %cst_97 = arith.constant 1.000000e+00 : f32
    %147 = vector.broadcast %cst_97 : f32 to vector<32x32xf32>
    %148 = arith.addf %147, %146 : vector<32x32xf32>
    %149 = arith.divf %147, %148 : vector<32x32xf32>
    %c1_98 = arith.constant 1 : index
    %c0_99 = arith.constant 0 : index
    %c0_100 = arith.constant 0 : index
    %150 = vector.load %arg5[%c1_98, %c0_99, %c0_100] : memref<3x32x32xf32, #tpu.memory_space<vmem>>, vector<1x32x32xf32>
    %151 = vector.shape_cast %150 : vector<1x32x32xf32> to vector<32x32xf32>
    %cst_101 = arith.constant dense<0.000000e+00> : vector<32x32xf32>
    %152 = tpu.matmul %129, %151, %cst_101 {dimension_numbers = #tpu.dot_dimension_numbers<[1], [0], [0], [1], [0, 0, 1, 1], [], []>} : vector<32x32xf32>, vector<32x32xf32>, vector<32x32xf32> -> vector<32x32xf32>
    %c1_102 = arith.constant 1 : index
    %c0_103 = arith.constant 0 : index
    %c0_104 = arith.constant 0 : index
    %153 = vector.load %arg6[%c1_102, %c0_103, %c0_104] : memref<3x1x32xf32, #tpu.memory_space<vmem>>, vector<1x1x32xf32>
    %154 = vector.shape_cast %153 : vector<1x1x32xf32> to vector<1x32xf32>
    %155 = vector.broadcast %154 : vector<1x32xf32> to vector<32x32xf32>
    %156 = arith.addf %152, %155 : vector<32x32xf32>
    %c1_105 = arith.constant 1 : index
    %c0_106 = arith.constant 0 : index
    %c0_107 = arith.constant 0 : index
    %157 = vector.load %arg7[%c1_105, %c0_106, %c0_107] : memref<3x32x32xf32, #tpu.memory_space<vmem>>, vector<1x32x32xf32>
    %158 = vector.shape_cast %157 : vector<1x32x32xf32> to vector<32x32xf32>
    %cst_108 = arith.constant dense<0.000000e+00> : vector<32x32xf32>
    %159 = tpu.matmul %96, %158, %cst_108 {dimension_numbers = #tpu.dot_dimension_numbers<[1], [0], [0], [1], [0, 0, 1, 1], [], []>} : vector<32x32xf32>, vector<32x32xf32>, vector<32x32xf32> -> vector<32x32xf32>
    %160 = arith.addf %156, %159 : vector<32x32xf32>
    %c1_109 = arith.constant 1 : index
    %c0_110 = arith.constant 0 : index
    %c0_111 = arith.constant 0 : index
    %161 = vector.load %arg8[%c1_109, %c0_110, %c0_111] : memref<3x1x32xf32, #tpu.memory_space<vmem>>, vector<1x1x32xf32>
    %162 = vector.shape_cast %161 : vector<1x1x32xf32> to vector<1x32xf32>
    %163 = vector.broadcast %162 : vector<1x32xf32> to vector<32x32xf32>
    %164 = arith.addf %160, %163 : vector<32x32xf32>
    %165 = arith.negf %164 : vector<32x32xf32>
    %166 = math.exp %165 : vector<32x32xf32>
    %cst_112 = arith.constant 1.000000e+00 : f32
    %167 = vector.broadcast %cst_112 : f32 to vector<32x32xf32>
    %168 = arith.addf %167, %166 : vector<32x32xf32>
    %169 = arith.divf %167, %168 : vector<32x32xf32>
    %c2_113 = arith.constant 2 : index
    %c0_114 = arith.constant 0 : index
    %c0_115 = arith.constant 0 : index
    %170 = vector.load %arg5[%c2_113, %c0_114, %c0_115] : memref<3x32x32xf32, #tpu.memory_space<vmem>>, vector<1x32x32xf32>
    %171 = vector.shape_cast %170 : vector<1x32x32xf32> to vector<32x32xf32>
    %cst_116 = arith.constant dense<0.000000e+00> : vector<32x32xf32>
    %172 = tpu.matmul %129, %171, %cst_116 {dimension_numbers = #tpu.dot_dimension_numbers<[1], [0], [0], [1], [0, 0, 1, 1], [], []>} : vector<32x32xf32>, vector<32x32xf32>, vector<32x32xf32> -> vector<32x32xf32>
    %c2_117 = arith.constant 2 : index
    %c0_118 = arith.constant 0 : index
    %c0_119 = arith.constant 0 : index
    %173 = vector.load %arg6[%c2_117, %c0_118, %c0_119] : memref<3x1x32xf32, #tpu.memory_space<vmem>>, vector<1x1x32xf32>
    %174 = vector.shape_cast %173 : vector<1x1x32xf32> to vector<1x32xf32>
    %175 = vector.broadcast %174 : vector<1x32xf32> to vector<32x32xf32>
    %176 = arith.addf %172, %175 : vector<32x32xf32>
    %c2_120 = arith.constant 2 : index
    %c0_121 = arith.constant 0 : index
    %c0_122 = arith.constant 0 : index
    %177 = vector.load %arg7[%c2_120, %c0_121, %c0_122] : memref<3x32x32xf32, #tpu.memory_space<vmem>>, vector<1x32x32xf32>
    %178 = vector.shape_cast %177 : vector<1x32x32xf32> to vector<32x32xf32>
    %cst_123 = arith.constant dense<0.000000e+00> : vector<32x32xf32>
    %179 = tpu.matmul %96, %178, %cst_123 {dimension_numbers = #tpu.dot_dimension_numbers<[1], [0], [0], [1], [0, 0, 1, 1], [], []>} : vector<32x32xf32>, vector<32x32xf32>, vector<32x32xf32> -> vector<32x32xf32>
    %c2_124 = arith.constant 2 : index
    %c0_125 = arith.constant 0 : index
    %c0_126 = arith.constant 0 : index
    %180 = vector.load %arg8[%c2_124, %c0_125, %c0_126] : memref<3x1x32xf32, #tpu.memory_space<vmem>>, vector<1x1x32xf32>
    %181 = vector.shape_cast %180 : vector<1x1x32xf32> to vector<1x32xf32>
    %182 = vector.broadcast %181 : vector<1x32xf32> to vector<32x32xf32>
    %183 = arith.addf %179, %182 : vector<32x32xf32>
    %184 = arith.mulf %149, %183 : vector<32x32xf32>
    %185 = arith.addf %176, %184 : vector<32x32xf32>
    %186 = math.tanh %185 : vector<32x32xf32>
    %cst_127 = arith.constant 1.000000e+00 : f32
    %187 = vector.broadcast %cst_127 : f32 to vector<32x32xf32>
    %188 = arith.subf %187, %169 : vector<32x32xf32>
    %189 = arith.mulf %188, %186 : vector<32x32xf32>
    %190 = arith.mulf %169, %96 : vector<32x32xf32>
    %191 = arith.addf %189, %190 : vector<32x32xf32>
    %c0_128 = arith.constant 0 : index
    %c0_129 = arith.constant 0 : index
    %c0_130 = arith.constant 0 : index
    %192 = vector.load %arg9[%c0_128, %c0_129, %c0_130] : memref<3x32x32xf32, #tpu.memory_space<vmem>>, vector<1x32x32xf32>
    %193 = vector.shape_cast %192 : vector<1x32x32xf32> to vector<32x32xf32>
    %cst_131 = arith.constant dense<0.000000e+00> : vector<32x32xf32>
    %194 = tpu.matmul %191, %193, %cst_131 {dimension_numbers = #tpu.dot_dimension_numbers<[1], [0], [0], [1], [0, 0, 1, 1], [], []>} : vector<32x32xf32>, vector<32x32xf32>, vector<32x32xf32> -> vector<32x32xf32>
    %c1_132 = arith.constant 1 : index
    %c0_133 = arith.constant 0 : index
    %c0_134 = arith.constant 0 : index
    %195 = vector.load %arg9[%c1_132, %c0_133, %c0_134] : memref<3x32x32xf32, #tpu.memory_space<vmem>>, vector<1x32x32xf32>
    %196 = vector.shape_cast %195 : vector<1x32x32xf32> to vector<32x32xf32>
    %cst_135 = arith.constant dense<0.000000e+00> : vector<32x32xf32>
    %197 = tpu.matmul %191, %196, %cst_135 {dimension_numbers = #tpu.dot_dimension_numbers<[1], [0], [0], [1], [0, 0, 1, 1], [], []>} : vector<32x32xf32>, vector<32x32xf32>, vector<32x32xf32> -> vector<32x32xf32>
    %c2_136 = arith.constant 2 : index
    %c0_137 = arith.constant 0 : index
    %c0_138 = arith.constant 0 : index
    %198 = vector.load %arg9[%c2_136, %c0_137, %c0_138] : memref<3x32x32xf32, #tpu.memory_space<vmem>>, vector<1x32x32xf32>
    %199 = vector.shape_cast %198 : vector<1x32x32xf32> to vector<32x32xf32>
    %cst_139 = arith.constant dense<0.000000e+00> : vector<32x32xf32>
    %200 = tpu.matmul %191, %199, %cst_139 {dimension_numbers = #tpu.dot_dimension_numbers<[1], [0], [0], [1], [0, 0, 1, 1], [], []>} : vector<32x32xf32>, vector<32x32xf32>, vector<32x32xf32> -> vector<32x32xf32>
    %c0_140 = arith.constant 0 : index
    %c0_141 = arith.constant 0 : index
    %c0_142 = arith.constant 0 : index
    %201 = vector.load %arg13[%c0_140, %c0_141, %c0_142] : memref<3x32x48xf32, #tpu.memory_space<vmem>>, vector<1x32x48xf32>
    %202 = vector.shape_cast %201 : vector<1x32x48xf32> to vector<32x48xf32>
    %cst_143 = arith.constant dense<0.000000e+00> : vector<32x48xf32>
    %203 = tpu.matmul %191, %202, %cst_143 {dimension_numbers = #tpu.dot_dimension_numbers<[1], [0], [0], [1], [0, 0, 1, 1], [], []>} : vector<32x32xf32>, vector<32x48xf32>, vector<32x48xf32> -> vector<32x48xf32>
    %c0_144 = arith.constant 0 : index
    %c0_145 = arith.constant 0 : index
    %c0_146 = arith.constant 0 : index
    %204 = vector.load %arg14[%c0_144, %c0_145, %c0_146] : memref<3x32x48xf32, #tpu.memory_space<vmem>>, vector<1x32x48xf32>
    %205 = vector.shape_cast %204 : vector<1x32x48xf32> to vector<32x48xf32>
    %cst_147 = arith.constant dense<0.000000e+00> : vector<32x48xf32>
    %206 = tpu.matmul %0, %205, %cst_147 {dimension_numbers = #tpu.dot_dimension_numbers<[1], [0], [0], [1], [0, 0, 1, 1], [], []>} : vector<32x32xf32>, vector<32x48xf32>, vector<32x48xf32> -> vector<32x48xf32>
    %207 = arith.addf %203, %206 : vector<32x48xf32>
    %c1_148 = arith.constant 1 : index
    %c0_149 = arith.constant 0 : index
    %c0_150 = arith.constant 0 : index
    %208 = vector.load %arg13[%c1_148, %c0_149, %c0_150] : memref<3x32x48xf32, #tpu.memory_space<vmem>>, vector<1x32x48xf32>
    %209 = vector.shape_cast %208 : vector<1x32x48xf32> to vector<32x48xf32>
    %cst_151 = arith.constant dense<0.000000e+00> : vector<32x48xf32>
    %210 = tpu.matmul %191, %209, %cst_151 {dimension_numbers = #tpu.dot_dimension_numbers<[1], [0], [0], [1], [0, 0, 1, 1], [], []>} : vector<32x32xf32>, vector<32x48xf32>, vector<32x48xf32> -> vector<32x48xf32>
    %c1_152 = arith.constant 1 : index
    %c0_153 = arith.constant 0 : index
    %c0_154 = arith.constant 0 : index
    %211 = vector.load %arg14[%c1_152, %c0_153, %c0_154] : memref<3x32x48xf32, #tpu.memory_space<vmem>>, vector<1x32x48xf32>
    %212 = vector.shape_cast %211 : vector<1x32x48xf32> to vector<32x48xf32>
    %cst_155 = arith.constant dense<0.000000e+00> : vector<32x48xf32>
    %213 = tpu.matmul %0, %212, %cst_155 {dimension_numbers = #tpu.dot_dimension_numbers<[1], [0], [0], [1], [0, 0, 1, 1], [], []>} : vector<32x32xf32>, vector<32x48xf32>, vector<32x48xf32> -> vector<32x48xf32>
    %214 = arith.addf %210, %213 : vector<32x48xf32>
    %c2_156 = arith.constant 2 : index
    %c0_157 = arith.constant 0 : index
    %c0_158 = arith.constant 0 : index
    %215 = vector.load %arg13[%c2_156, %c0_157, %c0_158] : memref<3x32x48xf32, #tpu.memory_space<vmem>>, vector<1x32x48xf32>
    %216 = vector.shape_cast %215 : vector<1x32x48xf32> to vector<32x48xf32>
    %cst_159 = arith.constant dense<0.000000e+00> : vector<32x48xf32>
    %217 = tpu.matmul %191, %216, %cst_159 {dimension_numbers = #tpu.dot_dimension_numbers<[1], [0], [0], [1], [0, 0, 1, 1], [], []>} : vector<32x32xf32>, vector<32x48xf32>, vector<32x48xf32> -> vector<32x48xf32>
    %c2_160 = arith.constant 2 : index
    %c0_161 = arith.constant 0 : index
    %c0_162 = arith.constant 0 : index
    %218 = vector.load %arg14[%c2_160, %c0_161, %c0_162] : memref<3x32x48xf32, #tpu.memory_space<vmem>>, vector<1x32x48xf32>
    %219 = vector.shape_cast %218 : vector<1x32x48xf32> to vector<32x48xf32>
    %cst_163 = arith.constant dense<0.000000e+00> : vector<32x48xf32>
    %220 = tpu.matmul %0, %219, %cst_163 {dimension_numbers = #tpu.dot_dimension_numbers<[1], [0], [0], [1], [0, 0, 1, 1], [], []>} : vector<32x32xf32>, vector<32x48xf32>, vector<32x48xf32> -> vector<32x48xf32>
    %221 = arith.addf %217, %220 : vector<32x48xf32>
    %c0_164 = arith.constant 0 : index
    %c0_165 = arith.constant 0 : index
    %222 = vector.load %arg22[%c0_164, %c0_165] : memref<6x12xf32, #tpu.memory_space<vmem>>, vector<6x12xf32>
    %c0_166 = arith.constant 0 : index
    %c0_167 = arith.constant 0 : index
    %223 = vector.load %arg23[%c0_166, %c0_167] : memref<3x5xf32, #tpu.memory_space<vmem>>, vector<3x5xf32>
    %c0_168 = arith.constant 0 : index
    %c0_169 = arith.constant 0 : index
    %224 = vector.load %arg10[%c0_168, %c0_169] : memref<1x32xf32, #tpu.memory_space<vmem>>, vector<1x32xf32>
    %c0_170 = arith.constant 0 : index
    %c0_171 = arith.constant 0 : index
    %225 = vector.load %arg11[%c0_170, %c0_171] : memref<32x32xf32, #tpu.memory_space<vmem>>, vector<32x32xf32>
    %c0_172 = arith.constant 0 : index
    %c0_173 = arith.constant 0 : index
    %226 = vector.load %arg12[%c0_172, %c0_173] : memref<1x32xf32, #tpu.memory_space<vmem>>, vector<1x32xf32>
    %c0_174 = arith.constant 0 : index
    %c0_175 = arith.constant 0 : index
    %227 = vector.load %arg15[%c0_174, %c0_175] : memref<1x48xf32, #tpu.memory_space<vmem>>, vector<1x48xf32>
    %c0_176 = arith.constant 0 : index
    %c0_177 = arith.constant 0 : index
    %228 = vector.load %arg16[%c0_176, %c0_177] : memref<48x48xf32, #tpu.memory_space<vmem>>, vector<48x48xf32>
    %c0_178 = arith.constant 0 : index
    %c0_179 = arith.constant 0 : index
    %229 = vector.load %arg17[%c0_178, %c0_179] : memref<1x48xf32, #tpu.memory_space<vmem>>, vector<1x48xf32>
    %c0_180 = arith.constant 0 : index
    %c0_181 = arith.constant 0 : index
    %230 = vector.load %arg18[%c0_180, %c0_181] : memref<1x32xf32, #tpu.memory_space<vmem>>, vector<1x32xf32>
    %c0_182 = arith.constant 0 : index
    %c0_183 = arith.constant 0 : index
    %231 = vector.load %arg19[%c0_182, %c0_183] : memref<1x1xf32, #tpu.memory_space<vmem>>, vector<1x1xf32>
    %c0_184 = arith.constant 0 : index
    %c0_185 = arith.constant 0 : index
    %232 = vector.load %arg20[%c0_184, %c0_185] : memref<1x48xf32, #tpu.memory_space<vmem>>, vector<1x48xf32>
    %c0_186 = arith.constant 0 : index
    %c0_187 = arith.constant 0 : index
    %233 = vector.load %arg21[%c0_186, %c0_187] : memref<1x1xf32, #tpu.memory_space<vmem>>, vector<1x1xf32>
    %234 = vector.extract_strided_slice %194 {offsets = [0, 0], sizes = [14, 32], strides = [1, 1]} : vector<32x32xf32> to vector<14x32xf32>
    %235 = vector.extract_strided_slice %197 {offsets = [1, 0], sizes = [14, 32], strides = [1, 1]} : vector<32x32xf32> to vector<14x32xf32>
    %236 = arith.addf %234, %235 : vector<14x32xf32>
    %237 = vector.extract_strided_slice %200 {offsets = [2, 0], sizes = [14, 32], strides = [1, 1]} : vector<32x32xf32> to vector<14x32xf32>
    %238 = arith.addf %236, %237 : vector<14x32xf32>
    %239 = vector.broadcast %224 : vector<1x32xf32> to vector<14x32xf32>
    %240 = arith.addf %238, %239 : vector<14x32xf32>
    %cst_188 = arith.constant 0.000000e+00 : f32
    %241 = vector.broadcast %cst_188 : f32 to vector<14x32xf32>
    %242 = arith.maximumf %240, %241 : vector<14x32xf32>
    %243 = vector.extract_strided_slice %207 {offsets = [0, 0], sizes = [14, 48], strides = [1, 1]} : vector<32x48xf32> to vector<14x48xf32>
    %244 = vector.extract_strided_slice %214 {offsets = [1, 0], sizes = [14, 48], strides = [1, 1]} : vector<32x48xf32> to vector<14x48xf32>
    %245 = arith.addf %243, %244 : vector<14x48xf32>
    %246 = vector.extract_strided_slice %221 {offsets = [2, 0], sizes = [14, 48], strides = [1, 1]} : vector<32x48xf32> to vector<14x48xf32>
    %247 = arith.addf %245, %246 : vector<14x48xf32>
    %248 = vector.broadcast %227 : vector<1x48xf32> to vector<14x48xf32>
    %249 = arith.addf %247, %248 : vector<14x48xf32>
    %cst_189 = arith.constant 0.000000e+00 : f32
    %250 = vector.broadcast %cst_189 : f32 to vector<14x48xf32>
    %251 = arith.maximumf %249, %250 : vector<14x48xf32>
    %252 = vector.extract_strided_slice %242 {offsets = [0, 0], sizes = [12, 32], strides = [1, 1]} : vector<14x32xf32> to vector<12x32xf32>
    %253 = vector.extract_strided_slice %242 {offsets = [1, 0], sizes = [12, 32], strides = [1, 1]} : vector<14x32xf32> to vector<12x32xf32>
    %254 = vector.extract_strided_slice %242 {offsets = [2, 0], sizes = [12, 32], strides = [1, 1]} : vector<14x32xf32> to vector<12x32xf32>
    %255 = arith.maximumf %253, %254 : vector<12x32xf32>
    %256 = arith.maximumf %252, %255 : vector<12x32xf32>
    %cst_190 = arith.constant dense<0.000000e+00> : vector<6x32xf32>
    %257 = tpu.matmul %222, %256, %cst_190 {dimension_numbers = #tpu.dot_dimension_numbers<[1], [0], [0], [1], [0, 0, 1, 1], [], []>} : vector<6x12xf32>, vector<12x32xf32>, vector<6x32xf32> -> vector<6x32xf32>
    %cst_191 = arith.constant dense<0.000000e+00> : vector<6x32xf32>
    %258 = tpu.matmul %257, %225, %cst_191 {dimension_numbers = #tpu.dot_dimension_numbers<[1], [0], [0], [1], [0, 0, 1, 1], [], []>} : vector<6x32xf32>, vector<32x32xf32>, vector<6x32xf32> -> vector<6x32xf32>
    %259 = vector.broadcast %226 : vector<1x32xf32> to vector<6x32xf32>
    %260 = arith.addf %258, %259 : vector<6x32xf32>
    %cst_192 = arith.constant 0.000000e+00 : f32
    %261 = vector.broadcast %cst_192 : f32 to vector<6x32xf32>
    %262 = arith.maximumf %260, %261 : vector<6x32xf32>
    %263 = vector.extract_strided_slice %262 {offsets = [0, 0], sizes = [5, 32], strides = [1, 1]} : vector<6x32xf32> to vector<5x32xf32>
    %264 = vector.extract_strided_slice %262 {offsets = [1, 0], sizes = [5, 32], strides = [1, 1]} : vector<6x32xf32> to vector<5x32xf32>
    %265 = arith.maximumf %263, %264 : vector<5x32xf32>
    %cst_193 = arith.constant dense<0.000000e+00> : vector<3x32xf32>
    %266 = tpu.matmul %223, %265, %cst_193 {dimension_numbers = #tpu.dot_dimension_numbers<[1], [0], [0], [1], [0, 0, 1, 1], [], []>} : vector<3x5xf32>, vector<5x32xf32>, vector<3x32xf32> -> vector<3x32xf32>
    %267 = vector.extract_strided_slice %251 {offsets = [0, 0], sizes = [12, 48], strides = [1, 1]} : vector<14x48xf32> to vector<12x48xf32>
    %268 = vector.extract_strided_slice %251 {offsets = [1, 0], sizes = [12, 48], strides = [1, 1]} : vector<14x48xf32> to vector<12x48xf32>
    %269 = vector.extract_strided_slice %251 {offsets = [2, 0], sizes = [12, 48], strides = [1, 1]} : vector<14x48xf32> to vector<12x48xf32>
    %270 = arith.maximumf %268, %269 : vector<12x48xf32>
    %271 = arith.maximumf %267, %270 : vector<12x48xf32>
    %cst_194 = arith.constant dense<0.000000e+00> : vector<6x48xf32>
    %272 = tpu.matmul %222, %271, %cst_194 {dimension_numbers = #tpu.dot_dimension_numbers<[1], [0], [0], [1], [0, 0, 1, 1], [], []>} : vector<6x12xf32>, vector<12x48xf32>, vector<6x48xf32> -> vector<6x48xf32>
    %cst_195 = arith.constant dense<0.000000e+00> : vector<6x48xf32>
    %273 = tpu.matmul %272, %228, %cst_195 {dimension_numbers = #tpu.dot_dimension_numbers<[1], [0], [0], [1], [0, 0, 1, 1], [], []>} : vector<6x48xf32>, vector<48x48xf32>, vector<6x48xf32> -> vector<6x48xf32>
    %274 = vector.broadcast %229 : vector<1x48xf32> to vector<6x48xf32>
    %275 = arith.addf %273, %274 : vector<6x48xf32>
    %cst_196 = arith.constant 0.000000e+00 : f32
    %276 = vector.broadcast %cst_196 : f32 to vector<6x48xf32>
    %277 = arith.maximumf %275, %276 : vector<6x48xf32>
    %278 = vector.extract_strided_slice %277 {offsets = [0, 0], sizes = [5, 48], strides = [1, 1]} : vector<6x48xf32> to vector<5x48xf32>
    %279 = vector.extract_strided_slice %277 {offsets = [1, 0], sizes = [5, 48], strides = [1, 1]} : vector<6x48xf32> to vector<5x48xf32>
    %280 = arith.maximumf %278, %279 : vector<5x48xf32>
    %cst_197 = arith.constant dense<0.000000e+00> : vector<3x48xf32>
    %281 = tpu.matmul %223, %280, %cst_197 {dimension_numbers = #tpu.dot_dimension_numbers<[1], [0], [0], [1], [0, 0, 1, 1], [], []>} : vector<3x5xf32>, vector<5x48xf32>, vector<3x48xf32> -> vector<3x48xf32>
    %282 = vector.broadcast %230 : vector<1x32xf32> to vector<3x32xf32>
    %283 = arith.mulf %266, %282 : vector<3x32xf32>
    %cst_198 = arith.constant dense<0.000000e+00> : vector<3xf32>
    %284 = vector.multi_reduction <add>, %283, %cst_198 [1] : vector<3x32xf32> to vector<3xf32>
    %285 = vector.shape_cast %284 : vector<3xf32> to vector<3x1xf32>
    %286 = vector.broadcast %231 : vector<1x1xf32> to vector<3x1xf32>
    %287 = arith.addf %285, %286 : vector<3x1xf32>
    %288 = vector.broadcast %232 : vector<1x48xf32> to vector<3x48xf32>
    %289 = arith.mulf %281, %288 : vector<3x48xf32>
    %cst_199 = arith.constant dense<0.000000e+00> : vector<3xf32>
    %290 = vector.multi_reduction <add>, %289, %cst_199 [1] : vector<3x48xf32> to vector<3xf32>
    %291 = vector.shape_cast %290 : vector<3xf32> to vector<3x1xf32>
    %292 = vector.broadcast %233 : vector<1x1xf32> to vector<3x1xf32>
    %293 = arith.addf %291, %292 : vector<3x1xf32>
    %294 = arith.mulf %287, %293 : vector<3x1xf32>
    %cst_200 = arith.constant dense<0.000000e+00> : vector<1xf32>
    %295 = vector.multi_reduction <add>, %294, %cst_200 [0] : vector<3x1xf32> to vector<1xf32>
    %296 = vector.shape_cast %295 : vector<1xf32> to vector<1x1xf32>
    %cst_201 = arith.constant 3.000000e+00 : f32
    %297 = vector.broadcast %cst_201 : f32 to vector<1x1xf32>
    %298 = arith.divf %296, %297 : vector<1x1xf32>
    %299 = arith.negf %298 : vector<1x1xf32>
    %300 = math.exp %299 : vector<1x1xf32>
    %cst_202 = arith.constant 1.000000e+00 : f32
    %301 = vector.broadcast %cst_202 : f32 to vector<1x1xf32>
    %302 = arith.addf %301, %300 : vector<1x1xf32>
    %303 = arith.divf %301, %302 : vector<1x1xf32>
    %304 = vector.shape_cast %303 : vector<1x1xf32> to vector<1x1xf32>
    %305 = vector.broadcast %304 : vector<1x1xf32> to vector<8x128xf32>
    %c0_203 = arith.constant 0 : index
    %c0_204 = arith.constant 0 : index
    %c0_205 = arith.constant 0 : index
    %306 = vector.load %arg24[%c0_203, %c0_204, %c0_205] : memref<2x8x128xf32, #tpu.memory_space<vmem>>, vector<1x8x128xf32>
    %307 = vector.shape_cast %306 : vector<1x8x128xf32> to vector<8x128xf32>
    %308 = vector.shape_cast %305 : vector<8x128xf32> to vector<1x8x128xf32>
    tpu.vector_store %arg24[%c0_203, %c0_204, %c0_205], %308 {strides = array<i32>} : memref<2x8x128xf32, #tpu.memory_space<vmem>>, vector<1x8x128xf32>,
    %309 = vector.extract_strided_slice %194 {offsets = [16, 0], sizes = [14, 32], strides = [1, 1]} : vector<32x32xf32> to vector<14x32xf32>
    %310 = vector.extract_strided_slice %197 {offsets = [17, 0], sizes = [14, 32], strides = [1, 1]} : vector<32x32xf32> to vector<14x32xf32>
    %311 = arith.addf %309, %310 : vector<14x32xf32>
    %312 = vector.extract_strided_slice %200 {offsets = [18, 0], sizes = [14, 32], strides = [1, 1]} : vector<32x32xf32> to vector<14x32xf32>
    %313 = arith.addf %311, %312 : vector<14x32xf32>
    %314 = vector.broadcast %224 : vector<1x32xf32> to vector<14x32xf32>
    %315 = arith.addf %313, %314 : vector<14x32xf32>
    %cst_206 = arith.constant 0.000000e+00 : f32
    %316 = vector.broadcast %cst_206 : f32 to vector<14x32xf32>
    %317 = arith.maximumf %315, %316 : vector<14x32xf32>
    %318 = vector.extract_strided_slice %207 {offsets = [16, 0], sizes = [14, 48], strides = [1, 1]} : vector<32x48xf32> to vector<14x48xf32>
    %319 = vector.extract_strided_slice %214 {offsets = [17, 0], sizes = [14, 48], strides = [1, 1]} : vector<32x48xf32> to vector<14x48xf32>
    %320 = arith.addf %318, %319 : vector<14x48xf32>
    %321 = vector.extract_strided_slice %221 {offsets = [18, 0], sizes = [14, 48], strides = [1, 1]} : vector<32x48xf32> to vector<14x48xf32>
    %322 = arith.addf %320, %321 : vector<14x48xf32>
    %323 = vector.broadcast %227 : vector<1x48xf32> to vector<14x48xf32>
    %324 = arith.addf %322, %323 : vector<14x48xf32>
    %cst_207 = arith.constant 0.000000e+00 : f32
    %325 = vector.broadcast %cst_207 : f32 to vector<14x48xf32>
    %326 = arith.maximumf %324, %325 : vector<14x48xf32>
    %327 = vector.extract_strided_slice %317 {offsets = [0, 0], sizes = [12, 32], strides = [1, 1]} : vector<14x32xf32> to vector<12x32xf32>
    %328 = vector.extract_strided_slice %317 {offsets = [1, 0], sizes = [12, 32], strides = [1, 1]} : vector<14x32xf32> to vector<12x32xf32>
    %329 = vector.extract_strided_slice %317 {offsets = [2, 0], sizes = [12, 32], strides = [1, 1]} : vector<14x32xf32> to vector<12x32xf32>
    %330 = arith.maximumf %328, %329 : vector<12x32xf32>
    %331 = arith.maximumf %327, %330 : vector<12x32xf32>
    %cst_208 = arith.constant dense<0.000000e+00> : vector<6x32xf32>
    %332 = tpu.matmul %222, %331, %cst_208 {dimension_numbers = #tpu.dot_dimension_numbers<[1], [0], [0], [1], [0, 0, 1, 1], [], []>} : vector<6x12xf32>, vector<12x32xf32>, vector<6x32xf32> -> vector<6x32xf32>
    %cst_209 = arith.constant dense<0.000000e+00> : vector<6x32xf32>
    %333 = tpu.matmul %332, %225, %cst_209 {dimension_numbers = #tpu.dot_dimension_numbers<[1], [0], [0], [1], [0, 0, 1, 1], [], []>} : vector<6x32xf32>, vector<32x32xf32>, vector<6x32xf32> -> vector<6x32xf32>
    %334 = vector.broadcast %226 : vector<1x32xf32> to vector<6x32xf32>
    %335 = arith.addf %333, %334 : vector<6x32xf32>
    %cst_210 = arith.constant 0.000000e+00 : f32
    %336 = vector.broadcast %cst_210 : f32 to vector<6x32xf32>
    %337 = arith.maximumf %335, %336 : vector<6x32xf32>
    %338 = vector.extract_strided_slice %337 {offsets = [0, 0], sizes = [5, 32], strides = [1, 1]} : vector<6x32xf32> to vector<5x32xf32>
    %339 = vector.extract_strided_slice %337 {offsets = [1, 0], sizes = [5, 32], strides = [1, 1]} : vector<6x32xf32> to vector<5x32xf32>
    %340 = arith.maximumf %338, %339 : vector<5x32xf32>
    %cst_211 = arith.constant dense<0.000000e+00> : vector<3x32xf32>
    %341 = tpu.matmul %223, %340, %cst_211 {dimension_numbers = #tpu.dot_dimension_numbers<[1], [0], [0], [1], [0, 0, 1, 1], [], []>} : vector<3x5xf32>, vector<5x32xf32>, vector<3x32xf32> -> vector<3x32xf32>
    %342 = vector.extract_strided_slice %326 {offsets = [0, 0], sizes = [12, 48], strides = [1, 1]} : vector<14x48xf32> to vector<12x48xf32>
    %343 = vector.extract_strided_slice %326 {offsets = [1, 0], sizes = [12, 48], strides = [1, 1]} : vector<14x48xf32> to vector<12x48xf32>
    %344 = vector.extract_strided_slice %326 {offsets = [2, 0], sizes = [12, 48], strides = [1, 1]} : vector<14x48xf32> to vector<12x48xf32>
    %345 = arith.maximumf %343, %344 : vector<12x48xf32>
    %346 = arith.maximumf %342, %345 : vector<12x48xf32>
    %cst_212 = arith.constant dense<0.000000e+00> : vector<6x48xf32>
    %347 = tpu.matmul %222, %346, %cst_212 {dimension_numbers = #tpu.dot_dimension_numbers<[1], [0], [0], [1], [0, 0, 1, 1], [], []>} : vector<6x12xf32>, vector<12x48xf32>, vector<6x48xf32> -> vector<6x48xf32>
    %cst_213 = arith.constant dense<0.000000e+00> : vector<6x48xf32>
    %348 = tpu.matmul %347, %228, %cst_213 {dimension_numbers = #tpu.dot_dimension_numbers<[1], [0], [0], [1], [0, 0, 1, 1], [], []>} : vector<6x48xf32>, vector<48x48xf32>, vector<6x48xf32> -> vector<6x48xf32>
    %349 = vector.broadcast %229 : vector<1x48xf32> to vector<6x48xf32>
    %350 = arith.addf %348, %349 : vector<6x48xf32>
    %cst_214 = arith.constant 0.000000e+00 : f32
    %351 = vector.broadcast %cst_214 : f32 to vector<6x48xf32>
    %352 = arith.maximumf %350, %351 : vector<6x48xf32>
    %353 = vector.extract_strided_slice %352 {offsets = [0, 0], sizes = [5, 48], strides = [1, 1]} : vector<6x48xf32> to vector<5x48xf32>
    %354 = vector.extract_strided_slice %352 {offsets = [1, 0], sizes = [5, 48], strides = [1, 1]} : vector<6x48xf32> to vector<5x48xf32>
    %355 = arith.maximumf %353, %354 : vector<5x48xf32>
    %cst_215 = arith.constant dense<0.000000e+00> : vector<3x48xf32>
    %356 = tpu.matmul %223, %355, %cst_215 {dimension_numbers = #tpu.dot_dimension_numbers<[1], [0], [0], [1], [0, 0, 1, 1], [], []>} : vector<3x5xf32>, vector<5x48xf32>, vector<3x48xf32> -> vector<3x48xf32>
    %357 = vector.broadcast %230 : vector<1x32xf32> to vector<3x32xf32>
    %358 = arith.mulf %341, %357 : vector<3x32xf32>
    %cst_216 = arith.constant dense<0.000000e+00> : vector<3xf32>
    %359 = vector.multi_reduction <add>, %358, %cst_216 [1] : vector<3x32xf32> to vector<3xf32>
    %360 = vector.shape_cast %359 : vector<3xf32> to vector<3x1xf32>
    %361 = vector.broadcast %231 : vector<1x1xf32> to vector<3x1xf32>
    %362 = arith.addf %360, %361 : vector<3x1xf32>
    %363 = vector.broadcast %232 : vector<1x48xf32> to vector<3x48xf32>
    %364 = arith.mulf %356, %363 : vector<3x48xf32>
    %cst_217 = arith.constant dense<0.000000e+00> : vector<3xf32>
    %365 = vector.multi_reduction <add>, %364, %cst_217 [1] : vector<3x48xf32> to vector<3xf32>
    %366 = vector.shape_cast %365 : vector<3xf32> to vector<3x1xf32>
    %367 = vector.broadcast %233 : vector<1x1xf32> to vector<3x1xf32>
    %368 = arith.addf %366, %367 : vector<3x1xf32>
    %369 = arith.mulf %362, %368 : vector<3x1xf32>
    %cst_218 = arith.constant dense<0.000000e+00> : vector<1xf32>
    %370 = vector.multi_reduction <add>, %369, %cst_218 [0] : vector<3x1xf32> to vector<1xf32>
    %371 = vector.shape_cast %370 : vector<1xf32> to vector<1x1xf32>
    %cst_219 = arith.constant 3.000000e+00 : f32
    %372 = vector.broadcast %cst_219 : f32 to vector<1x1xf32>
    %373 = arith.divf %371, %372 : vector<1x1xf32>
    %374 = arith.negf %373 : vector<1x1xf32>
    %375 = math.exp %374 : vector<1x1xf32>
    %cst_220 = arith.constant 1.000000e+00 : f32
    %376 = vector.broadcast %cst_220 : f32 to vector<1x1xf32>
    %377 = arith.addf %376, %375 : vector<1x1xf32>
    %378 = arith.divf %376, %377 : vector<1x1xf32>
    %379 = vector.shape_cast %378 : vector<1x1xf32> to vector<1x1xf32>
    %380 = vector.broadcast %379 : vector<1x1xf32> to vector<8x128xf32>
    %c1_221 = arith.constant 1 : index
    %c0_222 = arith.constant 0 : index
    %c0_223 = arith.constant 0 : index
    %381 = vector.load %arg24[%c1_221, %c0_222, %c0_223] : memref<2x8x128xf32, #tpu.memory_space<vmem>>, vector<1x8x128xf32>
    %382 = vector.shape_cast %381 : vector<1x8x128xf32> to vector<8x128xf32>
    %383 = vector.shape_cast %380 : vector<8x128xf32> to vector<1x8x128xf32>
    tpu.vector_store %arg24[%c1_221, %c0_222, %c0_223], %383 {strides = array<i32>} : memref<2x8x128xf32, #tpu.memory_space<vmem>>, vector<1x8x128xf32>,
    return
  }
  func.func @transform_0(%arg0: i32) -> (i32, i32) {
    %c0_i32 = arith.constant 0 : i32
    %c0_i32_0 = arith.constant 0 : i32
    return %arg0, %c0_i32 : i32, i32
  }
  func.func @transform_1(%arg0: i32) -> (i32, i32, i32, i32) {
    %c0_i32 = arith.constant 0 : i32
    %c0_i32_0 = arith.constant 0 : i32
    %c0_i32_1 = arith.constant 0 : i32
    %c0_i32_2 = arith.constant 0 : i32
    return %arg0, %c0_i32, %c0_i32_0, %c0_i32_1 : i32, i32, i32, i32
  }
  func.func @transform_2(%arg0: i32) -> (i32, i32, i32) {
    %c0_i32 = arith.constant 0 : i32
    %c0_i32_0 = arith.constant 0 : i32
    %c0_i32_1 = arith.constant 0 : i32
    %c0_i32_2 = arith.constant 0 : i32
    return %c0_i32, %c0_i32_0, %c0_i32_1 : i32, i32, i32
  }
  func.func @transform_3(%arg0: i32) -> (i32, i32, i32) {
    %c0_i32 = arith.constant 0 : i32
    %c0_i32_0 = arith.constant 0 : i32
    %c0_i32_1 = arith.constant 0 : i32
    %c0_i32_2 = arith.constant 0 : i32
    return %c0_i32, %c0_i32_0, %c0_i32_1 : i32, i32, i32
  }
  func.func @transform_4(%arg0: i32) -> (i32, i32, i32) {
    %c0_i32 = arith.constant 0 : i32
    %c0_i32_0 = arith.constant 0 : i32
    %c0_i32_1 = arith.constant 0 : i32
    %c0_i32_2 = arith.constant 0 : i32
    return %c0_i32, %c0_i32_0, %c0_i32_1 : i32, i32, i32
  }
  func.func @transform_5(%arg0: i32) -> (i32, i32, i32) {
    %c0_i32 = arith.constant 0 : i32
    %c0_i32_0 = arith.constant 0 : i32
    %c0_i32_1 = arith.constant 0 : i32
    %c0_i32_2 = arith.constant 0 : i32
    return %c0_i32, %c0_i32_0, %c0_i32_1 : i32, i32, i32
  }
  func.func @transform_6(%arg0: i32) -> (i32, i32, i32) {
    %c0_i32 = arith.constant 0 : i32
    %c0_i32_0 = arith.constant 0 : i32
    %c0_i32_1 = arith.constant 0 : i32
    %c0_i32_2 = arith.constant 0 : i32
    return %c0_i32, %c0_i32_0, %c0_i32_1 : i32, i32, i32
  }
  func.func @transform_7(%arg0: i32) -> (i32, i32, i32) {
    %c0_i32 = arith.constant 0 : i32
    %c0_i32_0 = arith.constant 0 : i32
    %c0_i32_1 = arith.constant 0 : i32
    %c0_i32_2 = arith.constant 0 : i32
    return %c0_i32, %c0_i32_0, %c0_i32_1 : i32, i32, i32
  }
  func.func @transform_8(%arg0: i32) -> (i32, i32, i32) {
    %c0_i32 = arith.constant 0 : i32
    %c0_i32_0 = arith.constant 0 : i32
    %c0_i32_1 = arith.constant 0 : i32
    %c0_i32_2 = arith.constant 0 : i32
    return %c0_i32, %c0_i32_0, %c0_i32_1 : i32, i32, i32
  }
  func.func @transform_9(%arg0: i32) -> (i32, i32) {
    %c0_i32 = arith.constant 0 : i32
    %c0_i32_0 = arith.constant 0 : i32
    %c0_i32_1 = arith.constant 0 : i32
    return %c0_i32, %c0_i32_0 : i32, i32
  }
  func.func @transform_10(%arg0: i32) -> (i32, i32) {
    %c0_i32 = arith.constant 0 : i32
    %c0_i32_0 = arith.constant 0 : i32
    %c0_i32_1 = arith.constant 0 : i32
    return %c0_i32, %c0_i32_0 : i32, i32
  }
  func.func @transform_11(%arg0: i32) -> (i32, i32) {
    %c0_i32 = arith.constant 0 : i32
    %c0_i32_0 = arith.constant 0 : i32
    %c0_i32_1 = arith.constant 0 : i32
    return %c0_i32, %c0_i32_0 : i32, i32
  }
  func.func @transform_12(%arg0: i32) -> (i32, i32, i32) {
    %c0_i32 = arith.constant 0 : i32
    %c0_i32_0 = arith.constant 0 : i32
    %c0_i32_1 = arith.constant 0 : i32
    %c0_i32_2 = arith.constant 0 : i32
    return %c0_i32, %c0_i32_0, %c0_i32_1 : i32, i32, i32
  }
  func.func @transform_13(%arg0: i32) -> (i32, i32, i32) {
    %c0_i32 = arith.constant 0 : i32
    %c0_i32_0 = arith.constant 0 : i32
    %c0_i32_1 = arith.constant 0 : i32
    %c0_i32_2 = arith.constant 0 : i32
    return %c0_i32, %c0_i32_0, %c0_i32_1 : i32, i32, i32
  }
  func.func @transform_14(%arg0: i32) -> (i32, i32) {
    %c0_i32 = arith.constant 0 : i32
    %c0_i32_0 = arith.constant 0 : i32
    %c0_i32_1 = arith.constant 0 : i32
    return %c0_i32, %c0_i32_0 : i32, i32
  }
  func.func @transform_15(%arg0: i32) -> (i32, i32) {
    %c0_i32 = arith.constant 0 : i32
    %c0_i32_0 = arith.constant 0 : i32
    %c0_i32_1 = arith.constant 0 : i32
    return %c0_i32, %c0_i32_0 : i32, i32
  }
  func.func @transform_16(%arg0: i32) -> (i32, i32) {
    %c0_i32 = arith.constant 0 : i32
    %c0_i32_0 = arith.constant 0 : i32
    %c0_i32_1 = arith.constant 0 : i32
    return %c0_i32, %c0_i32_0 : i32, i32
  }
  func.func @transform_17(%arg0: i32) -> (i32, i32) {
    %c0_i32 = arith.constant 0 : i32
    %c0_i32_0 = arith.constant 0 : i32
    %c0_i32_1 = arith.constant 0 : i32
    return %c0_i32, %c0_i32_0 : i32, i32
  }
  func.func @transform_18(%arg0: i32) -> (i32, i32) {
    %c0_i32 = arith.constant 0 : i32
    %c0_i32_0 = arith.constant 0 : i32
    %c0_i32_1 = arith.constant 0 : i32
    return %c0_i32, %c0_i32_0 : i32, i32
  }
  func.func @transform_19(%arg0: i32) -> (i32, i32) {
    %c0_i32 = arith.constant 0 : i32
    %c0_i32_0 = arith.constant 0 : i32
    %c0_i32_1 = arith.constant 0 : i32
    return %c0_i32, %c0_i32_0 : i32, i32
  }
  func.func @transform_20(%arg0: i32) -> (i32, i32) {
    %c0_i32 = arith.constant 0 : i32
    %c0_i32_0 = arith.constant 0 : i32
    %c0_i32_1 = arith.constant 0 : i32
    return %c0_i32, %c0_i32_0 : i32, i32
  }
  func.func @transform_21(%arg0: i32) -> (i32, i32) {
    %c0_i32 = arith.constant 0 : i32
    %c0_i32_0 = arith.constant 0 : i32
    %c0_i32_1 = arith.constant 0 : i32
    return %c0_i32, %c0_i32_0 : i32, i32
  }
  func.func @transform_22(%arg0: i32) -> (i32, i32) {
    %c0_i32 = arith.constant 0 : i32
    %c0_i32_0 = arith.constant 0 : i32
    %c0_i32_1 = arith.constant 0 : i32
    return %c0_i32, %c0_i32_0 : i32, i32
  }
  func.func @transform_23(%arg0: i32) -> (i32, i32, i32) {
    %c0_i32 = arith.constant 0 : i32
    %c0_i32_0 = arith.constant 0 : i32
    %c0_i32_1 = arith.constant 0 : i32
    return %arg0, %c0_i32, %c0_i32_0 : i32, i32, i32
  }
}

</mosaic_0001>

<llo_original>
// kernel: tpu_custom_call.1
$region0: #{tpu_custom_call.1}
  #allocation0 [shape = 'u32[]', space=smem, size = 0x4, offset = 0x4, fixed_abs, tag = 'smem constant byte address 0x4 - core index']
  #allocation1 [shape = 'u32[144,128]{1,0:T(1,128)}', space=vmem, size = 0x12000, scoped, tag = 'internal scratch']
  #allocation2 [shape = 'f32[1,1]{1,0:T(1,128)S(1)}', space=vmem, size = 0x200, scoped, tag = 'scoped memory for tpu_custom_call.1']
  #allocation3 [shape = 'f32[1,1]{1,0:T(1,128)S(1)}', space=vmem, size = 0x200, scoped, tag = 'scoped memory for tpu_custom_call.1']
  %s0 = inlined_call_operand.hbm [shape: f32[32,32], index: 0, kind: input, shape index: {}]
  %s1 = inlined_call_operand.hbm [shape: f32[2,2,16,16], index: 1, kind: input, shape index: {}]
  %s2 = inlined_call_operand.hbm [shape: f32[2,32,32], index: 2, kind: input, shape index: {}]
  %s3 = inlined_call_operand.hbm [shape: f32[2,1,32], index: 3, kind: input, shape index: {}]
  %s4 = inlined_call_operand.hbm [shape: f32[3,32,32], index: 4, kind: input, shape index: {}]
  %s5 = inlined_call_operand.vmem [shape: f32[3,1,32], index: 5, kind: input, shape index: {}]
  %s6 = inlined_call_operand.hbm [shape: f32[3,32,32], index: 6, kind: input, shape index: {}]
  %s7 = inlined_call_operand.hbm [shape: f32[3,1,32], index: 7, kind: input, shape index: {}]
  %s8 = inlined_call_operand.hbm [shape: f32[3,32,32], index: 8, kind: input, shape index: {}]
  %s9 = inlined_call_operand.vmem [shape: f32[1,32], index: 9, kind: input, shape index: {}]
  %s10 = inlined_call_operand.hbm [shape: f32[32,32], index: 10, kind: input, shape index: {}]
  %s11 = inlined_call_operand.hbm [shape: f32[1,32], index: 11, kind: input, shape index: {}]
  %s12 = inlined_call_operand.hbm [shape: f32[3,32,48], index: 12, kind: input, shape index: {}]
  %s13 = inlined_call_operand.hbm [shape: f32[3,32,48], index: 13, kind: input, shape index: {}]
  %s14 = inlined_call_operand.hbm [shape: f32[1,48], index: 14, kind: input, shape index: {}]
  %s15 = inlined_call_operand.vmem [shape: f32[48,48], index: 15, kind: input, shape index: {}]
  %s16 = inlined_call_operand.vmem [shape: f32[1,48], index: 16, kind: input, shape index: {}]
  %s17 = inlined_call_operand.vmem [shape: f32[1,32], index: 17, kind: input, shape index: {}]
  %s18 = inlined_call_operand.<no memory space> [shape: f32[1,1], index: 18, kind: input, shape index: {}]
  %s19 = inlined_call_operand.vmem [shape: f32[1,48], index: 19, kind: input, shape index: {}]
  %s20 = inlined_call_operand.<no memory space> [shape: f32[1,1], index: 20, kind: input, shape index: {}]
  %s21 = inlined_call_operand.vmem [shape: f32[6,12], index: 21, kind: input, shape index: {}]
  %s22 = inlined_call_operand.vmem [shape: f32[3,5], index: 22, kind: input, shape index: {}]
  %s23 = inlined_call_operand.hbm [shape: f32[2,8,128], index: 23, kind: output, shape index: {}]
  %s24 = sld [smem:[#allocation0]]
  $region154: #{tpu_custom_call.1} parent=0
    _
  %s26 = ssub.s32 1, %s24
  %s27 = scalar_select 0, %s26, %s24
  %v28 = vstv %s18
  %29 = vst [vmem:[#allocation2] sm:$0x1] %v28
  %v30 = vstv %s20
  %31 = vst [vmem:[#allocation3] sm:$0x1] %v30
  $region1: #{tpu_custom_call.1} parent=0
    #allocation4 [shape = 'u8[16384]{0}', space=vmem, size = 0x4000, scoped, tag = 'input window, operand 0, single buffered']
    #allocation5 [shape = 's32[1]{0}', space=sflag, size = 0x4, scoped, tag = 'scoped memory for tpu_custom_call.1']
    #allocation6 [shape = 's32[1]{0}', space=sflag, size = 0x4, scoped, tag = 'scoped memory for tpu_custom_call.1']
    #allocation7 [shape = 'u8[32768]{0}', space=vmem, size = 0x8000, scoped, tag = 'input window, operand 1, single buffered']
    #allocation8 [shape = 's32[1]{0}', space=sflag, size = 0x4, scoped, tag = 'scoped memory for tpu_custom_call.1']
    #allocation9 [shape = 'u8[32768]{0}', space=vmem, size = 0x8000, scoped, tag = 'input window, operand 2, single buffered']
    #allocation10 [shape = 'u8[1024]{0}', space=vmem, size = 0x400, scoped, tag = 'input window, operand 3, single buffered']
    #allocation11 [shape = 's32[1]{0}', space=sflag, size = 0x4, scoped, tag = 'scoped memory for tpu_custom_call.1']
    #allocation12 [shape = 'u8[49152]{0}', space=vmem, size = 0xc000, scoped, tag = 'input window, operand 4, single buffered']
    #allocation13 [shape = 'u8[49152]{0}', space=vmem, size = 0xc000, scoped, tag = 'input window, operand 6, single buffered']
    #allocation14 [shape = 's32[1]{0}', space=sflag, size = 0x4, scoped, tag = 'scoped memory for tpu_custom_call.1']
    #allocation15 [shape = 'u8[1536]{0}', space=vmem, size = 0x800, scoped, tag = 'input window, operand 7, single buffered']
    #allocation16 [shape = 'u8[49152]{0}', space=vmem, size = 0xc000, scoped, tag = 'input window, operand 8, single buffered']
    #allocation17 [shape = 's32[1]{0}', space=sflag, size = 0x4, scoped, tag = 'scoped memory for tpu_custom_call.1']
    #allocation18 [shape = 'u8[16384]{0}', space=vmem, size = 0x4000, scoped, tag = 'input window, operand 10, single buffered']
    #allocation19 [shape = 'u8[512]{0}', space=vmem, size = 0x400, scoped, tag = 'input window, operand 11, single buffered']
    #allocation20 [shape = 's32[1]{0}', space=sflag, size = 0x4, scoped, tag = 'scoped memory for tpu_custom_call.1']
    #allocation21 [shape = 'u8[49152]{0}', space=vmem, size = 0xc000, scoped, tag = 'input window, operand 12, single buffered']
    #allocation22 [shape = 'u8[49152]{0}', space=vmem, size = 0xc000, scoped, tag = 'input window, operand 13, single buffered']
    #allocation23 [shape = 's32[1]{0}', space=sflag, size = 0x4, scoped, tag = 'scoped memory for tpu_custom_call.1']
    #allocation24 [shape = 'u8[512]{0}', space=vmem, size = 0x400, scoped, tag = 'input window, operand 14, single buffered']
    #allocation25 [shape = 'u8[8192]{0}', space=vmem, size = 0x2000, scoped, tag = 'output window, operand 0, single buffered']
    %32 = vsyncpa [#allocation5], 0
    %33 = vsyncpa [#allocation8], 0
    %34 = vsyncpa [#allocation11], 0
    %35 = vsyncpa [#allocation14], 0
    %36 = vsyncpa [#allocation17], 0
    %37 = vsyncpa [#allocation20], 0
    %38 = vsyncpa [#allocation23], 0
    %39 = vsyncpa [#allocation6], 0
    // Predicated region
    $region2: #{tpu_custom_call.1} parent=1 // pred_check
      _
    $region3: #{tpu_custom_call.1} parent=1 // pred_check_branch
      %41 = sbr.rel (0) target = $region5
    $region4: #{tpu_custom_call.1} parent=1 // pred_region
      %s43 = ssub.s32 512, 512
      %44 = vsyncadd [#allocation5], %s43
      %s45 = sshll.u32 [#allocation4], 4
      %s46 = int_to_ptr.vmem [resolvable:$true] %s45
      %51 = dma.hbm_to_vmem [thread:$0]  %s0, 512, %s46, [#allocation5], 128, 128, 8
    $region5: #{tpu_custom_call.1} parent=1 // pred_fallthru
      _
    // Predicated region
    $region6: #{tpu_custom_call.1} parent=1 // pred_check
      _
    $region7: #{tpu_custom_call.1} parent=1 // pred_check_branch
      %53 = sbr.rel (0) target = $region9
    $region8: #{tpu_custom_call.1} parent=1 // pred_region
      %s55 = ssub.s32 1024, 1024
      %56 = vsyncadd [#allocation8], %s55
      %s57 = sshll.u32 [#allocation7], 4
      %s58 = int_to_ptr.vmem [resolvable:$true] %s57
      %63 = dma.hbm_to_vmem [thread:$0]  %s1, 1024, %s58, [#allocation8], 128, 128, 8
    $region9: #{tpu_custom_call.1} parent=1 // pred_fallthru
      _
    // Predicated region
    $region10: #{tpu_custom_call.1} parent=1 // pred_check
      _
    $region11: #{tpu_custom_call.1} parent=1 // pred_check_branch
      %65 = sbr.rel (0) target = $region13
    $region12: #{tpu_custom_call.1} parent=1 // pred_region
      %s67 = ssub.s32 1024, 1024
      %68 = vsyncadd [#allocation8], %s67
      %s69 = sshll.u32 [#allocation9], 4
      %s70 = int_to_ptr.vmem [resolvable:$true] %s69
      %75 = dma.hbm_to_vmem [thread:$0]  %s2, 1024, %s70, [#allocation8], 128, 128, 8
    $region13: #{tpu_custom_call.1} parent=1 // pred_fallthru
      _
    // Predicated region
    $region14: #{tpu_custom_call.1} parent=1 // pred_check
      _
    $region15: #{tpu_custom_call.1} parent=1 // pred_check_branch
      %77 = sbr.rel (0) target = $region17
    $region16: #{tpu_custom_call.1} parent=1 // pred_region
      %s79 = ssub.s32 32, 32
      %80 = vsyncadd [#allocation11], %s79
      %s81 = sshll.u32 [#allocation10], 4
      %s82 = int_to_ptr.vmem [resolvable:$true] %s81
      %87 = dma.hbm_to_vmem [thread:$0]  %s3, 32, %s82, [#allocation11], 16, 16, 1
    $region17: #{tpu_custom_call.1} parent=1 // pred_fallthru
      _
    // Predicated region
    $region18: #{tpu_custom_call.1} parent=1 // pred_check
      _
    $region19: #{tpu_custom_call.1} parent=1 // pred_check_branch
      %89 = sbr.rel (0) target = $region21
    $region20: #{tpu_custom_call.1} parent=1 // pred_region
      %s91 = ssub.s32 1536, 1536
      %92 = vsyncadd [#allocation11], %s91
      %s93 = sshll.u32 [#allocation12], 4
      %s94 = int_to_ptr.vmem [resolvable:$true] %s93
      %99 = dma.hbm_to_vmem [thread:$0]  %s4, 1536, %s94, [#allocation11], 128, 128, 8
    $region21: #{tpu_custom_call.1} parent=1 // pred_fallthru
      _
    // Predicated region
    $region22: #{tpu_custom_call.1} parent=1 // pred_check
      _
    $region23: #{tpu_custom_call.1} parent=1 // pred_check_branch
      %101 = sbr.rel (0) target = $region25
    $region24: #{tpu_custom_call.1} parent=1 // pred_region
      _
    $region25: #{tpu_custom_call.1} parent=1 // pred_fallthru
      _
    // Predicated region
    $region26: #{tpu_custom_call.1} parent=1 // pred_check
      _
    $region27: #{tpu_custom_call.1} parent=1 // pred_check_branch
      %103 = sbr.rel (0) target = $region29
    $region28: #{tpu_custom_call.1} parent=1 // pred_region
      %s105 = ssub.s32 1536, 1536
      %106 = vsyncadd [#allocation14], %s105
      %s107 = sshll.u32 [#allocation13], 4
      %s108 = int_to_ptr.vmem [resolvable:$true] %s107
      %113 = dma.hbm_to_vmem [thread:$0]  %s6, 1536, %s108, [#allocation14], 128, 128, 8
    $region29: #{tpu_custom_call.1} parent=1 // pred_fallthru
      _
    // Predicated region
    $region30: #{tpu_custom_call.1} parent=1 // pred_check
      _
    $region31: #{tpu_custom_call.1} parent=1 // pred_check_branch
      %115 = sbr.rel (0) target = $region33
    $region32: #{tpu_custom_call.1} parent=1 // pred_region
      %s117 = ssub.s32 48, 48
      %118 = vsyncadd [#allocation14], %s117
      %s119 = sshll.u32 [#allocation15], 4
      %s120 = int_to_ptr.vmem [resolvable:$true] %s119
      %125 = dma.hbm_to_vmem [thread:$0]  %s7, 48, %s120, [#allocation14], 16, 16, 1
    $region33: #{tpu_custom_call.1} parent=1 // pred_fallthru
      _
    // Predicated region
    $region34: #{tpu_custom_call.1} parent=1 // pred_check
      _
    $region35: #{tpu_custom_call.1} parent=1 // pred_check_branch
      %127 = sbr.rel (0) target = $region37
    $region36: #{tpu_custom_call.1} parent=1 // pred_region
      %s129 = ssub.s32 1536, 1536
      %130 = vsyncadd [#allocation17], %s129
      %s131 = sshll.u32 [#allocation16], 4
      %s132 = int_to_ptr.vmem [resolvable:$true] %s131
      %137 = dma.hbm_to_vmem [thread:$0]  %s8, 1536, %s132, [#allocation17], 128, 128, 8
    $region37: #{tpu_custom_call.1} parent=1 // pred_fallthru
      _
    // Predicated region
    $region38: #{tpu_custom_call.1} parent=1 // pred_check
      _
    $region39: #{tpu_custom_call.1} parent=1 // pred_check_branch
      %139 = sbr.rel (0) target = $region41
    $region40: #{tpu_custom_call.1} parent=1 // pred_region
      _
    $region41: #{tpu_custom_call.1} parent=1 // pred_fallthru
      _
    // Predicated region
    $region42: #{tpu_custom_call.1} parent=1 // pred_check
      _
    $region43: #{tpu_custom_call.1} parent=1 // pred_check_branch
      %141 = sbr.rel (0) target = $region45
    $region44: #{tpu_custom_call.1} parent=1 // pred_region
      %s143 = ssub.s32 512, 512
      %144 = vsyncadd [#allocation17], %s143
      %s145 = sshll.u32 [#allocation18], 4
      %s146 = int_to_ptr.vmem [resolvable:$true] %s145
      %151 = dma.hbm_to_vmem [thread:$0]  %s10, 512, %s146, [#allocation17], 128, 128, 8
    $region45: #{tpu_custom_call.1} parent=1 // pred_fallthru
      _
    // Predicated region
    $region46: #{tpu_custom_call.1} parent=1 // pred_check
      _
    $region47: #{tpu_custom_call.1} parent=1 // pred_check_branch
      %153 = sbr.rel (0) target = $region49
    $region48: #{tpu_custom_call.1} parent=1 // pred_region
      %s155 = ssub.s32 16, 16
      %156 = vsyncadd [#allocation20], %s155
      %s158 = sshll.u32 [#allocation19], 4
      %s159 = int_to_ptr.vmem [resolvable:$true] %s158
      %161 = dma.hbm_to_vmem [thread:$0]  %s11, 16, %s159, [#allocation20]
    $region49: #{tpu_custom_call.1} parent=1 // pred_fallthru
      _
    // Predicated region
    $region50: #{tpu_custom_call.1} parent=1 // pred_check
      _
    $region51: #{tpu_custom_call.1} parent=1 // pred_check_branch
      %163 = sbr.rel (0) target = $region53
    $region52: #{tpu_custom_call.1} parent=1 // pred_region
      %s165 = ssub.s32 1536, 1536
      %166 = vsyncadd [#allocation20], %s165
      %s167 = sshll.u32 [#allocation21], 4
      %s168 = int_to_ptr.vmem [resolvable:$true] %s167
      %173 = dma.hbm_to_vmem [thread:$0]  %s12, 1536, %s168, [#allocation20], 128, 128, 8
    $region53: #{tpu_custom_call.1} parent=1 // pred_fallthru
      _
    // Predicated region
    $region54: #{tpu_custom_call.1} parent=1 // pred_check
      _
    $region55: #{tpu_custom_call.1} parent=1 // pred_check_branch
      %175 = sbr.rel (0) target = $region57
    $region56: #{tpu_custom_call.1} parent=1 // pred_region
      %s177 = ssub.s32 1536, 1536
      %178 = vsyncadd [#allocation23], %s177
      %s179 = sshll.u32 [#allocation22], 4
      %s180 = int_to_ptr.vmem [resolvable:$true] %s179
      %185 = dma.hbm_to_vmem [thread:$0]  %s13, 1536, %s180, [#allocation23], 128, 128, 8
    $region57: #{tpu_custom_call.1} parent=1 // pred_fallthru
      _
    // Predicated region
    $region58: #{tpu_custom_call.1} parent=1 // pred_check
      _
    $region59: #{tpu_custom_call.1} parent=1 // pred_check_branch
      %187 = sbr.rel (0) target = $region61
    $region60: #{tpu_custom_call.1} parent=1 // pred_region
      %s189 = ssub.s32 16, 16
      %190 = vsyncadd [#allocation23], %s189
      %s192 = sshll.u32 [#allocation24], 4
      %s193 = int_to_ptr.vmem [resolvable:$true] %s192
      %195 = dma.hbm_to_vmem [thread:$0]  %s14, 16, %s193, [#allocation23]
    $region61: #{tpu_custom_call.1} parent=1 // pred_fallthru
      _
    // Predicated region
    $region62: #{tpu_custom_call.1} parent=1 // pred_check
      _
    $region63: #{tpu_custom_call.1} parent=1 // pred_check_branch
      %197 = sbr.rel (0) target = $region65
    $region64: #{tpu_custom_call.1} parent=1 // pred_region
      _
    $region65: #{tpu_custom_call.1} parent=1 // pred_fallthru
      _
    // Predicated region
    $region66: #{tpu_custom_call.1} parent=1 // pred_check
      _
    $region67: #{tpu_custom_call.1} parent=1 // pred_check_branch
      %199 = sbr.rel (0) target = $region69
    $region68: #{tpu_custom_call.1} parent=1 // pred_region
      _
    $region69: #{tpu_custom_call.1} parent=1 // pred_fallthru
      _
    // Predicated region
    $region70: #{tpu_custom_call.1} parent=1 // pred_check
      _
    $region71: #{tpu_custom_call.1} parent=1 // pred_check_branch
      %201 = sbr.rel (0) target = $region73
    $region72: #{tpu_custom_call.1} parent=1 // pred_region
      _
    $region73: #{tpu_custom_call.1} parent=1 // pred_fallthru
      _
    // Predicated region
    $region74: #{tpu_custom_call.1} parent=1 // pred_check
      _
    $region75: #{tpu_custom_call.1} parent=1 // pred_check_branch
      %203 = sbr.rel (0) target = $region77
    $region76: #{tpu_custom_call.1} parent=1 // pred_region
      _
    $region77: #{tpu_custom_call.1} parent=1 // pred_fallthru
      _
    // Predicated region
    $region78: #{tpu_custom_call.1} parent=1 // pred_check
      _
    $region79: #{tpu_custom_call.1} parent=1 // pred_check_branch
      %205 = sbr.rel (0) target = $region81
    $region80: #{tpu_custom_call.1} parent=1 // pred_region
      _
    $region81: #{tpu_custom_call.1} parent=1 // pred_fallthru
      _
    // Predicated region
    $region82: #{tpu_custom_call.1} parent=1 // pred_check
      _
    $region83: #{tpu_custom_call.1} parent=1 // pred_check_branch
      %207 = sbr.rel (0) target = $region85
    $region84: #{tpu_custom_call.1} parent=1 // pred_region
      _
    $region85: #{tpu_custom_call.1} parent=1 // pred_fallthru
      _
    // Predicated region
    $region86: #{tpu_custom_call.1} parent=1 // pred_check
      _
    $region87: #{tpu_custom_call.1} parent=1 // pred_check_branch
      %209 = sbr.rel (0) target = $region89
    $region88: #{tpu_custom_call.1} parent=1 // pred_region
      _
    $region89: #{tpu_custom_call.1} parent=1 // pred_fallthru
      _
    // Predicated region
    $region90: #{tpu_custom_call.1} parent=1 // pred_check
      _
    $region91: #{tpu_custom_call.1} parent=1 // pred_check_branch
      %211 = sbr.rel (0) target = $region93
    $region92: #{tpu_custom_call.1} parent=1 // pred_region
      _
    $region93: #{tpu_custom_call.1} parent=1 // pred_fallthru
      _
    // Predicated region
    $region94: #{tpu_custom_call.1} parent=1 // pred_check
      _
    $region95: #{tpu_custom_call.1} parent=1 // pred_check_branch
      %213 = sbr.rel (0) target = $region97
    $region96: #{tpu_custom_call.1} parent=1 // pred_region
      %214 = dma.done [#allocation5], 512
    $region97: #{tpu_custom_call.1} parent=1 // pred_fallthru
      _
    // Predicated region
    $region98: #{tpu_custom_call.1} parent=1 // pred_check
      _
    $region99: #{tpu_custom_call.1} parent=1 // pred_check_branch
      %216 = sbr.rel (0) target = $region101
    $region100: #{tpu_custom_call.1} parent=1 // pred_region
      %217 = dma.done [#allocation8], 1024
    $region101: #{tpu_custom_call.1} parent=1 // pred_fallthru
      _
    // Predicated region
    $region102: #{tpu_custom_call.1} parent=1 // pred_check
      _
    $region103: #{tpu_custom_call.1} parent=1 // pred_check_branch
      %219 = sbr.rel (0) target = $region105
    $region104: #{tpu_custom_call.1} parent=1 // pred_region
      %220 = dma.done [#allocation8], 1024
    $region105: #{tpu_custom_call.1} parent=1 // pred_fallthru
      _
    // Predicated region
    $region106: #{tpu_custom_call.1} parent=1 // pred_check
      _
    $region107: #{tpu_custom_call.1} parent=1 // pred_check_branch
      %222 = sbr.rel (0) target = $region109
    $region108: #{tpu_custom_call.1} parent=1 // pred_region
      %223 = dma.done [#allocation11], 32
    $region109: #{tpu_custom_call.1} parent=1 // pred_fallthru
      _
    // Predicated region
    $region110: #{tpu_custom_call.1} parent=1 // pred_check
      _
    $region111: #{tpu_custom_call.1} parent=1 // pred_check_branch
      %225 = sbr.rel (0) target = $region113
    $region112: #{tpu_custom_call.1} parent=1 // pred_region
      %226 = dma.done [#allocation11], 1536
    $region113: #{tpu_custom_call.1} parent=1 // pred_fallthru
      _
    // Predicated region
    $region114: #{tpu_custom_call.1} parent=1 // pred_check
      _
    $region115: #{tpu_custom_call.1} parent=1 // pred_check_branch
      %228 = sbr.rel (0) target = $region117
    $region116: #{tpu_custom_call.1} parent=1 // pred_region
      %229 = dma.done [#allocation14], 1536
    $region117: #{tpu_custom_call.1} parent=1 // pred_fallthru
      _
    // Predicated region
    $region118: #{tpu_custom_call.1} parent=1 // pred_check
      _
    $region119: #{tpu_custom_call.1} parent=1 // pred_check_branch
      %231 = sbr.rel (0) target = $region121
    $region120: #{tpu_custom_call.1} parent=1 // pred_region
      %232 = dma.done [#allocation14], 48
    $region121: #{tpu_custom_call.1} parent=1 // pred_fallthru
      _
    // Predicated region
    $region122: #{tpu_custom_call.1} parent=1 // pred_check
      _
    $region123: #{tpu_custom_call.1} parent=1 // pred_check_branch
      %234 = sbr.rel (0) target = $region125
    $region124: #{tpu_custom_call.1} parent=1 // pred_region
      %235 = dma.done [#allocation17], 1536
    $region125: #{tpu_custom_call.1} parent=1 // pred_fallthru
      _
    // Predicated region
    $region126: #{tpu_custom_call.1} parent=1 // pred_check
      _
    $region127: #{tpu_custom_call.1} parent=1 // pred_check_branch
      %237 = sbr.rel (0) target = $region129
    $region128: #{tpu_custom_call.1} parent=1 // pred_region
      %238 = dma.done [#allocation17], 512
    $region129: #{tpu_custom_call.1} parent=1 // pred_fallthru
      _
    // Predicated region
    $region130: #{tpu_custom_call.1} parent=1 // pred_check
      _
    $region131: #{tpu_custom_call.1} parent=1 // pred_check_branch
      %240 = sbr.rel (0) target = $region133
    $region132: #{tpu_custom_call.1} parent=1 // pred_region
      %241 = dma.done [#allocation20], 16
    $region133: #{tpu_custom_call.1} parent=1 // pred_fallthru
      _
    // Predicated region
    $region134: #{tpu_custom_call.1} parent=1 // pred_check
      _
    $region135: #{tpu_custom_call.1} parent=1 // pred_check_branch
      %243 = sbr.rel (0) target = $region137
    $region136: #{tpu_custom_call.1} parent=1 // pred_region
      %244 = dma.done [#allocation20], 1536
    $region137: #{tpu_custom_call.1} parent=1 // pred_fallthru
      _
    // Predicated region
    $region138: #{tpu_custom_call.1} parent=1 // pred_check
      _
    $region139: #{tpu_custom_call.1} parent=1 // pred_check_branch
      %246 = sbr.rel (0) target = $region141
    $region140: #{tpu_custom_call.1} parent=1 // pred_region
      %247 = dma.done [#allocation23], 1536
    $region141: #{tpu_custom_call.1} parent=1 // pred_fallthru
      _
    // Predicated region
    $region142: #{tpu_custom_call.1} parent=1 // pred_check
      _
    $region143: #{tpu_custom_call.1} parent=1 // pred_check_branch
      %249 = sbr.rel (0) target = $region145
    $region144: #{tpu_custom_call.1} parent=1 // pred_region
      %250 = dma.done [#allocation23], 16
    $region145: #{tpu_custom_call.1} parent=1 // pred_fallthru
      _
    %v251 = vld [vmem:[#allocation4] sm:$0xff]
    %v252 = vld [vmem:[#allocation4 + $0x8] sm:$0xff]
    %v253 = vld [vmem:[#allocation4 + $0x10] sm:$0xff]
    %v254 = vld [vmem:[#allocation4 + $0x18] sm:$0xff]
    %v255 = vld [vmem:[#allocation7] sm:$0xff]
    %v256 = vld [vmem:[#allocation7 + $0x8] sm:$0xff]
    %v257 = vld [vmem:[#allocation7 + $0x10] sm:$0xff]
    %v258 = vld [vmem:[#allocation7 + $0x18] sm:$0xff]
    %v259 = vld [vmem:[#allocation7 + $0x20] sm:$0xff]
    %v260 = vld [vmem:[#allocation7 + $0x28] sm:$0xff]
    %v261 = vld [vmem:[#allocation7 + $0x30] sm:$0xff]
    %v262 = vld [vmem:[#allocation7 + $0x38] sm:$0xff]
    %v263 = vld [vmem:[#allocation9] sm:$0xff]
    %v264 = vld [vmem:[#allocation9 + $0x8] sm:$0xff]
    %v265 = vld [vmem:[#allocation9 + $0x10] sm:$0xff]
    %v266 = vld [vmem:[#allocation9 + $0x18] sm:$0xff]
    %v267 = vld [vmem:[#allocation10] sm:$0x1]
    %v269 = vlaneseq
    %v270 = vshrl.u32 %v269, 7
    %v271 = vsub.s32 0, %v270
    %v272 = vrot.slane %v267, %v271
    %vm274 = vcmask 261120
    %v276 = vsel %vm274, %v251, 0
    %v279 = vsel %vm274, %v252, 0
    %v282 = vsel %vm274, %v253, 0
    %v285 = vsel %vm274, %v254, 0
    %287 = vmatprep.subr.mxu0 0.0
    %288 = vmatpush1.msra.mxu0 %v263
    %289 = vmatprep.subr.mxu0 0.0
    %290 = vmatpush1.msra.mxu0 %v264
    %291 = vmatprep.subr.mxu0 0.0
    %292 = vmatpush1.msra.mxu0 %v265
    %293 = vmatprep.subr.mxu0 0.0
    %294 = vmatpush1.msra.mxu0 %v266
    %295 = vmatprep.subr.mxu0 0.0
    %296 = vmatpush1.msra.mxu0 0.0
    %297 = vmatprep.subr.mxu0 0.0
    %298 = vmatpush1.msra.mxu0 0.0
    %299 = vmatprep.subr.mxu0 0.0
    %300 = vmatpush1.msra.mxu0 0.0
    %301 = vmatprep.subr.mxu0 0.0
    %302 = vmatpush1.msra.mxu0 0.0
    %303 = vmatprep.subr.mxu0 0.0
    %304 = vmatpush1.msra.mxu0 0.0
    %305 = vmatprep.subr.mxu0 0.0
    %306 = vmatpush1.msra.mxu0 0.0
    %307 = vmatprep.subr.mxu0 0.0
    %308 = vmatpush1.msra.mxu0 0.0
    %309 = vmatprep.subr.mxu0 0.0
    %310 = vmatpush1.msra.mxu0 0.0
    %311 = vmatprep.subr.mxu0 0.0
    %312 = vmatpush1.msra.mxu0 0.0
    %313 = vmatprep.subr.mxu0 0.0
    %314 = vmatpush1.msra.mxu0 0.0
    %315 = vmatprep.subr.mxu0 0.0
    %316 = vmatpush1.msra.mxu0 0.0
    %317 = vmatprep.subr.mxu0 0.0
    %318 = vmatpush1.msra.mxu0 0.0
    %319 = vmatprep.subr.mxu0 0.0
    %320 = vmatpush1.msra.mxu0 0.0
    %321 = vmatprep.subr.mxu0 0.0
    %322 = vmatpush1.msra.mxu0 0.0
    %323 = vmatprep.subr.mxu0 0.0
    %324 = vmatpush1.msra.mxu0 0.0
    %325 = vmatprep.subr.mxu0 0.0
    %326 = vmatpush1.msra.mxu0 0.0
    %327 = vmatprep.subr.mxu0 0.0
    %328 = vmatpush1.msra.mxu0 0.0
    %329 = vmatprep.subr.mxu0 0.0
    %330 = vmatpush1.msra.mxu0 0.0
    %331 = vmatprep.subr.mxu0 0.0
    %332 = vmatpush1.msra.mxu0 0.0
    %333 = vmatprep.subr.mxu0 0.0
    %334 = vmatpush1.msra.mxu0 0.0
    %335 = vmatprep.subr.mxu0 0.0
    %336 = vmatpush1.msra.mxu0 0.0
    %337 = vmatprep.subr.mxu0 0.0
    %338 = vmatpush1.msra.mxu0 0.0
    %339 = vmatprep.subr.mxu0 0.0
    %340 = vmatpush1.msra.mxu0 0.0
    %341 = vmatprep.subr.mxu0 0.0
    %342 = vmatpush1.msra.mxu0 0.0
    %343 = vmatprep.subr.mxu0 0.0
    %344 = vmatpush1.msra.mxu0 0.0
    %345 = vmatprep.subr.mxu0 0.0
    %346 = vmatpush1.msra.mxu0 0.0
    %347 = vmatprep.subr.mxu0 0.0
    %348 = vmatpush1.msra.mxu0 0.0
    %349 = vmatprep.subr.mxu0 0.0
    %350 = vmatpush1.msra.mxu0 0.0
    %351 = vmatprep.mubr.f32.mxu0 0.0
    %352 = vmatmul.mubr.f32.gmra.mrb[0].mxu0 %v276
    %v353 = vpop.f32.mrb[0].mxu0
    %v354 = vadd.f32 %v272, %v353
    %v355 = vpop.f32.mrb[0].mxu0
    %356 = vmatprep.mubr.f32.mxu0 0.0
    %357 = vmatmul.mubr.f32.gmra.mrb[0].mxu0 %v279
    %v358 = vpop.f32.mrb[0].mxu0
    %v359 = vadd.f32 %v272, %v358
    %v360 = vpop.f32.mrb[0].mxu0
    %361 = vmatprep.mubr.f32.mxu0 0.0
    %362 = vmatmul.mubr.f32.gmra.mrb[0].mxu0 %v282
    %v363 = vpop.f32.mrb[0].mxu0
    %v364 = vadd.f32 %v272, %v363
    %v365 = vpop.f32.mrb[0].mxu0
    %366 = vmatprep.mubr.f32.mxu0 0.0
    %367 = vmatmul.mubr.f32.gmra.mrb[0].mxu0 %v285
    %v368 = vpop.f32.mrb[0].mxu0
    %v369 = vadd.f32 %v272, %v368
    %v370 = vpop.f32.mrb[0].mxu0
    %371 = vdwg.mxu0
    %s372 = scalar_lea.vmem [#allocation9], 32
    %v373 = vld [vmem:[%s372] sm:$0xff]
    %v374 = vld [vmem:[%s372 + $0x8] sm:$0xff]
    %v375 = vld [vmem:[%s372 + $0x10] sm:$0xff]
    %v376 = vld [vmem:[%s372 + $0x18] sm:$0xff]
    %s377 = scalar_lea.vmem [#allocation10], 1
    %v378 = vld [vmem:[%s377] sm:$0x1]
    %v380 = vlaneseq
    %v381 = vshrl.u32 %v380, 7
    %v382 = vsub.s32 0, %v381
    %v383 = vrot.slane %v378, %v382
    %385 = vmatprep.subr.mxu0 0.0
    %386 = vmatpush1.msra.mxu0 %v373
    %387 = vmatprep.subr.mxu0 0.0
    %388 = vmatpush1.msra.mxu0 %v374
    %389 = vmatprep.subr.mxu0 0.0
    %390 = vmatpush1.msra.mxu0 %v375
    %391 = vmatprep.subr.mxu0 0.0
    %392 = vmatpush1.msra.mxu0 %v376
    %393 = vmatprep.subr.mxu0 0.0
    %394 = vmatpush1.msra.mxu0 0.0
    %395 = vmatprep.subr.mxu0 0.0
    %396 = vmatpush1.msra.mxu0 0.0
    %397 = vmatprep.subr.mxu0 0.0
    %398 = vmatpush1.msra.mxu0 0.0
    %399 = vmatprep.subr.mxu0 0.0
    %400 = vmatpush1.msra.mxu0 0.0
    %401 = vmatprep.subr.mxu0 0.0
    %402 = vmatpush1.msra.mxu0 0.0
    %403 = vmatprep.subr.mxu0 0.0
    %404 = vmatpush1.msra.mxu0 0.0
    %405 = vmatprep.subr.mxu0 0.0
    %406 = vmatpush1.msra.mxu0 0.0
    %407 = vmatprep.subr.mxu0 0.0
    %408 = vmatpush1.msra.mxu0 0.0
    %409 = vmatprep.subr.mxu0 0.0
    %410 = vmatpush1.msra.mxu0 0.0
    %411 = vmatprep.subr.mxu0 0.0
    %412 = vmatpush1.msra.mxu0 0.0
    %413 = vmatprep.subr.mxu0 0.0
    %414 = vmatpush1.msra.mxu0 0.0
    %415 = vmatprep.subr.mxu0 0.0
    %416 = vmatpush1.msra.mxu0 0.0
    %417 = vmatprep.subr.mxu0 0.0
    %418 = vmatpush1.msra.mxu0 0.0
    %419 = vmatprep.subr.mxu0 0.0
    %420 = vmatpush1.msra.mxu0 0.0
    %421 = vmatprep.subr.mxu0 0.0
    %422 = vmatpush1.msra.mxu0 0.0
    %423 = vmatprep.subr.mxu0 0.0
    %424 = vmatpush1.msra.mxu0 0.0
    %425 = vmatprep.subr.mxu0 0.0
    %426 = vmatpush1.msra.mxu0 0.0
    %427 = vmatprep.subr.mxu0 0.0
    %428 = vmatpush1.msra.mxu0 0.0
    %429 = vmatprep.subr.mxu0 0.0
    %430 = vmatpush1.msra.mxu0 0.0
    %431 = vmatprep.subr.mxu0 0.0
    %432 = vmatpush1.msra.mxu0 0.0
    %433 = vmatprep.subr.mxu0 0.0
    %434 = vmatpush1.msra.mxu0 0.0
    %435 = vmatprep.subr.mxu0 0.0
    %436 = vmatpush1.msra.mxu0 0.0
    %437 = vmatprep.subr.mxu0 0.0
    %438 = vmatpush1.msra.mxu0 0.0
    %439 = vmatprep.subr.mxu0 0.0
    %440 = vmatpush1.msra.mxu0 0.0
    %441 = vmatprep.subr.mxu0 0.0
    %442 = vmatpush1.msra.mxu0 0.0
    %443 = vmatprep.subr.mxu0 0.0
    %444 = vmatpush1.msra.mxu0 0.0
    %445 = vmatprep.subr.mxu0 0.0
    %446 = vmatpush1.msra.mxu0 0.0
    %447 = vmatprep.subr.mxu0 0.0
    %448 = vmatpush1.msra.mxu0 0.0
    %449 = vmatprep.mubr.f32.mxu0 0.0
    %450 = vmatmul.mubr.f32.gmra.mrb[0].mxu0 %v276
    %v451 = vpop.f32.mrb[0].mxu0
    %v452 = vadd.f32 %v383, %v451
    %v453 = vpop.f32.mrb[0].mxu0
    %454 = vmatprep.mubr.f32.mxu0 0.0
    %455 = vmatmul.mubr.f32.gmra.mrb[0].mxu0 %v279
    %v456 = vpop.f32.mrb[0].mxu0
    %v457 = vadd.f32 %v383, %v456
    %v458 = vpop.f32.mrb[0].mxu0
    %459 = vmatprep.mubr.f32.mxu0 0.0
    %460 = vmatmul.mubr.f32.gmra.mrb[0].mxu0 %v282
    %v461 = vpop.f32.mrb[0].mxu0
    %v462 = vadd.f32 %v383, %v461
    %v463 = vpop.f32.mrb[0].mxu0
    %464 = vmatprep.mubr.f32.mxu0 0.0
    %465 = vmatmul.mubr.f32.gmra.mrb[0].mxu0 %v285
    %v466 = vpop.f32.mrb[0].mxu0
    %v467 = vadd.f32 %v383, %v466
    %v468 = vpop.f32.mrb[0].mxu0
    %469 = vdwg.mxu0
    %vm470 = vcmask 130048
    %v472 = vsel %vm470, %v257, 0
    %v475 = vsel %vm470, %v258, 0
    %477 = vmatprep.subr.mxu0 0.0
    %478 = vmatpush1.msra.mxu0 %v452
    %479 = vmatprep.subr.mxu0 0.0
    %480 = vmatpush1.msra.mxu0 %v457
    %481 = vmatprep.subr.mxu0 0.0
    %482 = vmatpush1.msra.mxu0 0.0
    %483 = vmatprep.subr.mxu0 0.0
    %484 = vmatpush1.msra.mxu0 0.0
    %485 = vmatprep.subr.mxu0 0.0
    %486 = vmatpush1.msra.mxu0 0.0
    %487 = vmatprep.subr.mxu0 0.0
    %488 = vmatpush1.msra.mxu0 0.0
    %489 = vmatprep.subr.mxu0 0.0
    %490 = vmatpush1.msra.mxu0 0.0
    %491 = vmatprep.subr.mxu0 0.0
    %492 = vmatpush1.msra.mxu0 0.0
    %493 = vmatprep.subr.mxu0 0.0
    %494 = vmatpush1.msra.mxu0 0.0
    %495 = vmatprep.subr.mxu0 0.0
    %496 = vmatpush1.msra.mxu0 0.0
    %497 = vmatprep.subr.mxu0 0.0
    %498 = vmatpush1.msra.mxu0 0.0
    %499 = vmatprep.subr.mxu0 0.0
    %500 = vmatpush1.msra.mxu0 0.0
    %501 = vmatprep.subr.mxu0 0.0
    %502 = vmatpush1.msra.mxu0 0.0
    %503 = vmatprep.subr.mxu0 0.0
    %504 = vmatpush1.msra.mxu0 0.0
    %505 = vmatprep.subr.mxu0 0.0
    %506 = vmatpush1.msra.mxu0 0.0
    %507 = vmatprep.subr.mxu0 0.0
    %508 = vmatpush1.msra.mxu0 0.0
    %509 = vmatprep.subr.mxu0 0.0
    %510 = vmatpush1.msra.mxu0 0.0
    %511 = vmatprep.subr.mxu0 0.0
    %512 = vmatpush1.msra.mxu0 0.0
    %513 = vmatprep.subr.mxu0 0.0
    %514 = vmatpush1.msra.mxu0 0.0
    %515 = vmatprep.subr.mxu0 0.0
    %516 = vmatpush1.msra.mxu0 0.0
    %517 = vmatprep.subr.mxu0 0.0
    %518 = vmatpush1.msra.mxu0 0.0
    %519 = vmatprep.subr.mxu0 0.0
    %520 = vmatpush1.msra.mxu0 0.0
    %521 = vmatprep.subr.mxu0 0.0
    %522 = vmatpush1.msra.mxu0 0.0
    %523 = vmatprep.subr.mxu0 0.0
    %524 = vmatpush1.msra.mxu0 0.0
    %525 = vmatprep.subr.mxu0 0.0
    %526 = vmatpush1.msra.mxu0 0.0
    %527 = vmatprep.subr.mxu0 0.0
    %528 = vmatpush1.msra.mxu0 0.0
    %529 = vmatprep.subr.mxu0 0.0
    %530 = vmatpush1.msra.mxu0 0.0
    %531 = vmatprep.subr.mxu0 0.0
    %532 = vmatpush1.msra.mxu0 0.0
    %533 = vmatprep.subr.mxu0 0.0
    %534 = vmatpush1.msra.mxu0 0.0
    %535 = vmatprep.subr.mxu0 0.0
    %536 = vmatpush1.msra.mxu0 0.0
    %537 = vmatprep.subr.mxu0 0.0
    %538 = vmatpush1.msra.mxu0 0.0
    %539 = vmatprep.subr.mxu0 0.0
    %540 = vmatpush1.msra.mxu0 0.0
    %541 = vmatprep.mubr.f32.mxu0 0.0
    %542 = vmatmul.mubr.f32.gmra.mrb[0].mxu0 %v472
    %v543 = vpop.f32.mrb[0].mxu0
    %v544 = vadd.f32 0.0, %v543
    %v545 = vpop.f32.mrb[0].mxu0
    %546 = vmatprep.mubr.f32.mxu0 0.0
    %547 = vmatmul.mubr.f32.gmra.mrb[0].mxu0 %v475
    %v548 = vpop.f32.mrb[0].mxu0
    %v549 = vadd.f32 0.0, %v548
    %v550 = vpop.f32.mrb[0].mxu0
    %551 = vdwg.mxu0
    %v553 = vsel %vm470, %v255, 0
    %v556 = vsel %vm470, %v256, 0
    %558 = vmatprep.subr.mxu0 0.0
    %559 = vmatpush1.msra.mxu0 %v354
    %560 = vmatprep.subr.mxu0 0.0
    %561 = vmatpush1.msra.mxu0 %v359
    %562 = vmatprep.subr.mxu0 0.0
    %563 = vmatpush1.msra.mxu0 0.0
    %564 = vmatprep.subr.mxu0 0.0
    %565 = vmatpush1.msra.mxu0 0.0
    %566 = vmatprep.subr.mxu0 0.0
    %567 = vmatpush1.msra.mxu0 0.0
    %568 = vmatprep.subr.mxu0 0.0
    %569 = vmatpush1.msra.mxu0 0.0
    %570 = vmatprep.subr.mxu0 0.0
    %571 = vmatpush1.msra.mxu0 0.0
    %572 = vmatprep.subr.mxu0 0.0
    %573 = vmatpush1.msra.mxu0 0.0
    %574 = vmatprep.subr.mxu0 0.0
    %575 = vmatpush1.msra.mxu0 0.0
    %576 = vmatprep.subr.mxu0 0.0
    %577 = vmatpush1.msra.mxu0 0.0
    %578 = vmatprep.subr.mxu0 0.0
    %579 = vmatpush1.msra.mxu0 0.0
    %580 = vmatprep.subr.mxu0 0.0
    %581 = vmatpush1.msra.mxu0 0.0
    %582 = vmatprep.subr.mxu0 0.0
    %583 = vmatpush1.msra.mxu0 0.0
    %584 = vmatprep.subr.mxu0 0.0
    %585 = vmatpush1.msra.mxu0 0.0
    %586 = vmatprep.subr.mxu0 0.0
    %587 = vmatpush1.msra.mxu0 0.0
    %588 = vmatprep.subr.mxu0 0.0
    %589 = vmatpush1.msra.mxu0 0.0
    %590 = vmatprep.subr.mxu0 0.0
    %591 = vmatpush1.msra.mxu0 0.0
    %592 = vmatprep.subr.mxu0 0.0
    %593 = vmatpush1.msra.mxu0 0.0
    %594 = vmatprep.subr.mxu0 0.0
    %595 = vmatpush1.msra.mxu0 0.0
    %596 = vmatprep.subr.mxu0 0.0
    %597 = vmatpush1.msra.mxu0 0.0
    %598 = vmatprep.subr.mxu0 0.0
    %599 = vmatpush1.msra.mxu0 0.0
    %600 = vmatprep.subr.mxu0 0.0
    %601 = vmatpush1.msra.mxu0 0.0
    %602 = vmatprep.subr.mxu0 0.0
    %603 = vmatpush1.msra.mxu0 0.0
    %604 = vmatprep.subr.mxu0 0.0
    %605 = vmatpush1.msra.mxu0 0.0
    %606 = vmatprep.subr.mxu0 0.0
    %607 = vmatpush1.msra.mxu0 0.0
    %608 = vmatprep.subr.mxu0 0.0
    %609 = vmatpush1.msra.mxu0 0.0
    %610 = vmatprep.subr.mxu0 0.0
    %611 = vmatpush1.msra.mxu0 0.0
    %612 = vmatprep.subr.mxu0 0.0
    %613 = vmatpush1.msra.mxu0 0.0
    %614 = vmatprep.subr.mxu0 0.0
    %615 = vmatpush1.msra.mxu0 0.0
    %616 = vmatprep.subr.mxu0 0.0
    %617 = vmatpush1.msra.mxu0 0.0
    %618 = vmatprep.subr.mxu0 0.0
    %619 = vmatpush1.msra.mxu0 0.0
    %620 = vmatprep.subr.mxu0 0.0
    %621 = vmatpush1.msra.mxu0 0.0
    %622 = vmatprep.mubr.f32.mxu0 0.0
    %623 = vmatmul.mubr.f32.gmra.mrb[0].mxu0 %v553
    %v624 = vpop.f32.mrb[0].mxu0
    %v625 = vadd.f32 %v544, %v624
    %v626 = vpop.f32.mrb[0].mxu0
    %627 = vmatprep.mubr.f32.mxu0 0.0
    %628 = vmatmul.mubr.f32.gmra.mrb[0].mxu0 %v556
    %v629 = vpop.f32.mrb[0].mxu0
    %v630 = vadd.f32 %v549, %v629
    %v631 = vpop.f32.mrb[0].mxu0
    %632 = vdwg.mxu0
    %v634 = vsel %vm470, %v261, 0
    %v637 = vsel %vm470, %v262, 0
    %639 = vmatprep.subr.mxu0 0.0
    %640 = vmatpush1.msra.mxu0 %v462
    %641 = vmatprep.subr.mxu0 0.0
    %642 = vmatpush1.msra.mxu0 %v467
    %643 = vmatprep.subr.mxu0 0.0
    %644 = vmatpush1.msra.mxu0 0.0
    %645 = vmatprep.subr.mxu0 0.0
    %646 = vmatpush1.msra.mxu0 0.0
    %647 = vmatprep.subr.mxu0 0.0
    %648 = vmatpush1.msra.mxu0 0.0
    %649 = vmatprep.subr.mxu0 0.0
    %650 = vmatpush1.msra.mxu0 0.0
    %651 = vmatprep.subr.mxu0 0.0
    %652 = vmatpush1.msra.mxu0 0.0
    %653 = vmatprep.subr.mxu0 0.0
    %654 = vmatpush1.msra.mxu0 0.0
    %655 = vmatprep.subr.mxu0 0.0
    %656 = vmatpush1.msra.mxu0 0.0
    %657 = vmatprep.subr.mxu0 0.0
    %658 = vmatpush1.msra.mxu0 0.0
    %659 = vmatprep.subr.mxu0 0.0
    %660 = vmatpush1.msra.mxu0 0.0
    %661 = vmatprep.subr.mxu0 0.0
    %662 = vmatpush1.msra.mxu0 0.0
    %663 = vmatprep.subr.mxu0 0.0
    %664 = vmatpush1.msra.mxu0 0.0
    %665 = vmatprep.subr.mxu0 0.0
    %666 = vmatpush1.msra.mxu0 0.0
    %667 = vmatprep.subr.mxu0 0.0
    %668 = vmatpush1.msra.mxu0 0.0
    %669 = vmatprep.subr.mxu0 0.0
    %670 = vmatpush1.msra.mxu0 0.0
    %671 = vmatprep.subr.mxu0 0.0
    %672 = vmatpush1.msra.mxu0 0.0
    %673 = vmatprep.subr.mxu0 0.0
    %674 = vmatpush1.msra.mxu0 0.0
    %675 = vmatprep.subr.mxu0 0.0
    %676 = vmatpush1.msra.mxu0 0.0
    %677 = vmatprep.subr.mxu0 0.0
    %678 = vmatpush1.msra.mxu0 0.0
    %679 = vmatprep.subr.mxu0 0.0
    %680 = vmatpush1.msra.mxu0 0.0
    %681 = vmatprep.subr.mxu0 0.0
    %682 = vmatpush1.msra.mxu0 0.0
    %683 = vmatprep.subr.mxu0 0.0
    %684 = vmatpush1.msra.mxu0 0.0
    %685 = vmatprep.subr.mxu0 0.0
    %686 = vmatpush1.msra.mxu0 0.0
    %687 = vmatprep.subr.mxu0 0.0
    %688 = vmatpush1.msra.mxu0 0.0
    %689 = vmatprep.subr.mxu0 0.0
    %690 = vmatpush1.msra.mxu0 0.0
    %691 = vmatprep.subr.mxu0 0.0
    %692 = vmatpush1.msra.mxu0 0.0
    %693 = vmatprep.subr.mxu0 0.0
    %694 = vmatpush1.msra.mxu0 0.0
    %695 = vmatprep.subr.mxu0 0.0
    %696 = vmatpush1.msra.mxu0 0.0
    %697 = vmatprep.subr.mxu0 0.0
    %698 = vmatpush1.msra.mxu0 0.0
    %699 = vmatprep.subr.mxu0 0.0
    %700 = vmatpush1.msra.mxu0 0.0
    %701 = vmatprep.subr.mxu0 0.0
    %702 = vmatpush1.msra.mxu0 0.0
    %703 = vmatprep.mubr.f32.mxu0 0.0
    %704 = vmatmul.mubr.f32.gmra.mrb[0].mxu0 %v634
    %v705 = vpop.f32.mrb[0].mxu0
    %v706 = vadd.f32 0.0, %v705
    %v707 = vpop.f32.mrb[0].mxu0
    %708 = vmatprep.mubr.f32.mxu0 0.0
    %709 = vmatmul.mubr.f32.gmra.mrb[0].mxu0 %v637
    %v710 = vpop.f32.mrb[0].mxu0
    %v711 = vadd.f32 0.0, %v710
    %v712 = vpop.f32.mrb[0].mxu0
    %713 = vdwg.mxu0
    %v715 = vsel %vm470, %v259, 0
    %v718 = vsel %vm470, %v260, 0
    %720 = vmatprep.subr.mxu0 0.0
    %721 = vmatpush1.msra.mxu0 %v364
    %722 = vmatprep.subr.mxu0 0.0
    %723 = vmatpush1.msra.mxu0 %v369
    %724 = vmatprep.subr.mxu0 0.0
    %725 = vmatpush1.msra.mxu0 0.0
    %726 = vmatprep.subr.mxu0 0.0
    %727 = vmatpush1.msra.mxu0 0.0
    %728 = vmatprep.subr.mxu0 0.0
    %729 = vmatpush1.msra.mxu0 0.0
    %730 = vmatprep.subr.mxu0 0.0
    %731 = vmatpush1.msra.mxu0 0.0
    %732 = vmatprep.subr.mxu0 0.0
    %733 = vmatpush1.msra.mxu0 0.0
    %734 = vmatprep.subr.mxu0 0.0
    %735 = vmatpush1.msra.mxu0 0.0
    %736 = vmatprep.subr.mxu0 0.0
    %737 = vmatpush1.msra.mxu0 0.0
    %738 = vmatprep.subr.mxu0 0.0
    %739 = vmatpush1.msra.mxu0 0.0
    %740 = vmatprep.subr.mxu0 0.0
    %741 = vmatpush1.msra.mxu0 0.0
    %742 = vmatprep.subr.mxu0 0.0
    %743 = vmatpush1.msra.mxu0 0.0
    %744 = vmatprep.subr.mxu0 0.0
    %745 = vmatpush1.msra.mxu0 0.0
    %746 = vmatprep.subr.mxu0 0.0
    %747 = vmatpush1.msra.mxu0 0.0
    %748 = vmatprep.subr.mxu0 0.0
    %749 = vmatpush1.msra.mxu0 0.0
    %750 = vmatprep.subr.mxu0 0.0
    %751 = vmatpush1.msra.mxu0 0.0
    %752 = vmatprep.subr.mxu0 0.0
    %753 = vmatpush1.msra.mxu0 0.0
    %754 = vmatprep.subr.mxu0 0.0
    %755 = vmatpush1.msra.mxu0 0.0
    %756 = vmatprep.subr.mxu0 0.0
    %757 = vmatpush1.msra.mxu0 0.0
    %758 = vmatprep.subr.mxu0 0.0
    %759 = vmatpush1.msra.mxu0 0.0
    %760 = vmatprep.subr.mxu0 0.0
    %761 = vmatpush1.msra.mxu0 0.0
    %762 = vmatprep.subr.mxu0 0.0
    %763 = vmatpush1.msra.mxu0 0.0
    %764 = vmatprep.subr.mxu0 0.0
    %765 = vmatpush1.msra.mxu0 0.0
    %766 = vmatprep.subr.mxu0 0.0
    %767 = vmatpush1.msra.mxu0 0.0
    %768 = vmatprep.subr.mxu0 0.0
    %769 = vmatpush1.msra.mxu0 0.0
    %770 = vmatprep.subr.mxu0 0.0
    %771 = vmatpush1.msra.mxu0 0.0
    %772 = vmatprep.subr.mxu0 0.0
    %773 = vmatpush1.msra.mxu0 0.0
    %774 = vmatprep.subr.mxu0 0.0
    %775 = vmatpush1.msra.mxu0 0.0
    %776 = vmatprep.subr.mxu0 0.0
    %777 = vmatpush1.msra.mxu0 0.0
    %778 = vmatprep.subr.mxu0 0.0
    %779 = vmatpush1.msra.mxu0 0.0
    %780 = vmatprep.subr.mxu0 0.0
    %781 = vmatpush1.msra.mxu0 0.0
    %782 = vmatprep.subr.mxu0 0.0
    %783 = vmatpush1.msra.mxu0 0.0
    %784 = vmatprep.mubr.f32.mxu0 0.0
    %785 = vmatmul.mubr.f32.gmra.mrb[0].mxu0 %v715
    %v786 = vpop.f32.mrb[0].mxu0
    %v787 = vadd.f32 %v706, %v786
    %v788 = vpop.f32.mrb[0].mxu0
    %789 = vmatprep.mubr.f32.mxu0 0.0
    %790 = vmatmul.mubr.f32.gmra.mrb[0].mxu0 %v718
    %v791 = vpop.f32.mrb[0].mxu0
    %v792 = vadd.f32 %v711, %v791
    %v793 = vpop.f32.mrb[0].mxu0
    %794 = vdwg.mxu0
    %v795 = vld [vmem:[#allocation12] sm:$0xff]
    %v796 = vld [vmem:[#allocation12 + $0x8] sm:$0xff]
    %v797 = vld [vmem:[#allocation12 + $0x10] sm:$0xff]
    %v798 = vld [vmem:[#allocation12 + $0x18] sm:$0xff]
    %v799 = vld [vmem:[%s5] sm:$0x1]
    %v801 = vlaneseq
    %v802 = vshrl.u32 %v801, 7
    %v803 = vsub.s32 0, %v802
    %v804 = vrot.slane %v799, %v803
    %v807 = vsel %vm274, %v625, 0
    %v810 = vsel %vm274, %v630, 0
    %v813 = vsel %vm274, %v787, 0
    %v816 = vsel %vm274, %v792, 0
    %818 = vmatprep.subr.mxu0 0.0
    %819 = vmatpush1.msra.mxu0 %v795
    %820 = vmatprep.subr.mxu0 0.0
    %821 = vmatpush1.msra.mxu0 %v796
    %822 = vmatprep.subr.mxu0 0.0
    %823 = vmatpush1.msra.mxu0 %v797
    %824 = vmatprep.subr.mxu0 0.0
    %825 = vmatpush1.msra.mxu0 %v798
    %826 = vmatprep.subr.mxu0 0.0
    %827 = vmatpush1.msra.mxu0 0.0
    %828 = vmatprep.subr.mxu0 0.0
    %829 = vmatpush1.msra.mxu0 0.0
    %830 = vmatprep.subr.mxu0 0.0
    %831 = vmatpush1.msra.mxu0 0.0
    %832 = vmatprep.subr.mxu0 0.0
    %833 = vmatpush1.msra.mxu0 0.0
    %834 = vmatprep.subr.mxu0 0.0
    %835 = vmatpush1.msra.mxu0 0.0
    %836 = vmatprep.subr.mxu0 0.0
    %837 = vmatpush1.msra.mxu0 0.0
    %838 = vmatprep.subr.mxu0 0.0
    %839 = vmatpush1.msra.mxu0 0.0
    %840 = vmatprep.subr.mxu0 0.0
    %841 = vmatpush1.msra.mxu0 0.0
    %842 = vmatprep.subr.mxu0 0.0
    %843 = vmatpush1.msra.mxu0 0.0
    %844 = vmatprep.subr.mxu0 0.0
    %845 = vmatpush1.msra.mxu0 0.0
    %846 = vmatprep.subr.mxu0 0.0
    %847 = vmatpush1.msra.mxu0 0.0
    %848 = vmatprep.subr.mxu0 0.0
    %849 = vmatpush1.msra.mxu0 0.0
    %850 = vmatprep.subr.mxu0 0.0
    %851 = vmatpush1.msra.mxu0 0.0
    %852 = vmatprep.subr.mxu0 0.0
    %853 = vmatpush1.msra.mxu0 0.0
    %854 = vmatprep.subr.mxu0 0.0
    %855 = vmatpush1.msra.mxu0 0.0
    %856 = vmatprep.subr.mxu0 0.0
    %857 = vmatpush1.msra.mxu0 0.0
    %858 = vmatprep.subr.mxu0 0.0
    %859 = vmatpush1.msra.mxu0 0.0
    %860 = vmatprep.subr.mxu0 0.0
    %861 = vmatpush1.msra.mxu0 0.0
    %862 = vmatprep.subr.mxu0 0.0
    %863 = vmatpush1.msra.mxu0 0.0
    %864 = vmatprep.subr.mxu0 0.0
    %865 = vmatpush1.msra.mxu0 0.0
    %866 = vmatprep.subr.mxu0 0.0
    %867 = vmatpush1.msra.mxu0 0.0
    %868 = vmatprep.subr.mxu0 0.0
    %869 = vmatpush1.msra.mxu0 0.0
    %870 = vmatprep.subr.mxu0 0.0
    %871 = vmatpush1.msra.mxu0 0.0
    %872 = vmatprep.subr.mxu0 0.0
    %873 = vmatpush1.msra.mxu0 0.0
    %874 = vmatprep.subr.mxu0 0.0
    %875 = vmatpush1.msra.mxu0 0.0
    %876 = vmatprep.subr.mxu0 0.0
    %877 = vmatpush1.msra.mxu0 0.0
    %878 = vmatprep.subr.mxu0 0.0
    %879 = vmatpush1.msra.mxu0 0.0
    %880 = vmatprep.subr.mxu0 0.0
    %881 = vmatpush1.msra.mxu0 0.0
    %882 = vmatprep.mubr.f32.mxu0 0.0
    %883 = vmatmul.mubr.f32.gmra.mrb[0].mxu0 %v807
    %v884 = vpop.f32.mrb[0].mxu0
    %v885 = vadd.f32 %v804, %v884
    %v886 = vpop.f32.mrb[0].mxu0
    %887 = vmatprep.mubr.f32.mxu0 0.0
    %888 = vmatmul.mubr.f32.gmra.mrb[0].mxu0 %v810
    %v889 = vpop.f32.mrb[0].mxu0
    %v890 = vadd.f32 %v804, %v889
    %v891 = vpop.f32.mrb[0].mxu0
    %892 = vmatprep.mubr.f32.mxu0 0.0
    %893 = vmatmul.mubr.f32.gmra.mrb[0].mxu0 %v813
    %v894 = vpop.f32.mrb[0].mxu0
    %v895 = vadd.f32 %v804, %v894
    %v896 = vpop.f32.mrb[0].mxu0
    %897 = vmatprep.mubr.f32.mxu0 0.0
    %898 = vmatmul.mubr.f32.gmra.mrb[0].mxu0 %v816
    %v899 = vpop.f32.mrb[0].mxu0
    %v900 = vadd.f32 %v804, %v899
    %v901 = vpop.f32.mrb[0].mxu0
    %902 = vdwg.mxu0
    %v903 = vld [vmem:[#allocation13] sm:$0xff]
    %v904 = vld [vmem:[#allocation13 + $0x8] sm:$0xff]
    %v905 = vld [vmem:[#allocation13 + $0x10] sm:$0xff]
    %v906 = vld [vmem:[#allocation13 + $0x18] sm:$0xff]
    %907 = vmatprep.subr.mxu0 0.0
    %908 = vmatpush1.msra.mxu0 %v903
    %909 = vmatprep.subr.mxu0 0.0
    %910 = vmatpush1.msra.mxu0 %v904
    %911 = vmatprep.subr.mxu0 0.0
    %912 = vmatpush1.msra.mxu0 %v905
    %913 = vmatprep.subr.mxu0 0.0
    %914 = vmatpush1.msra.mxu0 %v906
    %915 = vmatprep.subr.mxu0 0.0
    %916 = vmatpush1.msra.mxu0 0.0
    %917 = vmatprep.subr.mxu0 0.0
    %918 = vmatpush1.msra.mxu0 0.0
    %919 = vmatprep.subr.mxu0 0.0
    %920 = vmatpush1.msra.mxu0 0.0
    %921 = vmatprep.subr.mxu0 0.0
    %922 = vmatpush1.msra.mxu0 0.0
    %923 = vmatprep.subr.mxu0 0.0
    %924 = vmatpush1.msra.mxu0 0.0
    %925 = vmatprep.subr.mxu0 0.0
    %926 = vmatpush1.msra.mxu0 0.0
    %927 = vmatprep.subr.mxu0 0.0
    %928 = vmatpush1.msra.mxu0 0.0
    %929 = vmatprep.subr.mxu0 0.0
    %930 = vmatpush1.msra.mxu0 0.0
    %931 = vmatprep.subr.mxu0 0.0
    %932 = vmatpush1.msra.mxu0 0.0
    %933 = vmatprep.subr.mxu0 0.0
    %934 = vmatpush1.msra.mxu0 0.0
    %935 = vmatprep.subr.mxu0 0.0
    %936 = vmatpush1.msra.mxu0 0.0
    %937 = vmatprep.subr.mxu0 0.0
    %938 = vmatpush1.msra.mxu0 0.0
    %939 = vmatprep.subr.mxu0 0.0
    %940 = vmatpush1.msra.mxu0 0.0
    %941 = vmatprep.subr.mxu0 0.0
    %942 = vmatpush1.msra.mxu0 0.0
    %943 = vmatprep.subr.mxu0 0.0
    %944 = vmatpush1.msra.mxu0 0.0
    %945 = vmatprep.subr.mxu0 0.0
    %946 = vmatpush1.msra.mxu0 0.0
    %947 = vmatprep.subr.mxu0 0.0
    %948 = vmatpush1.msra.mxu0 0.0
    %949 = vmatprep.subr.mxu0 0.0
    %950 = vmatpush1.msra.mxu0 0.0
    %951 = vmatprep.subr.mxu0 0.0
    %952 = vmatpush1.msra.mxu0 0.0
    %953 = vmatprep.subr.mxu0 0.0
    %954 = vmatpush1.msra.mxu0 0.0
    %955 = vmatprep.subr.mxu0 0.0
    %956 = vmatpush1.msra.mxu0 0.0
    %957 = vmatprep.subr.mxu0 0.0
    %958 = vmatpush1.msra.mxu0 0.0
    %959 = vmatprep.subr.mxu0 0.0
    %960 = vmatpush1.msra.mxu0 0.0
    %961 = vmatprep.subr.mxu0 0.0
    %962 = vmatpush1.msra.mxu0 0.0
    %963 = vmatprep.subr.mxu0 0.0
    %964 = vmatpush1.msra.mxu0 0.0
    %965 = vmatprep.subr.mxu0 0.0
    %966 = vmatpush1.msra.mxu0 0.0
    %967 = vmatprep.subr.mxu0 0.0
    %968 = vmatpush1.msra.mxu0 0.0
    %969 = vmatprep.subr.mxu0 0.0
    %970 = vmatpush1.msra.mxu0 0.0
    %971 = vmatprep.mubr.f32.mxu0 0.0
    %972 = vmatmul.mubr.f32.gmra.mrb[0].mxu0 %v276
    %v973 = vpop.f32.mrb[0].mxu0
    %v974 = vadd.f32 0.0, %v973
    %v975 = vpop.f32.mrb[0].mxu0
    %976 = vmatprep.mubr.f32.mxu0 0.0
    %977 = vmatmul.mubr.f32.gmra.mrb[0].mxu0 %v279
    %v978 = vpop.f32.mrb[0].mxu0
    %v979 = vadd.f32 0.0, %v978
    %v980 = vpop.f32.mrb[0].mxu0
    %981 = vmatprep.mubr.f32.mxu0 0.0
    %982 = vmatmul.mubr.f32.gmra.mrb[0].mxu0 %v282
    %v983 = vpop.f32.mrb[0].mxu0
    %v984 = vadd.f32 0.0, %v983
    %v985 = vpop.f32.mrb[0].mxu0
    %986 = vmatprep.mubr.f32.mxu0 0.0
    %987 = vmatmul.mubr.f32.gmra.mrb[0].mxu0 %v285
    %v988 = vpop.f32.mrb[0].mxu0
    %v989 = vadd.f32 0.0, %v988
    %v990 = vpop.f32.mrb[0].mxu0
    %991 = vdwg.mxu0
    %v992 = vadd.f32 %v885, %v974
    %v993 = vadd.f32 %v890, %v979
    %v994 = vadd.f32 %v895, %v984
    %v995 = vadd.f32 %v900, %v989
    %v996 = vld [vmem:[#allocation15] sm:$0x1]
    %v998 = vlaneseq
    %v999 = vshrl.u32 %v998, 7
    %v1000 = vsub.s32 0, %v999
    %v1001 = vrot.slane %v996, %v1000
    %v1003 = vadd.f32 %v992, %v1001
    %v1004 = vadd.f32 %v993, %v1001
    %v1005 = vadd.f32 %v994, %v1001
    %v1006 = vadd.f32 %v995, %v1001
    %v1007 = vxor.u32 %v1003, 2147483648
    %v1008 = vxor.u32 %v1004, 2147483648
    %v1009 = vxor.u32 %v1005, 2147483648
    %v1010 = vxor.u32 %v1006, 2147483648
    %v1011 = vmul.f32 %v1007, 1.442695
    %v1012 = vpow.pop %v1011
    %v1013 = vmul.f32 %v1008, 1.442695
    %v1014 = vpow.pop %v1013
    %v1015 = vmul.f32 %v1009, 1.442695
    %v1016 = vpow.pop %v1015
    %v1017 = vmul.f32 %v1010, 1.442695
    %v1018 = vpow.pop %v1017
    %v1019 = vadd.f32 %v1012, 1.0
    %v1020 = vadd.f32 %v1014, 1.0
    %v1021 = vadd.f32 %v1016, 1.0
    %v1022 = vadd.f32 %v1018, 1.0
    %v1023 = vrcp.pop %v1019
    %v1024 = vmul.f32 1.0, %v1023
    %v1025 = vrcp.pop %v1020
    %v1026 = vmul.f32 1.0, %v1025
    %v1027 = vrcp.pop %v1021
    %v1028 = vmul.f32 1.0, %v1027
    %v1029 = vrcp.pop %v1022
    %v1030 = vmul.f32 1.0, %v1029
    %s1031 = scalar_lea.vmem [#allocation12], 32
    %v1032 = vld [vmem:[%s1031] sm:$0xff]
    %v1033 = vld [vmem:[%s1031 + $0x8] sm:$0xff]
    %v1034 = vld [vmem:[%s1031 + $0x10] sm:$0xff]
    %v1035 = vld [vmem:[%s1031 + $0x18] sm:$0xff]
    %s1036 = scalar_lea.vmem %s5, 1
    %v1037 = vld [vmem:[%s1036] sm:$0x1]
    %v1039 = vlaneseq
    %v1040 = vshrl.u32 %v1039, 7
    %v1041 = vsub.s32 0, %v1040
    %v1042 = vrot.slane %v1037, %v1041
    %1044 = vmatprep.subr.mxu0 0.0
    %1045 = vmatpush1.msra.mxu0 %v1032
    %1046 = vmatprep.subr.mxu0 0.0
    %1047 = vmatpush1.msra.mxu0 %v1033
    %1048 = vmatprep.subr.mxu0 0.0
    %1049 = vmatpush1.msra.mxu0 %v1034
    %1050 = vmatprep.subr.mxu0 0.0
    %1051 = vmatpush1.msra.mxu0 %v1035
    %1052 = vmatprep.subr.mxu0 0.0
    %1053 = vmatpush1.msra.mxu0 0.0
    %1054 = vmatprep.subr.mxu0 0.0
    %1055 = vmatpush1.msra.mxu0 0.0
    %1056 = vmatprep.subr.mxu0 0.0
    %1057 = vmatpush1.msra.mxu0 0.0
    %1058 = vmatprep.subr.mxu0 0.0
    %1059 = vmatpush1.msra.mxu0 0.0
    %1060 = vmatprep.subr.mxu0 0.0
    %1061 = vmatpush1.msra.mxu0 0.0
    %1062 = vmatprep.subr.mxu0 0.0
    %1063 = vmatpush1.msra.mxu0 0.0
    %1064 = vmatprep.subr.mxu0 0.0
    %1065 = vmatpush1.msra.mxu0 0.0
    %1066 = vmatprep.subr.mxu0 0.0
    %1067 = vmatpush1.msra.mxu0 0.0
    %1068 = vmatprep.subr.mxu0 0.0
    %1069 = vmatpush1.msra.mxu0 0.0
    %1070 = vmatprep.subr.mxu0 0.0
    %1071 = vmatpush1.msra.mxu0 0.0
    %1072 = vmatprep.subr.mxu0 0.0
    %1073 = vmatpush1.msra.mxu0 0.0
    %1074 = vmatprep.subr.mxu0 0.0
    %1075 = vmatpush1.msra.mxu0 0.0
    %1076 = vmatprep.subr.mxu0 0.0
    %1077 = vmatpush1.msra.mxu0 0.0
    %1078 = vmatprep.subr.mxu0 0.0
    %1079 = vmatpush1.msra.mxu0 0.0
    %1080 = vmatprep.subr.mxu0 0.0
    %1081 = vmatpush1.msra.mxu0 0.0
    %1082 = vmatprep.subr.mxu0 0.0
    %1083 = vmatpush1.msra.mxu0 0.0
    %1084 = vmatprep.subr.mxu0 0.0
    %1085 = vmatpush1.msra.mxu0 0.0
    %1086 = vmatprep.subr.mxu0 0.0
    %1087 = vmatpush1.msra.mxu0 0.0
    %1088 = vmatprep.subr.mxu0 0.0
    %1089 = vmatpush1.msra.mxu0 0.0
    %1090 = vmatprep.subr.mxu0 0.0
    %1091 = vmatpush1.msra.mxu0 0.0
    %1092 = vmatprep.subr.mxu0 0.0
    %1093 = vmatpush1.msra.mxu0 0.0
    %1094 = vmatprep.subr.mxu0 0.0
    %1095 = vmatpush1.msra.mxu0 0.0
    %1096 = vmatprep.subr.mxu0 0.0
    %1097 = vmatpush1.msra.mxu0 0.0
    %1098 = vmatprep.subr.mxu0 0.0
    %1099 = vmatpush1.msra.mxu0 0.0
    %1100 = vmatprep.subr.mxu0 0.0
    %1101 = vmatpush1.msra.mxu0 0.0
    %1102 = vmatprep.subr.mxu0 0.0
    %1103 = vmatpush1.msra.mxu0 0.0
    %1104 = vmatprep.subr.mxu0 0.0
    %1105 = vmatpush1.msra.mxu0 0.0
    %1106 = vmatprep.subr.mxu0 0.0
    %1107 = vmatpush1.msra.mxu0 0.0
    %1108 = vmatprep.mubr.f32.mxu0 0.0
    %1109 = vmatmul.mubr.f32.gmra.mrb[0].mxu0 %v807
    %v1110 = vpop.f32.mrb[0].mxu0
    %v1111 = vadd.f32 %v1042, %v1110
    %v1112 = vpop.f32.mrb[0].mxu0
    %1113 = vmatprep.mubr.f32.mxu0 0.0
    %1114 = vmatmul.mubr.f32.gmra.mrb[0].mxu0 %v810
    %v1115 = vpop.f32.mrb[0].mxu0
    %v1116 = vadd.f32 %v1042, %v1115
    %v1117 = vpop.f32.mrb[0].mxu0
    %1118 = vmatprep.mubr.f32.mxu0 0.0
    %1119 = vmatmul.mubr.f32.gmra.mrb[0].mxu0 %v813
    %v1120 = vpop.f32.mrb[0].mxu0
    %v1121 = vadd.f32 %v1042, %v1120
    %v1122 = vpop.f32.mrb[0].mxu0
    %1123 = vmatprep.mubr.f32.mxu0 0.0
    %1124 = vmatmul.mubr.f32.gmra.mrb[0].mxu0 %v816
    %v1125 = vpop.f32.mrb[0].mxu0
    %v1126 = vadd.f32 %v1042, %v1125
    %v1127 = vpop.f32.mrb[0].mxu0
    %1128 = vdwg.mxu0
    %s1129 = scalar_lea.vmem [#allocation13], 32
    %v1130 = vld [vmem:[%s1129] sm:$0xff]
    %v1131 = vld [vmem:[%s1129 + $0x8] sm:$0xff]
    %v1132 = vld [vmem:[%s1129 + $0x10] sm:$0xff]
    %v1133 = vld [vmem:[%s1129 + $0x18] sm:$0xff]
    %1134 = vmatprep.subr.mxu0 0.0
    %1135 = vmatpush1.msra.mxu0 %v1130
    %1136 = vmatprep.subr.mxu0 0.0
    %1137 = vmatpush1.msra.mxu0 %v1131
    %1138 = vmatprep.subr.mxu0 0.0
    %1139 = vmatpush1.msra.mxu0 %v1132
    %1140 = vmatprep.subr.mxu0 0.0
    %1141 = vmatpush1.msra.mxu0 %v1133
    %1142 = vmatprep.subr.mxu0 0.0
    %1143 = vmatpush1.msra.mxu0 0.0
    %1144 = vmatprep.subr.mxu0 0.0
    %1145 = vmatpush1.msra.mxu0 0.0
    %1146 = vmatprep.subr.mxu0 0.0
    %1147 = vmatpush1.msra.mxu0 0.0
    %1148 = vmatprep.subr.mxu0 0.0
    %1149 = vmatpush1.msra.mxu0 0.0
    %1150 = vmatprep.subr.mxu0 0.0
    %1151 = vmatpush1.msra.mxu0 0.0
    %1152 = vmatprep.subr.mxu0 0.0
    %1153 = vmatpush1.msra.mxu0 0.0
    %1154 = vmatprep.subr.mxu0 0.0
    %1155 = vmatpush1.msra.mxu0 0.0
    %1156 = vmatprep.subr.mxu0 0.0
    %1157 = vmatpush1.msra.mxu0 0.0
    %1158 = vmatprep.subr.mxu0 0.0
    %1159 = vmatpush1.msra.mxu0 0.0
    %1160 = vmatprep.subr.mxu0 0.0
    %1161 = vmatpush1.msra.mxu0 0.0
    %1162 = vmatprep.subr.mxu0 0.0
    %1163 = vmatpush1.msra.mxu0 0.0
    %1164 = vmatprep.subr.mxu0 0.0
    %1165 = vmatpush1.msra.mxu0 0.0
    %1166 = vmatprep.subr.mxu0 0.0
    %1167 = vmatpush1.msra.mxu0 0.0
    %1168 = vmatprep.subr.mxu0 0.0
    %1169 = vmatpush1.msra.mxu0 0.0
    %1170 = vmatprep.subr.mxu0 0.0
    %1171 = vmatpush1.msra.mxu0 0.0
    %1172 = vmatprep.subr.mxu0 0.0
    %1173 = vmatpush1.msra.mxu0 0.0
    %1174 = vmatprep.subr.mxu0 0.0
    %1175 = vmatpush1.msra.mxu0 0.0
    %1176 = vmatprep.subr.mxu0 0.0
    %1177 = vmatpush1.msra.mxu0 0.0
    %1178 = vmatprep.subr.mxu0 0.0
    %1179 = vmatpush1.msra.mxu0 0.0
    %1180 = vmatprep.subr.mxu0 0.0
    %1181 = vmatpush1.msra.mxu0 0.0
    %1182 = vmatprep.subr.mxu0 0.0
    %1183 = vmatpush1.msra.mxu0 0.0
    %1184 = vmatprep.subr.mxu0 0.0
    %1185 = vmatpush1.msra.mxu0 0.0
    %1186 = vmatprep.subr.mxu0 0.0
    %1187 = vmatpush1.msra.mxu0 0.0
    %1188 = vmatprep.subr.mxu0 0.0
    %1189 = vmatpush1.msra.mxu0 0.0
    %1190 = vmatprep.subr.mxu0 0.0
    %1191 = vmatpush1.msra.mxu0 0.0
    %1192 = vmatprep.subr.mxu0 0.0
    %1193 = vmatpush1.msra.mxu0 0.0
    %1194 = vmatprep.subr.mxu0 0.0
    %1195 = vmatpush1.msra.mxu0 0.0
    %1196 = vmatprep.subr.mxu0 0.0
    %1197 = vmatpush1.msra.mxu0 0.0
    %1198 = vmatprep.mubr.f32.mxu0 0.0
    %1199 = vmatmul.mubr.f32.gmra.mrb[0].mxu0 %v276
    %v1200 = vpop.f32.mrb[0].mxu0
    %v1201 = vadd.f32 0.0, %v1200
    %v1202 = vpop.f32.mrb[0].mxu0
    %1203 = vmatprep.mubr.f32.mxu0 0.0
    %1204 = vmatmul.mubr.f32.gmra.mrb[0].mxu0 %v279
    %v1205 = vpop.f32.mrb[0].mxu0
    %v1206 = vadd.f32 0.0, %v1205
    %v1207 = vpop.f32.mrb[0].mxu0
    %1208 = vmatprep.mubr.f32.mxu0 0.0
    %1209 = vmatmul.mubr.f32.gmra.mrb[0].mxu0 %v282
    %v1210 = vpop.f32.mrb[0].mxu0
    %v1211 = vadd.f32 0.0, %v1210
    %v1212 = vpop.f32.mrb[0].mxu0
    %1213 = vmatprep.mubr.f32.mxu0 0.0
    %1214 = vmatmul.mubr.f32.gmra.mrb[0].mxu0 %v285
    %v1215 = vpop.f32.mrb[0].mxu0
    %v1216 = vadd.f32 0.0, %v1215
    %v1217 = vpop.f32.mrb[0].mxu0
    %1218 = vdwg.mxu0
    %v1219 = vadd.f32 %v1111, %v1201
    %v1220 = vadd.f32 %v1116, %v1206
    %v1221 = vadd.f32 %v1121, %v1211
    %v1222 = vadd.f32 %v1126, %v1216
    %s1223 = scalar_lea.vmem [#allocation15], 1
    %v1224 = vld [vmem:[%s1223] sm:$0x1]
    %v1226 = vlaneseq
    %v1227 = vshrl.u32 %v1226, 7
    %v1228 = vsub.s32 0, %v1227
    %v1229 = vrot.slane %v1224, %v1228
    %v1231 = vadd.f32 %v1219, %v1229
    %v1232 = vadd.f32 %v1220, %v1229
    %v1233 = vadd.f32 %v1221, %v1229
    %v1234 = vadd.f32 %v1222, %v1229
    %v1235 = vxor.u32 %v1231, 2147483648
    %v1236 = vxor.u32 %v1232, 2147483648
    %v1237 = vxor.u32 %v1233, 2147483648
    %v1238 = vxor.u32 %v1234, 2147483648
    %v1239 = vmul.f32 %v1235, 1.442695
    %v1240 = vpow.pop %v1239
    %v1241 = vmul.f32 %v1236, 1.442695
    %v1242 = vpow.pop %v1241
    %v1243 = vmul.f32 %v1237, 1.442695
    %v1244 = vpow.pop %v1243
    %v1245 = vmul.f32 %v1238, 1.442695
    %v1246 = vpow.pop %v1245
    %v1247 = vadd.f32 %v1240, 1.0
    %v1248 = vadd.f32 %v1242, 1.0
    %v1249 = vadd.f32 %v1244, 1.0
    %v1250 = vadd.f32 %v1246, 1.0
    %v1251 = vrcp.pop %v1247
    %v1252 = vmul.f32 1.0, %v1251
    %v1253 = vrcp.pop %v1248
    %v1254 = vmul.f32 1.0, %v1253
    %v1255 = vrcp.pop %v1249
    %v1256 = vmul.f32 1.0, %v1255
    %v1257 = vrcp.pop %v1250
    %v1258 = vmul.f32 1.0, %v1257
    %s1259 = scalar_lea.vmem [#allocation12], 64
    %v1260 = vld [vmem:[%s1259] sm:$0xff]
    %v1261 = vld [vmem:[%s1259 + $0x8] sm:$0xff]
    %v1262 = vld [vmem:[%s1259 + $0x10] sm:$0xff]
    %v1263 = vld [vmem:[%s1259 + $0x18] sm:$0xff]
    %s1264 = scalar_lea.vmem %s5, 2
    %v1265 = vld [vmem:[%s1264] sm:$0x1]
    %v1267 = vlaneseq
    %v1268 = vshrl.u32 %v1267, 7
    %v1269 = vsub.s32 0, %v1268
    %v1270 = vrot.slane %v1265, %v1269
    %1272 = vmatprep.subr.mxu0 0.0
    %1273 = vmatpush1.msra.mxu0 %v1260
    %1274 = vmatprep.subr.mxu0 0.0
    %1275 = vmatpush1.msra.mxu0 %v1261
    %1276 = vmatprep.subr.mxu0 0.0
    %1277 = vmatpush1.msra.mxu0 %v1262
    %1278 = vmatprep.subr.mxu0 0.0
    %1279 = vmatpush1.msra.mxu0 %v1263
    %1280 = vmatprep.subr.mxu0 0.0
    %1281 = vmatpush1.msra.mxu0 0.0
    %1282 = vmatprep.subr.mxu0 0.0
    %1283 = vmatpush1.msra.mxu0 0.0
    %1284 = vmatprep.subr.mxu0 0.0
    %1285 = vmatpush1.msra.mxu0 0.0
    %1286 = vmatprep.subr.mxu0 0.0
    %1287 = vmatpush1.msra.mxu0 0.0
    %1288 = vmatprep.subr.mxu0 0.0
    %1289 = vmatpush1.msra.mxu0 0.0
    %1290 = vmatprep.subr.mxu0 0.0
    %1291 = vmatpush1.msra.mxu0 0.0
    %1292 = vmatprep.subr.mxu0 0.0
    %1293 = vmatpush1.msra.mxu0 0.0
    %1294 = vmatprep.subr.mxu0 0.0
    %1295 = vmatpush1.msra.mxu0 0.0
    %1296 = vmatprep.subr.mxu0 0.0
    %1297 = vmatpush1.msra.mxu0 0.0
    %1298 = vmatprep.subr.mxu0 0.0
    %1299 = vmatpush1.msra.mxu0 0.0
    %1300 = vmatprep.subr.mxu0 0.0
    %1301 = vmatpush1.msra.mxu0 0.0
    %1302 = vmatprep.subr.mxu0 0.0
    %1303 = vmatpush1.msra.mxu0 0.0
    %1304 = vmatprep.subr.mxu0 0.0
    %1305 = vmatpush1.msra.mxu0 0.0
    %1306 = vmatprep.subr.mxu0 0.0
    %1307 = vmatpush1.msra.mxu0 0.0
    %1308 = vmatprep.subr.mxu0 0.0
    %1309 = vmatpush1.msra.mxu0 0.0
    %1310 = vmatprep.subr.mxu0 0.0
    %1311 = vmatpush1.msra.mxu0 0.0
    %1312 = vmatprep.subr.mxu0 0.0
    %1313 = vmatpush1.msra.mxu0 0.0
    %1314 = vmatprep.subr.mxu0 0.0
    %1315 = vmatpush1.msra.mxu0 0.0
    %1316 = vmatprep.subr.mxu0 0.0
    %1317 = vmatpush1.msra.mxu0 0.0
    %1318 = vmatprep.subr.mxu0 0.0
    %1319 = vmatpush1.msra.mxu0 0.0
    %1320 = vmatprep.subr.mxu0 0.0
    %1321 = vmatpush1.msra.mxu0 0.0
    %1322 = vmatprep.subr.mxu0 0.0
    %1323 = vmatpush1.msra.mxu0 0.0
    %1324 = vmatprep.subr.mxu0 0.0
    %1325 = vmatpush1.msra.mxu0 0.0
    %1326 = vmatprep.subr.mxu0 0.0
    %1327 = vmatpush1.msra.mxu0 0.0
    %1328 = vmatprep.subr.mxu0 0.0
    %1329 = vmatpush1.msra.mxu0 0.0
    %1330 = vmatprep.subr.mxu0 0.0
    %1331 = vmatpush1.msra.mxu0 0.0
    %1332 = vmatprep.subr.mxu0 0.0
    %1333 = vmatpush1.msra.mxu0 0.0
    %1334 = vmatprep.subr.mxu0 0.0
    %1335 = vmatpush1.msra.mxu0 0.0
    %1336 = vmatprep.mubr.f32.mxu0 0.0
    %1337 = vmatmul.mubr.f32.gmra.mrb[0].mxu0 %v807
    %v1338 = vpop.f32.mrb[0].mxu0
    %v1339 = vadd.f32 %v1270, %v1338
    %v1340 = vpop.f32.mrb[0].mxu0
    %1341 = vmatprep.mubr.f32.mxu0 0.0
    %1342 = vmatmul.mubr.f32.gmra.mrb[0].mxu0 %v810
    %v1343 = vpop.f32.mrb[0].mxu0
    %v1344 = vadd.f32 %v1270, %v1343
    %v1345 = vpop.f32.mrb[0].mxu0
    %1346 = vmatprep.mubr.f32.mxu0 0.0
    %1347 = vmatmul.mubr.f32.gmra.mrb[0].mxu0 %v813
    %v1348 = vpop.f32.mrb[0].mxu0
    %v1349 = vadd.f32 %v1270, %v1348
    %v1350 = vpop.f32.mrb[0].mxu0
    %1351 = vmatprep.mubr.f32.mxu0 0.0
    %1352 = vmatmul.mubr.f32.gmra.mrb[0].mxu0 %v816
    %v1353 = vpop.f32.mrb[0].mxu0
    %v1354 = vadd.f32 %v1270, %v1353
    %v1355 = vpop.f32.mrb[0].mxu0
    %1356 = vdwg.mxu0
    %s1357 = scalar_lea.vmem [#allocation13], 64
    %v1358 = vld [vmem:[%s1357] sm:$0xff]
    %v1359 = vld [vmem:[%s1357 + $0x8] sm:$0xff]
    %v1360 = vld [vmem:[%s1357 + $0x10] sm:$0xff]
    %v1361 = vld [vmem:[%s1357 + $0x18] sm:$0xff]
    %s1362 = scalar_lea.vmem [#allocation15], 2
    %v1363 = vld [vmem:[%s1362] sm:$0x1]
    %v1365 = vlaneseq
    %v1366 = vshrl.u32 %v1365, 7
    %v1367 = vsub.s32 0, %v1366
    %v1368 = vrot.slane %v1363, %v1367
    %1370 = vmatprep.subr.mxu0 0.0
    %1371 = vmatpush1.msra.mxu0 %v1358
    %1372 = vmatprep.subr.mxu0 0.0
    %1373 = vmatpush1.msra.mxu0 %v1359
    %1374 = vmatprep.subr.mxu0 0.0
    %1375 = vmatpush1.msra.mxu0 %v1360
    %1376 = vmatprep.subr.mxu0 0.0
    %1377 = vmatpush1.msra.mxu0 %v1361
    %1378 = vmatprep.subr.mxu0 0.0
    %1379 = vmatpush1.msra.mxu0 0.0
    %1380 = vmatprep.subr.mxu0 0.0
    %1381 = vmatpush1.msra.mxu0 0.0
    %1382 = vmatprep.subr.mxu0 0.0
    %1383 = vmatpush1.msra.mxu0 0.0
    %1384 = vmatprep.subr.mxu0 0.0
    %1385 = vmatpush1.msra.mxu0 0.0
    %1386 = vmatprep.subr.mxu0 0.0
    %1387 = vmatpush1.msra.mxu0 0.0
    %1388 = vmatprep.subr.mxu0 0.0
    %1389 = vmatpush1.msra.mxu0 0.0
    %1390 = vmatprep.subr.mxu0 0.0
    %1391 = vmatpush1.msra.mxu0 0.0
    %1392 = vmatprep.subr.mxu0 0.0
    %1393 = vmatpush1.msra.mxu0 0.0
    %1394 = vmatprep.subr.mxu0 0.0
    %1395 = vmatpush1.msra.mxu0 0.0
    %1396 = vmatprep.subr.mxu0 0.0
    %1397 = vmatpush1.msra.mxu0 0.0
    %1398 = vmatprep.subr.mxu0 0.0
    %1399 = vmatpush1.msra.mxu0 0.0
    %1400 = vmatprep.subr.mxu0 0.0
    %1401 = vmatpush1.msra.mxu0 0.0
    %1402 = vmatprep.subr.mxu0 0.0
    %1403 = vmatpush1.msra.mxu0 0.0
    %1404 = vmatprep.subr.mxu0 0.0
    %1405 = vmatpush1.msra.mxu0 0.0
    %1406 = vmatprep.subr.mxu0 0.0
    %1407 = vmatpush1.msra.mxu0 0.0
    %1408 = vmatprep.subr.mxu0 0.0
    %1409 = vmatpush1.msra.mxu0 0.0
    %1410 = vmatprep.subr.mxu0 0.0
    %1411 = vmatpush1.msra.mxu0 0.0
    %1412 = vmatprep.subr.mxu0 0.0
    %1413 = vmatpush1.msra.mxu0 0.0
    %1414 = vmatprep.subr.mxu0 0.0
    %1415 = vmatpush1.msra.mxu0 0.0
    %1416 = vmatprep.subr.mxu0 0.0
    %1417 = vmatpush1.msra.mxu0 0.0
    %1418 = vmatprep.subr.mxu0 0.0
    %1419 = vmatpush1.msra.mxu0 0.0
    %1420 = vmatprep.subr.mxu0 0.0
    %1421 = vmatpush1.msra.mxu0 0.0
    %1422 = vmatprep.subr.mxu0 0.0
    %1423 = vmatpush1.msra.mxu0 0.0
    %1424 = vmatprep.subr.mxu0 0.0
    %1425 = vmatpush1.msra.mxu0 0.0
    %1426 = vmatprep.subr.mxu0 0.0
    %1427 = vmatpush1.msra.mxu0 0.0
    %1428 = vmatprep.subr.mxu0 0.0
    %1429 = vmatpush1.msra.mxu0 0.0
    %1430 = vmatprep.subr.mxu0 0.0
    %1431 = vmatpush1.msra.mxu0 0.0
    %1432 = vmatprep.subr.mxu0 0.0
    %1433 = vmatpush1.msra.mxu0 0.0
    %1434 = vmatprep.mubr.f32.mxu0 0.0
    %1435 = vmatmul.mubr.f32.gmra.mrb[0].mxu0 %v276
    %v1436 = vpop.f32.mrb[0].mxu0
    %v1437 = vadd.f32 %v1368, %v1436
    %v1438 = vpop.f32.mrb[0].mxu0
    %1439 = vmatprep.mubr.f32.mxu0 0.0
    %1440 = vmatmul.mubr.f32.gmra.mrb[0].mxu0 %v279
    %v1441 = vpop.f32.mrb[0].mxu0
    %v1442 = vadd.f32 %v1368, %v1441
    %v1443 = vpop.f32.mrb[0].mxu0
    %1444 = vmatprep.mubr.f32.mxu0 0.0
    %1445 = vmatmul.mubr.f32.gmra.mrb[0].mxu0 %v282
    %v1446 = vpop.f32.mrb[0].mxu0
    %v1447 = vadd.f32 %v1368, %v1446
    %v1448 = vpop.f32.mrb[0].mxu0
    %1449 = vmatprep.mubr.f32.mxu0 0.0
    %1450 = vmatmul.mubr.f32.gmra.mrb[0].mxu0 %v285
    %v1451 = vpop.f32.mrb[0].mxu0
    %v1452 = vadd.f32 %v1368, %v1451
    %v1453 = vpop.f32.mrb[0].mxu0
    %1454 = vdwg.mxu0
    %v1455 = vmul.f32 %v1024, %v1437
    %v1456 = vmul.f32 %v1026, %v1442
    %v1457 = vmul.f32 %v1028, %v1447
    %v1458 = vmul.f32 %v1030, %v1452
    %v1459 = vadd.f32 %v1339, %v1455
    %v1460 = vadd.f32 %v1344, %v1456
    %v1461 = vadd.f32 %v1349, %v1457
    %v1462 = vadd.f32 %v1354, %v1458
    %v1463 = vtanh.pop %v1459
    %v1464 = vtanh.pop %v1460
    %v1465 = vtanh.pop %v1461
    %v1466 = vtanh.pop %v1462
    %v1467 = vsub.f32 1.0, %v1252
    %v1468 = vsub.f32 1.0, %v1254
    %v1469 = vsub.f32 1.0, %v1256
    %v1470 = vsub.f32 1.0, %v1258
    %v1471 = vmul.f32 %v1467, %v1463
    %v1472 = vmul.f32 %v1468, %v1464
    %v1473 = vmul.f32 %v1469, %v1465
    %v1474 = vmul.f32 %v1470, %v1466
    %v1475 = vmul.f32 %v1252, %v251
    %v1476 = vmul.f32 %v1254, %v252
    %v1477 = vmul.f32 %v1256, %v253
    %v1478 = vmul.f32 %v1258, %v254
    %v1479 = vadd.f32 %v1471, %v1475
    %v1480 = vadd.f32 %v1472, %v1476
    %v1481 = vadd.f32 %v1473, %v1477
    %v1482 = vadd.f32 %v1474, %v1478
    %v1484 = vsel %vm274, %v1479, 0
    %v1487 = vsel %vm274, %v1480, 0
    %v1490 = vsel %vm274, %v1481, 0
    %v1493 = vsel %vm274, %v1482, 0
    %1495 = vmatprep.subr.mxu0 0.0
    %1496 = vmatpush1.msra.mxu0 %v263
    %1497 = vmatprep.subr.mxu0 0.0
    %1498 = vmatpush1.msra.mxu0 %v264
    %1499 = vmatprep.subr.mxu0 0.0
    %1500 = vmatpush1.msra.mxu0 %v265
    %1501 = vmatprep.subr.mxu0 0.0
    %1502 = vmatpush1.msra.mxu0 %v266
    %1503 = vmatprep.subr.mxu0 0.0
    %1504 = vmatpush1.msra.mxu0 0.0
    %1505 = vmatprep.subr.mxu0 0.0
    %1506 = vmatpush1.msra.mxu0 0.0
    %1507 = vmatprep.subr.mxu0 0.0
    %1508 = vmatpush1.msra.mxu0 0.0
    %1509 = vmatprep.subr.mxu0 0.0
    %1510 = vmatpush1.msra.mxu0 0.0
    %1511 = vmatprep.subr.mxu0 0.0
    %1512 = vmatpush1.msra.mxu0 0.0
    %1513 = vmatprep.subr.mxu0 0.0
    %1514 = vmatpush1.msra.mxu0 0.0
    %1515 = vmatprep.subr.mxu0 0.0
    %1516 = vmatpush1.msra.mxu0 0.0
    %1517 = vmatprep.subr.mxu0 0.0
    %1518 = vmatpush1.msra.mxu0 0.0
    %1519 = vmatprep.subr.mxu0 0.0
    %1520 = vmatpush1.msra.mxu0 0.0
    %1521 = vmatprep.subr.mxu0 0.0
    %1522 = vmatpush1.msra.mxu0 0.0
    %1523 = vmatprep.subr.mxu0 0.0
    %1524 = vmatpush1.msra.mxu0 0.0
    %1525 = vmatprep.subr.mxu0 0.0
    %1526 = vmatpush1.msra.mxu0 0.0
    %1527 = vmatprep.subr.mxu0 0.0
    %1528 = vmatpush1.msra.mxu0 0.0
    %1529 = vmatprep.subr.mxu0 0.0
    %1530 = vmatpush1.msra.mxu0 0.0
    %1531 = vmatprep.subr.mxu0 0.0
    %1532 = vmatpush1.msra.mxu0 0.0
    %1533 = vmatprep.subr.mxu0 0.0
    %1534 = vmatpush1.msra.mxu0 0.0
    %1535 = vmatprep.subr.mxu0 0.0
    %1536 = vmatpush1.msra.mxu0 0.0
    %1537 = vmatprep.subr.mxu0 0.0
    %1538 = vmatpush1.msra.mxu0 0.0
    %1539 = vmatprep.subr.mxu0 0.0
    %1540 = vmatpush1.msra.mxu0 0.0
    %1541 = vmatprep.subr.mxu0 0.0
    %1542 = vmatpush1.msra.mxu0 0.0
    %1543 = vmatprep.subr.mxu0 0.0
    %1544 = vmatpush1.msra.mxu0 0.0
    %1545 = vmatprep.subr.mxu0 0.0
    %1546 = vmatpush1.msra.mxu0 0.0
    %1547 = vmatprep.subr.mxu0 0.0
    %1548 = vmatpush1.msra.mxu0 0.0
    %1549 = vmatprep.subr.mxu0 0.0
    %1550 = vmatpush1.msra.mxu0 0.0
    %1551 = vmatprep.subr.mxu0 0.0
    %1552 = vmatpush1.msra.mxu0 0.0
    %1553 = vmatprep.subr.mxu0 0.0
    %1554 = vmatpush1.msra.mxu0 0.0
    %1555 = vmatprep.subr.mxu0 0.0
    %1556 = vmatpush1.msra.mxu0 0.0
    %1557 = vmatprep.subr.mxu0 0.0
    %1558 = vmatpush1.msra.mxu0 0.0
    %1559 = vmatprep.mubr.f32.mxu0 0.0
    %1560 = vmatmul.mubr.f32.gmra.mrb[0].mxu0 %v1484
    %v1561 = vpop.f32.mrb[0].mxu0
    %v1562 = vadd.f32 %v272, %v1561
    %v1563 = vpop.f32.mrb[0].mxu0
    %1564 = vmatprep.mubr.f32.mxu0 0.0
    %1565 = vmatmul.mubr.f32.gmra.mrb[0].mxu0 %v1487
    %v1566 = vpop.f32.mrb[0].mxu0
    %v1567 = vadd.f32 %v272, %v1566
    %v1568 = vpop.f32.mrb[0].mxu0
    %1569 = vmatprep.mubr.f32.mxu0 0.0
    %1570 = vmatmul.mubr.f32.gmra.mrb[0].mxu0 %v1490
    %v1571 = vpop.f32.mrb[0].mxu0
    %v1572 = vadd.f32 %v272, %v1571
    %v1573 = vpop.f32.mrb[0].mxu0
    %1574 = vmatprep.mubr.f32.mxu0 0.0
    %1575 = vmatmul.mubr.f32.gmra.mrb[0].mxu0 %v1493
    %v1576 = vpop.f32.mrb[0].mxu0
    %v1577 = vadd.f32 %v272, %v1576
    %v1578 = vpop.f32.mrb[0].mxu0
    %1579 = vdwg.mxu0
    %1580 = vmatprep.subr.mxu0 0.0
    %1581 = vmatpush1.msra.mxu0 %v373
    %1582 = vmatprep.subr.mxu0 0.0
    %1583 = vmatpush1.msra.mxu0 %v374
    %1584 = vmatprep.subr.mxu0 0.0
    %1585 = vmatpush1.msra.mxu0 %v375
    %1586 = vmatprep.subr.mxu0 0.0
    %1587 = vmatpush1.msra.mxu0 %v376
    %1588 = vmatprep.subr.mxu0 0.0
    %1589 = vmatpush1.msra.mxu0 0.0
    %1590 = vmatprep.subr.mxu0 0.0
    %1591 = vmatpush1.msra.mxu0 0.0
    %1592 = vmatprep.subr.mxu0 0.0
    %1593 = vmatpush1.msra.mxu0 0.0
    %1594 = vmatprep.subr.mxu0 0.0
    %1595 = vmatpush1.msra.mxu0 0.0
    %1596 = vmatprep.subr.mxu0 0.0
    %1597 = vmatpush1.msra.mxu0 0.0
    %1598 = vmatprep.subr.mxu0 0.0
    %1599 = vmatpush1.msra.mxu0 0.0
    %1600 = vmatprep.subr.mxu0 0.0
    %1601 = vmatpush1.msra.mxu0 0.0
    %1602 = vmatprep.subr.mxu0 0.0
    %1603 = vmatpush1.msra.mxu0 0.0
    %1604 = vmatprep.subr.mxu0 0.0
    %1605 = vmatpush1.msra.mxu0 0.0
    %1606 = vmatprep.subr.mxu0 0.0
    %1607 = vmatpush1.msra.mxu0 0.0
    %1608 = vmatprep.subr.mxu0 0.0
    %1609 = vmatpush1.msra.mxu0 0.0
    %1610 = vmatprep.subr.mxu0 0.0
    %1611 = vmatpush1.msra.mxu0 0.0
    %1612 = vmatprep.subr.mxu0 0.0
    %1613 = vmatpush1.msra.mxu0 0.0
    %1614 = vmatprep.subr.mxu0 0.0
    %1615 = vmatpush1.msra.mxu0 0.0
    %1616 = vmatprep.subr.mxu0 0.0
    %1617 = vmatpush1.msra.mxu0 0.0
    %1618 = vmatprep.subr.mxu0 0.0
    %1619 = vmatpush1.msra.mxu0 0.0
    %1620 = vmatprep.subr.mxu0 0.0
    %1621 = vmatpush1.msra.mxu0 0.0
    %1622 = vmatprep.subr.mxu0 0.0
    %1623 = vmatpush1.msra.mxu0 0.0
    %1624 = vmatprep.subr.mxu0 0.0
    %1625 = vmatpush1.msra.mxu0 0.0
    %1626 = vmatprep.subr.mxu0 0.0
    %1627 = vmatpush1.msra.mxu0 0.0
    %1628 = vmatprep.subr.mxu0 0.0
    %1629 = vmatpush1.msra.mxu0 0.0
    %1630 = vmatprep.subr.mxu0 0.0
    %1631 = vmatpush1.msra.mxu0 0.0
    %1632 = vmatprep.subr.mxu0 0.0
    %1633 = vmatpush1.msra.mxu0 0.0
    %1634 = vmatprep.subr.mxu0 0.0
    %1635 = vmatpush1.msra.mxu0 0.0
    %1636 = vmatprep.subr.mxu0 0.0
    %1637 = vmatpush1.msra.mxu0 0.0
    %1638 = vmatprep.subr.mxu0 0.0
    %1639 = vmatpush1.msra.mxu0 0.0
    %1640 = vmatprep.subr.mxu0 0.0
    %1641 = vmatpush1.msra.mxu0 0.0
    %1642 = vmatprep.subr.mxu0 0.0
    %1643 = vmatpush1.msra.mxu0 0.0
    %1644 = vmatprep.mubr.f32.mxu0 0.0
    %1645 = vmatmul.mubr.f32.gmra.mrb[0].mxu0 %v1484
    %v1646 = vpop.f32.mrb[0].mxu0
    %v1647 = vadd.f32 %v383, %v1646
    %v1648 = vpop.f32.mrb[0].mxu0
    %1649 = vmatprep.mubr.f32.mxu0 0.0
    %1650 = vmatmul.mubr.f32.gmra.mrb[0].mxu0 %v1487
    %v1651 = vpop.f32.mrb[0].mxu0
    %v1652 = vadd.f32 %v383, %v1651
    %v1653 = vpop.f32.mrb[0].mxu0
    %1654 = vmatprep.mubr.f32.mxu0 0.0
    %1655 = vmatmul.mubr.f32.gmra.mrb[0].mxu0 %v1490
    %v1656 = vpop.f32.mrb[0].mxu0
    %v1657 = vadd.f32 %v383, %v1656
    %v1658 = vpop.f32.mrb[0].mxu0
    %1659 = vmatprep.mubr.f32.mxu0 0.0
    %1660 = vmatmul.mubr.f32.gmra.mrb[0].mxu0 %v1493
    %v1661 = vpop.f32.mrb[0].mxu0
    %v1662 = vadd.f32 %v383, %v1661
    %v1663 = vpop.f32.mrb[0].mxu0
    %1664 = vdwg.mxu0
    %1665 = vmatprep.subr.mxu0 0.0
    %1666 = vmatpush1.msra.mxu0 %v1647
    %1667 = vmatprep.subr.mxu0 0.0
    %1668 = vmatpush1.msra.mxu0 %v1652
    %1669 = vmatprep.subr.mxu0 0.0
    %1670 = vmatpush1.msra.mxu0 0.0
    %1671 = vmatprep.subr.mxu0 0.0
    %1672 = vmatpush1.msra.mxu0 0.0
    %1673 = vmatprep.subr.mxu0 0.0
    %1674 = vmatpush1.msra.mxu0 0.0
    %1675 = vmatprep.subr.mxu0 0.0
    %1676 = vmatpush1.msra.mxu0 0.0
    %1677 = vmatprep.subr.mxu0 0.0
    %1678 = vmatpush1.msra.mxu0 0.0
    %1679 = vmatprep.subr.mxu0 0.0
    %1680 = vmatpush1.msra.mxu0 0.0
    %1681 = vmatprep.subr.mxu0 0.0
    %1682 = vmatpush1.msra.mxu0 0.0
    %1683 = vmatprep.subr.mxu0 0.0
    %1684 = vmatpush1.msra.mxu0 0.0
    %1685 = vmatprep.subr.mxu0 0.0
    %1686 = vmatpush1.msra.mxu0 0.0
    %1687 = vmatprep.subr.mxu0 0.0
    %1688 = vmatpush1.msra.mxu0 0.0
    %1689 = vmatprep.subr.mxu0 0.0
    %1690 = vmatpush1.msra.mxu0 0.0
    %1691 = vmatprep.subr.mxu0 0.0
    %1692 = vmatpush1.msra.mxu0 0.0
    %1693 = vmatprep.subr.mxu0 0.0
    %1694 = vmatpush1.msra.mxu0 0.0
    %1695 = vmatprep.subr.mxu0 0.0
    %1696 = vmatpush1.msra.mxu0 0.0
    %1697 = vmatprep.subr.mxu0 0.0
    %1698 = vmatpush1.msra.mxu0 0.0
    %1699 = vmatprep.subr.mxu0 0.0
    %1700 = vmatpush1.msra.mxu0 0.0
    %1701 = vmatprep.subr.mxu0 0.0
    %1702 = vmatpush1.msra.mxu0 0.0
    %1703 = vmatprep.subr.mxu0 0.0
    %1704 = vmatpush1.msra.mxu0 0.0
    %1705 = vmatprep.subr.mxu0 0.0
    %1706 = vmatpush1.msra.mxu0 0.0
    %1707 = vmatprep.subr.mxu0 0.0
    %1708 = vmatpush1.msra.mxu0 0.0
    %1709 = vmatprep.subr.mxu0 0.0
    %1710 = vmatpush1.msra.mxu0 0.0
    %1711 = vmatprep.subr.mxu0 0.0
    %1712 = vmatpush1.msra.mxu0 0.0
    %1713 = vmatprep.subr.mxu0 0.0
    %1714 = vmatpush1.msra.mxu0 0.0
    %1715 = vmatprep.subr.mxu0 0.0
    %1716 = vmatpush1.msra.mxu0 0.0
    %1717 = vmatprep.subr.mxu0 0.0
    %1718 = vmatpush1.msra.mxu0 0.0
    %1719 = vmatprep.subr.mxu0 0.0
    %1720 = vmatpush1.msra.mxu0 0.0
    %1721 = vmatprep.subr.mxu0 0.0
    %1722 = vmatpush1.msra.mxu0 0.0
    %1723 = vmatprep.subr.mxu0 0.0
    %1724 = vmatpush1.msra.mxu0 0.0
    %1725 = vmatprep.subr.mxu0 0.0
    %1726 = vmatpush1.msra.mxu0 0.0
    %1727 = vmatprep.subr.mxu0 0.0
    %1728 = vmatpush1.msra.mxu0 0.0
    %1729 = vmatprep.mubr.f32.mxu0 0.0
    %1730 = vmatmul.mubr.f32.gmra.mrb[0].mxu0 %v472
    %v1731 = vpop.f32.mrb[0].mxu0
    %v1732 = vadd.f32 0.0, %v1731
    %v1733 = vpop.f32.mrb[0].mxu0
    %1734 = vmatprep.mubr.f32.mxu0 0.0
    %1735 = vmatmul.mubr.f32.gmra.mrb[0].mxu0 %v475
    %v1736 = vpop.f32.mrb[0].mxu0
    %v1737 = vadd.f32 0.0, %v1736
    %v1738 = vpop.f32.mrb[0].mxu0
    %1739 = vdwg.mxu0
    %1740 = vmatprep.subr.mxu0 0.0
    %1741 = vmatpush1.msra.mxu0 %v1562
    %1742 = vmatprep.subr.mxu0 0.0
    %1743 = vmatpush1.msra.mxu0 %v1567
    %1744 = vmatprep.subr.mxu0 0.0
    %1745 = vmatpush1.msra.mxu0 0.0
    %1746 = vmatprep.subr.mxu0 0.0
    %1747 = vmatpush1.msra.mxu0 0.0
    %1748 = vmatprep.subr.mxu0 0.0
    %1749 = vmatpush1.msra.mxu0 0.0
    %1750 = vmatprep.subr.mxu0 0.0
    %1751 = vmatpush1.msra.mxu0 0.0
    %1752 = vmatprep.subr.mxu0 0.0
    %1753 = vmatpush1.msra.mxu0 0.0
    %1754 = vmatprep.subr.mxu0 0.0
    %1755 = vmatpush1.msra.mxu0 0.0
    %1756 = vmatprep.subr.mxu0 0.0
    %1757 = vmatpush1.msra.mxu0 0.0
    %1758 = vmatprep.subr.mxu0 0.0
    %1759 = vmatpush1.msra.mxu0 0.0
    %1760 = vmatprep.subr.mxu0 0.0
    %1761 = vmatpush1.msra.mxu0 0.0
    %1762 = vmatprep.subr.mxu0 0.0
    %1763 = vmatpush1.msra.mxu0 0.0
    %1764 = vmatprep.subr.mxu0 0.0
    %1765 = vmatpush1.msra.mxu0 0.0
    %1766 = vmatprep.subr.mxu0 0.0
    %1767 = vmatpush1.msra.mxu0 0.0
    %1768 = vmatprep.subr.mxu0 0.0
    %1769 = vmatpush1.msra.mxu0 0.0
    %1770 = vmatprep.subr.mxu0 0.0
    %1771 = vmatpush1.msra.mxu0 0.0
    %1772 = vmatprep.subr.mxu0 0.0
    %1773 = vmatpush1.msra.mxu0 0.0
    %1774 = vmatprep.subr.mxu0 0.0
    %1775 = vmatpush1.msra.mxu0 0.0
    %1776 = vmatprep.subr.mxu0 0.0
    %1777 = vmatpush1.msra.mxu0 0.0
    %1778 = vmatprep.subr.mxu0 0.0
    %1779 = vmatpush1.msra.mxu0 0.0
    %1780 = vmatprep.subr.mxu0 0.0
    %1781 = vmatpush1.msra.mxu0 0.0
    %1782 = vmatprep.subr.mxu0 0.0
    %1783 = vmatpush1.msra.mxu0 0.0
    %1784 = vmatprep.subr.mxu0 0.0
    %1785 = vmatpush1.msra.mxu0 0.0
    %1786 = vmatprep.subr.mxu0 0.0
    %1787 = vmatpush1.msra.mxu0 0.0
    %1788 = vmatprep.subr.mxu0 0.0
    %1789 = vmatpush1.msra.mxu0 0.0
    %1790 = vmatprep.subr.mxu0 0.0
    %1791 = vmatpush1.msra.mxu0 0.0
    %1792 = vmatprep.subr.mxu0 0.0
    %1793 = vmatpush1.msra.mxu0 0.0
    %1794 = vmatprep.subr.mxu0 0.0
    %1795 = vmatpush1.msra.mxu0 0.0
    %1796 = vmatprep.subr.mxu0 0.0
    %1797 = vmatpush1.msra.mxu0 0.0
    %1798 = vmatprep.subr.mxu0 0.0
    %1799 = vmatpush1.msra.mxu0 0.0
    %1800 = vmatprep.subr.mxu0 0.0
    %1801 = vmatpush1.msra.mxu0 0.0
    %1802 = vmatprep.subr.mxu0 0.0
    %1803 = vmatpush1.msra.mxu0 0.0
    %1804 = vmatprep.mubr.f32.mxu0 0.0
    %1805 = vmatmul.mubr.f32.gmra.mrb[0].mxu0 %v553
    %v1806 = vpop.f32.mrb[0].mxu0
    %v1807 = vadd.f32 %v1732, %v1806
    %v1808 = vpop.f32.mrb[0].mxu0
    %1809 = vmatprep.mubr.f32.mxu0 0.0
    %1810 = vmatmul.mubr.f32.gmra.mrb[0].mxu0 %v556
    %v1811 = vpop.f32.mrb[0].mxu0
    %v1812 = vadd.f32 %v1737, %v1811
    %v1813 = vpop.f32.mrb[0].mxu0
    %1814 = vdwg.mxu0
    %1815 = vmatprep.subr.mxu0 0.0
    %1816 = vmatpush1.msra.mxu0 %v1657
    %1817 = vmatprep.subr.mxu0 0.0
    %1818 = vmatpush1.msra.mxu0 %v1662
    %1819 = vmatprep.subr.mxu0 0.0
    %1820 = vmatpush1.msra.mxu0 0.0
    %1821 = vmatprep.subr.mxu0 0.0
    %1822 = vmatpush1.msra.mxu0 0.0
    %1823 = vmatprep.subr.mxu0 0.0
    %1824 = vmatpush1.msra.mxu0 0.0
    %1825 = vmatprep.subr.mxu0 0.0
    %1826 = vmatpush1.msra.mxu0 0.0
    %1827 = vmatprep.subr.mxu0 0.0
    %1828 = vmatpush1.msra.mxu0 0.0
    %1829 = vmatprep.subr.mxu0 0.0
    %1830 = vmatpush1.msra.mxu0 0.0
    %1831 = vmatprep.subr.mxu0 0.0
    %1832 = vmatpush1.msra.mxu0 0.0
    %1833 = vmatprep.subr.mxu0 0.0
    %1834 = vmatpush1.msra.mxu0 0.0
    %1835 = vmatprep.subr.mxu0 0.0
    %1836 = vmatpush1.msra.mxu0 0.0
    %1837 = vmatprep.subr.mxu0 0.0
    %1838 = vmatpush1.msra.mxu0 0.0
    %1839 = vmatprep.subr.mxu0 0.0
    %1840 = vmatpush1.msra.mxu0 0.0
    %1841 = vmatprep.subr.mxu0 0.0
    %1842 = vmatpush1.msra.mxu0 0.0
    %1843 = vmatprep.subr.mxu0 0.0
    %1844 = vmatpush1.msra.mxu0 0.0
    %1845 = vmatprep.subr.mxu0 0.0
    %1846 = vmatpush1.msra.mxu0 0.0
    %1847 = vmatprep.subr.mxu0 0.0
    %1848 = vmatpush1.msra.mxu0 0.0
    %1849 = vmatprep.subr.mxu0 0.0
    %1850 = vmatpush1.msra.mxu0 0.0
    %1851 = vmatprep.subr.mxu0 0.0
    %1852 = vmatpush1.msra.mxu0 0.0
    %1853 = vmatprep.subr.mxu0 0.0
    %1854 = vmatpush1.msra.mxu0 0.0
    %1855 = vmatprep.subr.mxu0 0.0
    %1856 = vmatpush1.msra.mxu0 0.0
    %1857 = vmatprep.subr.mxu0 0.0
    %1858 = vmatpush1.msra.mxu0 0.0
    %1859 = vmatprep.subr.mxu0 0.0
    %1860 = vmatpush1.msra.mxu0 0.0
    %1861 = vmatprep.subr.mxu0 0.0
    %1862 = vmatpush1.msra.mxu0 0.0
    %1863 = vmatprep.subr.mxu0 0.0
    %1864 = vmatpush1.msra.mxu0 0.0
    %1865 = vmatprep.subr.mxu0 0.0
    %1866 = vmatpush1.msra.mxu0 0.0
    %1867 = vmatprep.subr.mxu0 0.0
    %1868 = vmatpush1.msra.mxu0 0.0
    %1869 = vmatprep.subr.mxu0 0.0
    %1870 = vmatpush1.msra.mxu0 0.0
    %1871 = vmatprep.subr.mxu0 0.0
    %1872 = vmatpush1.msra.mxu0 0.0
    %1873 = vmatprep.subr.mxu0 0.0
    %1874 = vmatpush1.msra.mxu0 0.0
    %1875 = vmatprep.subr.mxu0 0.0
    %1876 = vmatpush1.msra.mxu0 0.0
    %1877 = vmatprep.subr.mxu0 0.0
    %1878 = vmatpush1.msra.mxu0 0.0
    %1879 = vmatprep.mubr.f32.mxu0 0.0
    %1880 = vmatmul.mubr.f32.gmra.mrb[0].mxu0 %v634
    %v1881 = vpop.f32.mrb[0].mxu0
    %v1882 = vadd.f32 0.0, %v1881
    %v1883 = vpop.f32.mrb[0].mxu0
    %1884 = vmatprep.mubr.f32.mxu0 0.0
    %1885 = vmatmul.mubr.f32.gmra.mrb[0].mxu0 %v637
    %v1886 = vpop.f32.mrb[0].mxu0
    %v1887 = vadd.f32 0.0, %v1886
    %v1888 = vpop.f32.mrb[0].mxu0
    %1889 = vdwg.mxu0
    %1890 = vmatprep.subr.mxu0 0.0
    %1891 = vmatpush1.msra.mxu0 %v1572
    %1892 = vmatprep.subr.mxu0 0.0
    %1893 = vmatpush1.msra.mxu0 %v1577
    %1894 = vmatprep.subr.mxu0 0.0
    %1895 = vmatpush1.msra.mxu0 0.0
    %1896 = vmatprep.subr.mxu0 0.0
    %1897 = vmatpush1.msra.mxu0 0.0
    %1898 = vmatprep.subr.mxu0 0.0
    %1899 = vmatpush1.msra.mxu0 0.0
    %1900 = vmatprep.subr.mxu0 0.0
    %1901 = vmatpush1.msra.mxu0 0.0
    %1902 = vmatprep.subr.mxu0 0.0
    %1903 = vmatpush1.msra.mxu0 0.0
    %1904 = vmatprep.subr.mxu0 0.0
    %1905 = vmatpush1.msra.mxu0 0.0
    %1906 = vmatprep.subr.mxu0 0.0
    %1907 = vmatpush1.msra.mxu0 0.0
    %1908 = vmatprep.subr.mxu0 0.0
    %1909 = vmatpush1.msra.mxu0 0.0
    %1910 = vmatprep.subr.mxu0 0.0
    %1911 = vmatpush1.msra.mxu0 0.0
    %1912 = vmatprep.subr.mxu0 0.0
    %1913 = vmatpush1.msra.mxu0 0.0
    %1914 = vmatprep.subr.mxu0 0.0
    %1915 = vmatpush1.msra.mxu0 0.0
    %1916 = vmatprep.subr.mxu0 0.0
    %1917 = vmatpush1.msra.mxu0 0.0
    %1918 = vmatprep.subr.mxu0 0.0
    %1919 = vmatpush1.msra.mxu0 0.0
    %1920 = vmatprep.subr.mxu0 0.0
    %1921 = vmatpush1.msra.mxu0 0.0
    %1922 = vmatprep.subr.mxu0 0.0
    %1923 = vmatpush1.msra.mxu0 0.0
    %1924 = vmatprep.subr.mxu0 0.0
    %1925 = vmatpush1.msra.mxu0 0.0
    %1926 = vmatprep.subr.mxu0 0.0
    %1927 = vmatpush1.msra.mxu0 0.0
    %1928 = vmatprep.subr.mxu0 0.0
    %1929 = vmatpush1.msra.mxu0 0.0
    %1930 = vmatprep.subr.mxu0 0.0
    %1931 = vmatpush1.msra.mxu0 0.0
    %1932 = vmatprep.subr.mxu0 0.0
    %1933 = vmatpush1.msra.mxu0 0.0
    %1934 = vmatprep.subr.mxu0 0.0
    %1935 = vmatpush1.msra.mxu0 0.0
    %1936 = vmatprep.subr.mxu0 0.0
    %1937 = vmatpush1.msra.mxu0 0.0
    %1938 = vmatprep.subr.mxu0 0.0
    %1939 = vmatpush1.msra.mxu0 0.0
    %1940 = vmatprep.subr.mxu0 0.0
    %1941 = vmatpush1.msra.mxu0 0.0
    %1942 = vmatprep.subr.mxu0 0.0
    %1943 = vmatpush1.msra.mxu0 0.0
    %1944 = vmatprep.subr.mxu0 0.0
    %1945 = vmatpush1.msra.mxu0 0.0
    %1946 = vmatprep.subr.mxu0 0.0
    %1947 = vmatpush1.msra.mxu0 0.0
    %1948 = vmatprep.subr.mxu0 0.0
    %1949 = vmatpush1.msra.mxu0 0.0
    %1950 = vmatprep.subr.mxu0 0.0
    %1951 = vmatpush1.msra.mxu0 0.0
    %1952 = vmatprep.subr.mxu0 0.0
    %1953 = vmatpush1.msra.mxu0 0.0
    %1954 = vmatprep.mubr.f32.mxu0 0.0
    %1955 = vmatmul.mubr.f32.gmra.mrb[0].mxu0 %v715
    %v1956 = vpop.f32.mrb[0].mxu0
    %v1957 = vadd.f32 %v1882, %v1956
    %v1958 = vpop.f32.mrb[0].mxu0
    %1959 = vmatprep.mubr.f32.mxu0 0.0
    %1960 = vmatmul.mubr.f32.gmra.mrb[0].mxu0 %v718
    %v1961 = vpop.f32.mrb[0].mxu0
    %v1962 = vadd.f32 %v1887, %v1961
    %v1963 = vpop.f32.mrb[0].mxu0
    %1964 = vdwg.mxu0
    %v1966 = vsel %vm274, %v1807, 0
    %v1969 = vsel %vm274, %v1812, 0
    %v1972 = vsel %vm274, %v1957, 0
    %v1975 = vsel %vm274, %v1962, 0
    %1977 = vmatprep.subr.mxu0 0.0
    %1978 = vmatpush1.msra.mxu0 %v795
    %1979 = vmatprep.subr.mxu0 0.0
    %1980 = vmatpush1.msra.mxu0 %v796
    %1981 = vmatprep.subr.mxu0 0.0
    %1982 = vmatpush1.msra.mxu0 %v797
    %1983 = vmatprep.subr.mxu0 0.0
    %1984 = vmatpush1.msra.mxu0 %v798
    %1985 = vmatprep.subr.mxu0 0.0
    %1986 = vmatpush1.msra.mxu0 0.0
    %1987 = vmatprep.subr.mxu0 0.0
    %1988 = vmatpush1.msra.mxu0 0.0
    %1989 = vmatprep.subr.mxu0 0.0
    %1990 = vmatpush1.msra.mxu0 0.0
    %1991 = vmatprep.subr.mxu0 0.0
    %1992 = vmatpush1.msra.mxu0 0.0
    %1993 = vmatprep.subr.mxu0 0.0
    %1994 = vmatpush1.msra.mxu0 0.0
    %1995 = vmatprep.subr.mxu0 0.0
    %1996 = vmatpush1.msra.mxu0 0.0
    %1997 = vmatprep.subr.mxu0 0.0
    %1998 = vmatpush1.msra.mxu0 0.0
    %1999 = vmatprep.subr.mxu0 0.0
    %2000 = vmatpush1.msra.mxu0 0.0
    %2001 = vmatprep.subr.mxu0 0.0
    %2002 = vmatpush1.msra.mxu0 0.0
    %2003 = vmatprep.subr.mxu0 0.0
    %2004 = vmatpush1.msra.mxu0 0.0
    %2005 = vmatprep.subr.mxu0 0.0
    %2006 = vmatpush1.msra.mxu0 0.0
    %2007 = vmatprep.subr.mxu0 0.0
    %2008 = vmatpush1.msra.mxu0 0.0
    %2009 = vmatprep.subr.mxu0 0.0
    %2010 = vmatpush1.msra.mxu0 0.0
    %2011 = vmatprep.subr.mxu0 0.0
    %2012 = vmatpush1.msra.mxu0 0.0
    %2013 = vmatprep.subr.mxu0 0.0
    %2014 = vmatpush1.msra.mxu0 0.0
    %2015 = vmatprep.subr.mxu0 0.0
    %2016 = vmatpush1.msra.mxu0 0.0
    %2017 = vmatprep.subr.mxu0 0.0
    %2018 = vmatpush1.msra.mxu0 0.0
    %2019 = vmatprep.subr.mxu0 0.0
    %2020 = vmatpush1.msra.mxu0 0.0
    %2021 = vmatprep.subr.mxu0 0.0
    %2022 = vmatpush1.msra.mxu0 0.0
    %2023 = vmatprep.subr.mxu0 0.0
    %2024 = vmatpush1.msra.mxu0 0.0
    %2025 = vmatprep.subr.mxu0 0.0
    %2026 = vmatpush1.msra.mxu0 0.0
    %2027 = vmatprep.subr.mxu0 0.0
    %2028 = vmatpush1.msra.mxu0 0.0
    %2029 = vmatprep.subr.mxu0 0.0
    %2030 = vmatpush1.msra.mxu0 0.0
    %2031 = vmatprep.subr.mxu0 0.0
    %2032 = vmatpush1.msra.mxu0 0.0
    %2033 = vmatprep.subr.mxu0 0.0
    %2034 = vmatpush1.msra.mxu0 0.0
    %2035 = vmatprep.subr.mxu0 0.0
    %2036 = vmatpush1.msra.mxu0 0.0
    %2037 = vmatprep.subr.mxu0 0.0
    %2038 = vmatpush1.msra.mxu0 0.0
    %2039 = vmatprep.subr.mxu0 0.0
    %2040 = vmatpush1.msra.mxu0 0.0
    %2041 = vmatprep.mubr.f32.mxu0 0.0
    %2042 = vmatmul.mubr.f32.gmra.mrb[0].mxu0 %v1966
    %v2043 = vpop.f32.mrb[0].mxu0
    %v2044 = vadd.f32 %v804, %v2043
    %v2045 = vpop.f32.mrb[0].mxu0
    %2046 = vmatprep.mubr.f32.mxu0 0.0
    %2047 = vmatmul.mubr.f32.gmra.mrb[0].mxu0 %v1969
    %v2048 = vpop.f32.mrb[0].mxu0
    %v2049 = vadd.f32 %v804, %v2048
    %v2050 = vpop.f32.mrb[0].mxu0
    %2051 = vmatprep.mubr.f32.mxu0 0.0
    %2052 = vmatmul.mubr.f32.gmra.mrb[0].mxu0 %v1972
    %v2053 = vpop.f32.mrb[0].mxu0
    %v2054 = vadd.f32 %v804, %v2053
    %v2055 = vpop.f32.mrb[0].mxu0
    %2056 = vmatprep.mubr.f32.mxu0 0.0
    %2057 = vmatmul.mubr.f32.gmra.mrb[0].mxu0 %v1975
    %v2058 = vpop.f32.mrb[0].mxu0
    %v2059 = vadd.f32 %v804, %v2058
    %v2060 = vpop.f32.mrb[0].mxu0
    %2061 = vdwg.mxu0
    %2062 = vmatprep.subr.mxu0 0.0
    %2063 = vmatpush1.msra.mxu0 %v903
    %2064 = vmatprep.subr.mxu0 0.0
    %2065 = vmatpush1.msra.mxu0 %v904
    %2066 = vmatprep.subr.mxu0 0.0
    %2067 = vmatpush1.msra.mxu0 %v905
    %2068 = vmatprep.subr.mxu0 0.0
    %2069 = vmatpush1.msra.mxu0 %v906
    %2070 = vmatprep.subr.mxu0 0.0
    %2071 = vmatpush1.msra.mxu0 0.0
    %2072 = vmatprep.subr.mxu0 0.0
    %2073 = vmatpush1.msra.mxu0 0.0
    %2074 = vmatprep.subr.mxu0 0.0
    %2075 = vmatpush1.msra.mxu0 0.0
    %2076 = vmatprep.subr.mxu0 0.0
    %2077 = vmatpush1.msra.mxu0 0.0
    %2078 = vmatprep.subr.mxu0 0.0
    %2079 = vmatpush1.msra.mxu0 0.0
    %2080 = vmatprep.subr.mxu0 0.0
    %2081 = vmatpush1.msra.mxu0 0.0
    %2082 = vmatprep.subr.mxu0 0.0
    %2083 = vmatpush1.msra.mxu0 0.0
    %2084 = vmatprep.subr.mxu0 0.0
    %2085 = vmatpush1.msra.mxu0 0.0
    %2086 = vmatprep.subr.mxu0 0.0
    %2087 = vmatpush1.msra.mxu0 0.0
    %2088 = vmatprep.subr.mxu0 0.0
    %2089 = vmatpush1.msra.mxu0 0.0
    %2090 = vmatprep.subr.mxu0 0.0
    %2091 = vmatpush1.msra.mxu0 0.0
    %2092 = vmatprep.subr.mxu0 0.0
    %2093 = vmatpush1.msra.mxu0 0.0
    %2094 = vmatprep.subr.mxu0 0.0
    %2095 = vmatpush1.msra.mxu0 0.0
    %2096 = vmatprep.subr.mxu0 0.0
    %2097 = vmatpush1.msra.mxu0 0.0
    %2098 = vmatprep.subr.mxu0 0.0
    %2099 = vmatpush1.msra.mxu0 0.0
    %2100 = vmatprep.subr.mxu0 0.0
    %2101 = vmatpush1.msra.mxu0 0.0
    %2102 = vmatprep.subr.mxu0 0.0
    %2103 = vmatpush1.msra.mxu0 0.0
    %2104 = vmatprep.subr.mxu0 0.0
    %2105 = vmatpush1.msra.mxu0 0.0
    %2106 = vmatprep.subr.mxu0 0.0
    %2107 = vmatpush1.msra.mxu0 0.0
    %2108 = vmatprep.subr.mxu0 0.0
    %2109 = vmatpush1.msra.mxu0 0.0
    %2110 = vmatprep.subr.mxu0 0.0
    %2111 = vmatpush1.msra.mxu0 0.0
    %2112 = vmatprep.subr.mxu0 0.0
    %2113 = vmatpush1.msra.mxu0 0.0
    %2114 = vmatprep.subr.mxu0 0.0
    %2115 = vmatpush1.msra.mxu0 0.0
    %2116 = vmatprep.subr.mxu0 0.0
    %2117 = vmatpush1.msra.mxu0 0.0
    %2118 = vmatprep.subr.mxu0 0.0
    %2119 = vmatpush1.msra.mxu0 0.0
    %2120 = vmatprep.subr.mxu0 0.0
    %2121 = vmatpush1.msra.mxu0 0.0
    %2122 = vmatprep.subr.mxu0 0.0
    %2123 = vmatpush1.msra.mxu0 0.0
    %2124 = vmatprep.subr.mxu0 0.0
    %2125 = vmatpush1.msra.mxu0 0.0
    %2126 = vmatprep.mubr.f32.mxu0 0.0
    %2127 = vmatmul.mubr.f32.gmra.mrb[0].mxu0 %v1484
    %v2128 = vpop.f32.mrb[0].mxu0
    %v2129 = vadd.f32 0.0, %v2128
    %v2130 = vpop.f32.mrb[0].mxu0
    %2131 = vmatprep.mubr.f32.mxu0 0.0
    %2132 = vmatmul.mubr.f32.gmra.mrb[0].mxu0 %v1487
    %v2133 = vpop.f32.mrb[0].mxu0
    %v2134 = vadd.f32 0.0, %v2133
    %v2135 = vpop.f32.mrb[0].mxu0
    %2136 = vmatprep.mubr.f32.mxu0 0.0
    %2137 = vmatmul.mubr.f32.gmra.mrb[0].mxu0 %v1490
    %v2138 = vpop.f32.mrb[0].mxu0
    %v2139 = vadd.f32 0.0, %v2138
    %v2140 = vpop.f32.mrb[0].mxu0
    %2141 = vmatprep.mubr.f32.mxu0 0.0
    %2142 = vmatmul.mubr.f32.gmra.mrb[0].mxu0 %v1493
    %v2143 = vpop.f32.mrb[0].mxu0
    %v2144 = vadd.f32 0.0, %v2143
    %v2145 = vpop.f32.mrb[0].mxu0
    %2146 = vdwg.mxu0
    %v2147 = vadd.f32 %v2044, %v2129
    %v2148 = vadd.f32 %v2049, %v2134
    %v2149 = vadd.f32 %v2054, %v2139
    %v2150 = vadd.f32 %v2059, %v2144
    %v2151 = vadd.f32 %v2147, %v1001
    %v2152 = vadd.f32 %v2148, %v1001
    %v2153 = vadd.f32 %v2149, %v1001
    %v2154 = vadd.f32 %v2150, %v1001
    %v2155 = vxor.u32 %v2151, 2147483648
    %v2156 = vxor.u32 %v2152, 2147483648
    %v2157 = vxor.u32 %v2153, 2147483648
    %v2158 = vxor.u32 %v2154, 2147483648
    %v2159 = vmul.f32 %v2155, 1.442695
    %v2160 = vpow.pop %v2159
    %v2161 = vmul.f32 %v2156, 1.442695
    %v2162 = vpow.pop %v2161
    %v2163 = vmul.f32 %v2157, 1.442695
    %v2164 = vpow.pop %v2163
    %v2165 = vmul.f32 %v2158, 1.442695
    %v2166 = vpow.pop %v2165
    %v2167 = vadd.f32 %v2160, 1.0
    %v2168 = vadd.f32 %v2162, 1.0
    %v2169 = vadd.f32 %v2164, 1.0
    %v2170 = vadd.f32 %v2166, 1.0
    %v2171 = vrcp.pop %v2167
    %v2172 = vmul.f32 1.0, %v2171
    %v2173 = vrcp.pop %v2168
    %v2174 = vmul.f32 1.0, %v2173
    %v2175 = vrcp.pop %v2169
    %v2176 = vmul.f32 1.0, %v2175
    %v2177 = vrcp.pop %v2170
    %v2178 = vmul.f32 1.0, %v2177
    %2179 = vmatprep.subr.mxu0 0.0
    %2180 = vmatpush1.msra.mxu0 %v1032
    %2181 = vmatprep.subr.mxu0 0.0
    %2182 = vmatpush1.msra.mxu0 %v1033
    %2183 = vmatprep.subr.mxu0 0.0
    %2184 = vmatpush1.msra.mxu0 %v1034
    %2185 = vmatprep.subr.mxu0 0.0
    %2186 = vmatpush1.msra.mxu0 %v1035
    %2187 = vmatprep.subr.mxu0 0.0
    %2188 = vmatpush1.msra.mxu0 0.0
    %2189 = vmatprep.subr.mxu0 0.0
    %2190 = vmatpush1.msra.mxu0 0.0
    %2191 = vmatprep.subr.mxu0 0.0
    %2192 = vmatpush1.msra.mxu0 0.0
    %2193 = vmatprep.subr.mxu0 0.0
    %2194 = vmatpush1.msra.mxu0 0.0
    %2195 = vmatprep.subr.mxu0 0.0
    %2196 = vmatpush1.msra.mxu0 0.0
    %2197 = vmatprep.subr.mxu0 0.0
    %2198 = vmatpush1.msra.mxu0 0.0
    %2199 = vmatprep.subr.mxu0 0.0
    %2200 = vmatpush1.msra.mxu0 0.0
    %2201 = vmatprep.subr.mxu0 0.0
    %2202 = vmatpush1.msra.mxu0 0.0
    %2203 = vmatprep.subr.mxu0 0.0
    %2204 = vmatpush1.msra.mxu0 0.0
    %2205 = vmatprep.subr.mxu0 0.0
    %2206 = vmatpush1.msra.mxu0 0.0
    %2207 = vmatprep.subr.mxu0 0.0
    %2208 = vmatpush1.msra.mxu0 0.0
    %2209 = vmatprep.subr.mxu0 0.0
    %2210 = vmatpush1.msra.mxu0 0.0
    %2211 = vmatprep.subr.mxu0 0.0
    %2212 = vmatpush1.msra.mxu0 0.0
    %2213 = vmatprep.subr.mxu0 0.0
    %2214 = vmatpush1.msra.mxu0 0.0
    %2215 = vmatprep.subr.mxu0 0.0
    %2216 = vmatpush1.msra.mxu0 0.0
    %2217 = vmatprep.subr.mxu0 0.0
    %2218 = vmatpush1.msra.mxu0 0.0
    %2219 = vmatprep.subr.mxu0 0.0
    %2220 = vmatpush1.msra.mxu0 0.0
    %2221 = vmatprep.subr.mxu0 0.0
    %2222 = vmatpush1.msra.mxu0 0.0
    %2223 = vmatprep.subr.mxu0 0.0
    %2224 = vmatpush1.msra.mxu0 0.0
    %2225 = vmatprep.subr.mxu0 0.0
    %2226 = vmatpush1.msra.mxu0 0.0
    %2227 = vmatprep.subr.mxu0 0.0
    %2228 = vmatpush1.msra.mxu0 0.0
    %2229 = vmatprep.subr.mxu0 0.0
    %2230 = vmatpush1.msra.mxu0 0.0
    %2231 = vmatprep.subr.mxu0 0.0
    %2232 = vmatpush1.msra.mxu0 0.0
    %2233 = vmatprep.subr.mxu0 0.0
    %2234 = vmatpush1.msra.mxu0 0.0
    %2235 = vmatprep.subr.mxu0 0.0
    %2236 = vmatpush1.msra.mxu0 0.0
    %2237 = vmatprep.subr.mxu0 0.0
    %2238 = vmatpush1.msra.mxu0 0.0
    %2239 = vmatprep.subr.mxu0 0.0
    %2240 = vmatpush1.msra.mxu0 0.0
    %2241 = vmatprep.subr.mxu0 0.0
    %2242 = vmatpush1.msra.mxu0 0.0
    %2243 = vmatprep.mubr.f32.mxu0 0.0
    %2244 = vmatmul.mubr.f32.gmra.mrb[0].mxu0 %v1966
    %v2245 = vpop.f32.mrb[0].mxu0
    %v2246 = vadd.f32 %v1042, %v2245
    %v2247 = vpop.f32.mrb[0].mxu0
    %2248 = vmatprep.mubr.f32.mxu0 0.0
    %2249 = vmatmul.mubr.f32.gmra.mrb[0].mxu0 %v1969
    %v2250 = vpop.f32.mrb[0].mxu0
    %v2251 = vadd.f32 %v1042, %v2250
    %v2252 = vpop.f32.mrb[0].mxu0
    %2253 = vmatprep.mubr.f32.mxu0 0.0
    %2254 = vmatmul.mubr.f32.gmra.mrb[0].mxu0 %v1972
    %v2255 = vpop.f32.mrb[0].mxu0
    %v2256 = vadd.f32 %v1042, %v2255
    %v2257 = vpop.f32.mrb[0].mxu0
    %2258 = vmatprep.mubr.f32.mxu0 0.0
    %2259 = vmatmul.mubr.f32.gmra.mrb[0].mxu0 %v1975
    %v2260 = vpop.f32.mrb[0].mxu0
    %v2261 = vadd.f32 %v1042, %v2260
    %v2262 = vpop.f32.mrb[0].mxu0
    %2263 = vdwg.mxu0
    %2264 = vmatprep.subr.mxu0 0.0
    %2265 = vmatpush1.msra.mxu0 %v1130
    %2266 = vmatprep.subr.mxu0 0.0
    %2267 = vmatpush1.msra.mxu0 %v1131
    %2268 = vmatprep.subr.mxu0 0.0
    %2269 = vmatpush1.msra.mxu0 %v1132
    %2270 = vmatprep.subr.mxu0 0.0
    %2271 = vmatpush1.msra.mxu0 %v1133
    %2272 = vmatprep.subr.mxu0 0.0
    %2273 = vmatpush1.msra.mxu0 0.0
    %2274 = vmatprep.subr.mxu0 0.0
    %2275 = vmatpush1.msra.mxu0 0.0
    %2276 = vmatprep.subr.mxu0 0.0
    %2277 = vmatpush1.msra.mxu0 0.0
    %2278 = vmatprep.subr.mxu0 0.0
    %2279 = vmatpush1.msra.mxu0 0.0
    %2280 = vmatprep.subr.mxu0 0.0
    %2281 = vmatpush1.msra.mxu0 0.0
    %2282 = vmatprep.subr.mxu0 0.0
    %2283 = vmatpush1.msra.mxu0 0.0
    %2284 = vmatprep.subr.mxu0 0.0
    %2285 = vmatpush1.msra.mxu0 0.0
    %2286 = vmatprep.subr.mxu0 0.0
    %2287 = vmatpush1.msra.mxu0 0.0
    %2288 = vmatprep.subr.mxu0 0.0
    %2289 = vmatpush1.msra.mxu0 0.0
    %2290 = vmatprep.subr.mxu0 0.0
    %2291 = vmatpush1.msra.mxu0 0.0
    %2292 = vmatprep.subr.mxu0 0.0
    %2293 = vmatpush1.msra.mxu0 0.0
    %2294 = vmatprep.subr.mxu0 0.0
    %2295 = vmatpush1.msra.mxu0 0.0
    %2296 = vmatprep.subr.mxu0 0.0
    %2297 = vmatpush1.msra.mxu0 0.0
    %2298 = vmatprep.subr.mxu0 0.0
    %2299 = vmatpush1.msra.mxu0 0.0
    %2300 = vmatprep.subr.mxu0 0.0
    %2301 = vmatpush1.msra.mxu0 0.0
    %2302 = vmatprep.subr.mxu0 0.0
    %2303 = vmatpush1.msra.mxu0 0.0
    %2304 = vmatprep.subr.mxu0 0.0
    %2305 = vmatpush1.msra.mxu0 0.0
    %2306 = vmatprep.subr.mxu0 0.0
    %2307 = vmatpush1.msra.mxu0 0.0
    %2308 = vmatprep.subr.mxu0 0.0
    %2309 = vmatpush1.msra.mxu0 0.0
    %2310 = vmatprep.subr.mxu0 0.0
    %2311 = vmatpush1.msra.mxu0 0.0
    %2312 = vmatprep.subr.mxu0 0.0
    %2313 = vmatpush1.msra.mxu0 0.0
    %2314 = vmatprep.subr.mxu0 0.0
    %2315 = vmatpush1.msra.mxu0 0.0
    %2316 = vmatprep.subr.mxu0 0.0
    %2317 = vmatpush1.msra.mxu0 0.0
    %2318 = vmatprep.subr.mxu0 0.0
    %2319 = vmatpush1.msra.mxu0 0.0
    %2320 = vmatprep.subr.mxu0 0.0
    %2321 = vmatpush1.msra.mxu0 0.0
    %2322 = vmatprep.subr.mxu0 0.0
    %2323 = vmatpush1.msra.mxu0 0.0
    %2324 = vmatprep.subr.mxu0 0.0
    %2325 = vmatpush1.msra.mxu0 0.0
    %2326 = vmatprep.subr.mxu0 0.0
    %2327 = vmatpush1.msra.mxu0 0.0
    %2328 = vmatprep.mubr.f32.mxu0 0.0
    %2329 = vmatmul.mubr.f32.gmra.mrb[0].mxu0 %v1484
    %v2330 = vpop.f32.mrb[0].mxu0
    %v2331 = vadd.f32 0.0, %v2330
    %v2332 = vpop.f32.mrb[0].mxu0
    %2333 = vmatprep.mubr.f32.mxu0 0.0
    %2334 = vmatmul.mubr.f32.gmra.mrb[0].mxu0 %v1487
    %v2335 = vpop.f32.mrb[0].mxu0
    %v2336 = vadd.f32 0.0, %v2335
    %v2337 = vpop.f32.mrb[0].mxu0
    %2338 = vmatprep.mubr.f32.mxu0 0.0
    %2339 = vmatmul.mubr.f32.gmra.mrb[0].mxu0 %v1490
    %v2340 = vpop.f32.mrb[0].mxu0
    %v2341 = vadd.f32 0.0, %v2340
    %v2342 = vpop.f32.mrb[0].mxu0
    %2343 = vmatprep.mubr.f32.mxu0 0.0
    %2344 = vmatmul.mubr.f32.gmra.mrb[0].mxu0 %v1493
    %v2345 = vpop.f32.mrb[0].mxu0
    %v2346 = vadd.f32 0.0, %v2345
    %v2347 = vpop.f32.mrb[0].mxu0
    %2348 = vdwg.mxu0
    %v2349 = vadd.f32 %v2246, %v2331
    %v2350 = vadd.f32 %v2251, %v2336
    %v2351 = vadd.f32 %v2256, %v2341
    %v2352 = vadd.f32 %v2261, %v2346
    %v2353 = vadd.f32 %v2349, %v1229
    %v2354 = vadd.f32 %v2350, %v1229
    %v2355 = vadd.f32 %v2351, %v1229
    %v2356 = vadd.f32 %v2352, %v1229
    %v2357 = vxor.u32 %v2353, 2147483648
    %v2358 = vxor.u32 %v2354, 2147483648
    %v2359 = vxor.u32 %v2355, 2147483648
    %v2360 = vxor.u32 %v2356, 2147483648
    %v2361 = vmul.f32 %v2357, 1.442695
    %v2362 = vpow.pop %v2361
    %v2363 = vmul.f32 %v2358, 1.442695
    %v2364 = vpow.pop %v2363
    %v2365 = vmul.f32 %v2359, 1.442695
    %v2366 = vpow.pop %v2365
    %v2367 = vmul.f32 %v2360, 1.442695
    %v2368 = vpow.pop %v2367
    %v2369 = vadd.f32 %v2362, 1.0
    %v2370 = vadd.f32 %v2364, 1.0
    %v2371 = vadd.f32 %v2366, 1.0
    %v2372 = vadd.f32 %v2368, 1.0
    %v2373 = vrcp.pop %v2369
    %v2374 = vmul.f32 1.0, %v2373
    %v2375 = vrcp.pop %v2370
    %v2376 = vmul.f32 1.0, %v2375
    %v2377 = vrcp.pop %v2371
    %v2378 = vmul.f32 1.0, %v2377
    %v2379 = vrcp.pop %v2372
    %v2380 = vmul.f32 1.0, %v2379
    %2381 = vmatprep.subr.mxu0 0.0
    %2382 = vmatpush1.msra.mxu0 %v1260
    %2383 = vmatprep.subr.mxu0 0.0
    %2384 = vmatpush1.msra.mxu0 %v1261
    %2385 = vmatprep.subr.mxu0 0.0
    %2386 = vmatpush1.msra.mxu0 %v1262
    %2387 = vmatprep.subr.mxu0 0.0
    %2388 = vmatpush1.msra.mxu0 %v1263
    %2389 = vmatprep.subr.mxu0 0.0
    %2390 = vmatpush1.msra.mxu0 0.0
    %2391 = vmatprep.subr.mxu0 0.0
    %2392 = vmatpush1.msra.mxu0 0.0
    %2393 = vmatprep.subr.mxu0 0.0
    %2394 = vmatpush1.msra.mxu0 0.0
    %2395 = vmatprep.subr.mxu0 0.0
    %2396 = vmatpush1.msra.mxu0 0.0
    %2397 = vmatprep.subr.mxu0 0.0
    %2398 = vmatpush1.msra.mxu0 0.0
    %2399 = vmatprep.subr.mxu0 0.0
    %2400 = vmatpush1.msra.mxu0 0.0
    %2401 = vmatprep.subr.mxu0 0.0
    %2402 = vmatpush1.msra.mxu0 0.0
    %2403 = vmatprep.subr.mxu0 0.0
    %2404 = vmatpush1.msra.mxu0 0.0
    %2405 = vmatprep.subr.mxu0 0.0
    %2406 = vmatpush1.msra.mxu0 0.0
    %2407 = vmatprep.subr.mxu0 0.0
    %2408 = vmatpush1.msra.mxu0 0.0
    %2409 = vmatprep.subr.mxu0 0.0
    %2410 = vmatpush1.msra.mxu0 0.0
    %2411 = vmatprep.subr.mxu0 0.0
    %2412 = vmatpush1.msra.mxu0 0.0
    %2413 = vmatprep.subr.mxu0 0.0
    %2414 = vmatpush1.msra.mxu0 0.0
    %2415 = vmatprep.subr.mxu0 0.0
    %2416 = vmatpush1.msra.mxu0 0.0
    %2417 = vmatprep.subr.mxu0 0.0
    %2418 = vmatpush1.msra.mxu0 0.0
    %2419 = vmatprep.subr.mxu0 0.0
    %2420 = vmatpush1.msra.mxu0 0.0
    %2421 = vmatprep.subr.mxu0 0.0
    %2422 = vmatpush1.msra.mxu0 0.0
    %2423 = vmatprep.subr.mxu0 0.0
    %2424 = vmatpush1.msra.mxu0 0.0
    %2425 = vmatprep.subr.mxu0 0.0
    %2426 = vmatpush1.msra.mxu0 0.0
    %2427 = vmatprep.subr.mxu0 0.0
    %2428 = vmatpush1.msra.mxu0 0.0
    %2429 = vmatprep.subr.mxu0 0.0
    %2430 = vmatpush1.msra.mxu0 0.0
    %2431 = vmatprep.subr.mxu0 0.0
    %2432 = vmatpush1.msra.mxu0 0.0
    %2433 = vmatprep.subr.mxu0 0.0
    %2434 = vmatpush1.msra.mxu0 0.0
    %2435 = vmatprep.subr.mxu0 0.0
    %2436 = vmatpush1.msra.mxu0 0.0
    %2437 = vmatprep.subr.mxu0 0.0
    %2438 = vmatpush1.msra.mxu0 0.0
    %2439 = vmatprep.subr.mxu0 0.0
    %2440 = vmatpush1.msra.mxu0 0.0
    %2441 = vmatprep.subr.mxu0 0.0
    %2442 = vmatpush1.msra.mxu0 0.0
    %2443 = vmatprep.subr.mxu0 0.0
    %2444 = vmatpush1.msra.mxu0 0.0
    %2445 = vmatprep.mubr.f32.mxu0 0.0
    %2446 = vmatmul.mubr.f32.gmra.mrb[0].mxu0 %v1966
    %v2447 = vpop.f32.mrb[0].mxu0
    %v2448 = vadd.f32 %v1270, %v2447
    %v2449 = vpop.f32.mrb[0].mxu0
    %2450 = vmatprep.mubr.f32.mxu0 0.0
    %2451 = vmatmul.mubr.f32.gmra.mrb[0].mxu0 %v1969
    %v2452 = vpop.f32.mrb[0].mxu0
    %v2453 = vadd.f32 %v1270, %v2452
    %v2454 = vpop.f32.mrb[0].mxu0
    %2455 = vmatprep.mubr.f32.mxu0 0.0
    %2456 = vmatmul.mubr.f32.gmra.mrb[0].mxu0 %v1972
    %v2457 = vpop.f32.mrb[0].mxu0
    %v2458 = vadd.f32 %v1270, %v2457
    %v2459 = vpop.f32.mrb[0].mxu0
    %2460 = vmatprep.mubr.f32.mxu0 0.0
    %2461 = vmatmul.mubr.f32.gmra.mrb[0].mxu0 %v1975
    %v2462 = vpop.f32.mrb[0].mxu0
    %v2463 = vadd.f32 %v1270, %v2462
    %v2464 = vpop.f32.mrb[0].mxu0
    %2465 = vdwg.mxu0
    %2466 = vmatprep.subr.mxu0 0.0
    %2467 = vmatpush1.msra.mxu0 %v1358
    %2468 = vmatprep.subr.mxu0 0.0
    %2469 = vmatpush1.msra.mxu0 %v1359
    %2470 = vmatprep.subr.mxu0 0.0
    %2471 = vmatpush1.msra.mxu0 %v1360
    %2472 = vmatprep.subr.mxu0 0.0
    %2473 = vmatpush1.msra.mxu0 %v1361
    %2474 = vmatprep.subr.mxu0 0.0
    %2475 = vmatpush1.msra.mxu0 0.0
    %2476 = vmatprep.subr.mxu0 0.0
    %2477 = vmatpush1.msra.mxu0 0.0
    %2478 = vmatprep.subr.mxu0 0.0
    %2479 = vmatpush1.msra.mxu0 0.0
    %2480 = vmatprep.subr.mxu0 0.0
    %2481 = vmatpush1.msra.mxu0 0.0
    %2482 = vmatprep.subr.mxu0 0.0
    %2483 = vmatpush1.msra.mxu0 0.0
    %2484 = vmatprep.subr.mxu0 0.0
    %2485 = vmatpush1.msra.mxu0 0.0
    %2486 = vmatprep.subr.mxu0 0.0
    %2487 = vmatpush1.msra.mxu0 0.0
    %2488 = vmatprep.subr.mxu0 0.0
    %2489 = vmatpush1.msra.mxu0 0.0
    %2490 = vmatprep.subr.mxu0 0.0
    %2491 = vmatpush1.msra.mxu0 0.0
    %2492 = vmatprep.subr.mxu0 0.0
    %2493 = vmatpush1.msra.mxu0 0.0
    %2494 = vmatprep.subr.mxu0 0.0
    %2495 = vmatpush1.msra.mxu0 0.0
    %2496 = vmatprep.subr.mxu0 0.0
    %2497 = vmatpush1.msra.mxu0 0.0
    %2498 = vmatprep.subr.mxu0 0.0
    %2499 = vmatpush1.msra.mxu0 0.0
    %2500 = vmatprep.subr.mxu0 0.0
    %2501 = vmatpush1.msra.mxu0 0.0
    %2502 = vmatprep.subr.mxu0 0.0
    %2503 = vmatpush1.msra.mxu0 0.0
    %2504 = vmatprep.subr.mxu0 0.0
    %2505 = vmatpush1.msra.mxu0 0.0
    %2506 = vmatprep.subr.mxu0 0.0
    %2507 = vmatpush1.msra.mxu0 0.0
    %2508 = vmatprep.subr.mxu0 0.0
    %2509 = vmatpush1.msra.mxu0 0.0
    %2510 = vmatprep.subr.mxu0 0.0
    %2511 = vmatpush1.msra.mxu0 0.0
    %2512 = vmatprep.subr.mxu0 0.0
    %2513 = vmatpush1.msra.mxu0 0.0
    %2514 = vmatprep.subr.mxu0 0.0
    %2515 = vmatpush1.msra.mxu0 0.0
    %2516 = vmatprep.subr.mxu0 0.0
    %2517 = vmatpush1.msra.mxu0 0.0
    %2518 = vmatprep.subr.mxu0 0.0
    %2519 = vmatpush1.msra.mxu0 0.0
    %2520 = vmatprep.subr.mxu0 0.0
    %2521 = vmatpush1.msra.mxu0 0.0
    %2522 = vmatprep.subr.mxu0 0.0
    %2523 = vmatpush1.msra.mxu0 0.0
    %2524 = vmatprep.subr.mxu0 0.0
    %2525 = vmatpush1.msra.mxu0 0.0
    %2526 = vmatprep.subr.mxu0 0.0
    %2527 = vmatpush1.msra.mxu0 0.0
    %2528 = vmatprep.subr.mxu0 0.0
    %2529 = vmatpush1.msra.mxu0 0.0
    %2530 = vmatprep.mubr.f32.mxu0 0.0
    %2531 = vmatmul.mubr.f32.gmra.mrb[0].mxu0 %v1484
    %v2532 = vpop.f32.mrb[0].mxu0
    %v2533 = vadd.f32 %v1368, %v2532
    %v2534 = vpop.f32.mrb[0].mxu0
    %2535 = vmatprep.mubr.f32.mxu0 0.0
    %2536 = vmatmul.mubr.f32.gmra.mrb[0].mxu0 %v1487
    %v2537 = vpop.f32.mrb[0].mxu0
    %v2538 = vadd.f32 %v1368, %v2537
    %v2539 = vpop.f32.mrb[0].mxu0
    %2540 = vmatprep.mubr.f32.mxu0 0.0
    %2541 = vmatmul.mubr.f32.gmra.mrb[0].mxu0 %v1490
    %v2542 = vpop.f32.mrb[0].mxu0
    %v2543 = vadd.f32 %v1368, %v2542
    %v2544 = vpop.f32.mrb[0].mxu0
    %2545 = vmatprep.mubr.f32.mxu0 0.0
    %2546 = vmatmul.mubr.f32.gmra.mrb[0].mxu0 %v1493
    %v2547 = vpop.f32.mrb[0].mxu0
    %v2548 = vadd.f32 %v1368, %v2547
    %v2549 = vpop.f32.mrb[0].mxu0
    %2550 = vdwg.mxu0
    %v2551 = vmul.f32 %v2172, %v2533
    %v2552 = vmul.f32 %v2174, %v2538
    %v2553 = vmul.f32 %v2176, %v2543
    %v2554 = vmul.f32 %v2178, %v2548
    %v2555 = vadd.f32 %v2448, %v2551
    %v2556 = vadd.f32 %v2453, %v2552
    %v2557 = vadd.f32 %v2458, %v2553
    %v2558 = vadd.f32 %v2463, %v2554
    %v2559 = vtanh.pop %v2555
    %v2560 = vtanh.pop %v2556
    %v2561 = vtanh.pop %v2557
    %v2562 = vtanh.pop %v2558
    %v2563 = vsub.f32 1.0, %v2374
    %v2564 = vsub.f32 1.0, %v2376
    %v2565 = vsub.f32 1.0, %v2378
    %v2566 = vsub.f32 1.0, %v2380
    %v2567 = vmul.f32 %v2563, %v2559
    %v2568 = vmul.f32 %v2564, %v2560
    %v2569 = vmul.f32 %v2565, %v2561
    %v2570 = vmul.f32 %v2566, %v2562
    %v2571 = vmul.f32 %v2374, %v1479
    %v2572 = vmul.f32 %v2376, %v1480
    %v2573 = vmul.f32 %v2378, %v1481
    %v2574 = vmul.f32 %v2380, %v1482
    %v2575 = vadd.f32 %v2567, %v2571
    %v2576 = vadd.f32 %v2568, %v2572
    %v2577 = vadd.f32 %v2569, %v2573
    %v2578 = vadd.f32 %v2570, %v2574
    %v2579 = vld [vmem:[#allocation16] sm:$0xff]
    %v2580 = vld [vmem:[#allocation16 + $0x8] sm:$0xff]
    %v2581 = vld [vmem:[#allocation16 + $0x10] sm:$0xff]
    %v2582 = vld [vmem:[#allocation16 + $0x18] sm:$0xff]
    %v2584 = vsel %vm274, %v2575, 0
    %v2587 = vsel %vm274, %v2576, 0
    %v2590 = vsel %vm274, %v2577, 0
    %v2593 = vsel %vm274, %v2578, 0
    %2595 = vmatprep.subr.mxu0 0.0
    %2596 = vmatpush1.msra.mxu0 %v2579
    %2597 = vmatprep.subr.mxu0 0.0
    %2598 = vmatpush1.msra.mxu0 %v2580
    %2599 = vmatprep.subr.mxu0 0.0
    %2600 = vmatpush1.msra.mxu0 %v2581
    %2601 = vmatprep.subr.mxu0 0.0
    %2602 = vmatpush1.msra.mxu0 %v2582
    %2603 = vmatprep.subr.mxu0 0.0
    %2604 = vmatpush1.msra.mxu0 0.0
    %2605 = vmatprep.subr.mxu0 0.0
    %2606 = vmatpush1.msra.mxu0 0.0
    %2607 = vmatprep.subr.mxu0 0.0
    %2608 = vmatpush1.msra.mxu0 0.0
    %2609 = vmatprep.subr.mxu0 0.0
    %2610 = vmatpush1.msra.mxu0 0.0
    %2611 = vmatprep.subr.mxu0 0.0
    %2612 = vmatpush1.msra.mxu0 0.0
    %2613 = vmatprep.subr.mxu0 0.0
    %2614 = vmatpush1.msra.mxu0 0.0
    %2615 = vmatprep.subr.mxu0 0.0
    %2616 = vmatpush1.msra.mxu0 0.0
    %2617 = vmatprep.subr.mxu0 0.0
    %2618 = vmatpush1.msra.mxu0 0.0
    %2619 = vmatprep.subr.mxu0 0.0
    %2620 = vmatpush1.msra.mxu0 0.0
    %2621 = vmatprep.subr.mxu0 0.0
    %2622 = vmatpush1.msra.mxu0 0.0
    %2623 = vmatprep.subr.mxu0 0.0
    %2624 = vmatpush1.msra.mxu0 0.0
    %2625 = vmatprep.subr.mxu0 0.0
    %2626 = vmatpush1.msra.mxu0 0.0
    %2627 = vmatprep.subr.mxu0 0.0
    %2628 = vmatpush1.msra.mxu0 0.0
    %2629 = vmatprep.subr.mxu0 0.0
    %2630 = vmatpush1.msra.mxu0 0.0
    %2631 = vmatprep.subr.mxu0 0.0
    %2632 = vmatpush1.msra.mxu0 0.0
    %2633 = vmatprep.subr.mxu0 0.0
    %2634 = vmatpush1.msra.mxu0 0.0
    %2635 = vmatprep.subr.mxu0 0.0
    %2636 = vmatpush1.msra.mxu0 0.0
    %2637 = vmatprep.subr.mxu0 0.0
    %2638 = vmatpush1.msra.mxu0 0.0
    %2639 = vmatprep.subr.mxu0 0.0
    %2640 = vmatpush1.msra.mxu0 0.0
    %2641 = vmatprep.subr.mxu0 0.0
    %2642 = vmatpush1.msra.mxu0 0.0
    %2643 = vmatprep.subr.mxu0 0.0
    %2644 = vmatpush1.msra.mxu0 0.0
    %2645 = vmatprep.subr.mxu0 0.0
    %2646 = vmatpush1.msra.mxu0 0.0
    %2647 = vmatprep.subr.mxu0 0.0
    %2648 = vmatpush1.msra.mxu0 0.0
    %2649 = vmatprep.subr.mxu0 0.0
    %2650 = vmatpush1.msra.mxu0 0.0
    %2651 = vmatprep.subr.mxu0 0.0
    %2652 = vmatpush1.msra.mxu0 0.0
    %2653 = vmatprep.subr.mxu0 0.0
    %2654 = vmatpush1.msra.mxu0 0.0
    %2655 = vmatprep.subr.mxu0 0.0
    %2656 = vmatpush1.msra.mxu0 0.0
    %2657 = vmatprep.subr.mxu0 0.0
    %2658 = vmatpush1.msra.mxu0 0.0
    %2659 = vmatprep.mubr.f32.mxu0 0.0
    %2660 = vmatmul.mubr.f32.gmra.mrb[0].mxu0 %v2584
    %v2661 = vpop.f32.mrb[0].mxu0
    %v2662 = vadd.f32 0.0, %v2661
    %v2663 = vpop.f32.mrb[0].mxu0
    %2664 = vmatprep.mubr.f32.mxu0 0.0
    %2665 = vmatmul.mubr.f32.gmra.mrb[0].mxu0 %v2587
    %v2666 = vpop.f32.mrb[0].mxu0
    %v2667 = vadd.f32 0.0, %v2666
    %v2668 = vpop.f32.mrb[0].mxu0
    %2669 = vmatprep.mubr.f32.mxu0 0.0
    %2670 = vmatmul.mubr.f32.gmra.mrb[0].mxu0 %v2590
    %v2671 = vpop.f32.mrb[0].mxu0
    %v2672 = vadd.f32 0.0, %v2671
    %v2673 = vpop.f32.mrb[0].mxu0
    %2674 = vmatprep.mubr.f32.mxu0 0.0
    %2675 = vmatmul.mubr.f32.gmra.mrb[0].mxu0 %v2593
    %v2676 = vpop.f32.mrb[0].mxu0
    %v2677 = vadd.f32 0.0, %v2676
    %v2678 = vpop.f32.mrb[0].mxu0
    %2679 = vdwg.mxu0
    %s2680 = scalar_lea.vmem [#allocation16], 32
    %v2681 = vld [vmem:[%s2680] sm:$0xff]
    %v2682 = vld [vmem:[%s2680 + $0x8] sm:$0xff]
    %v2683 = vld [vmem:[%s2680 + $0x10] sm:$0xff]
    %v2684 = vld [vmem:[%s2680 + $0x18] sm:$0xff]
    %2685 = vmatprep.subr.mxu0 0.0
    %2686 = vmatpush1.msra.mxu0 %v2681
    %2687 = vmatprep.subr.mxu0 0.0
    %2688 = vmatpush1.msra.mxu0 %v2682
    %2689 = vmatprep.subr.mxu0 0.0
    %2690 = vmatpush1.msra.mxu0 %v2683
    %2691 = vmatprep.subr.mxu0 0.0
    %2692 = vmatpush1.msra.mxu0 %v2684
    %2693 = vmatprep.subr.mxu0 0.0
    %2694 = vmatpush1.msra.mxu0 0.0
    %2695 = vmatprep.subr.mxu0 0.0
    %2696 = vmatpush1.msra.mxu0 0.0
    %2697 = vmatprep.subr.mxu0 0.0
    %2698 = vmatpush1.msra.mxu0 0.0
    %2699 = vmatprep.subr.mxu0 0.0
    %2700 = vmatpush1.msra.mxu0 0.0
    %2701 = vmatprep.subr.mxu0 0.0
    %2702 = vmatpush1.msra.mxu0 0.0
    %2703 = vmatprep.subr.mxu0 0.0
    %2704 = vmatpush1.msra.mxu0 0.0
    %2705 = vmatprep.subr.mxu0 0.0
    %2706 = vmatpush1.msra.mxu0 0.0
    %2707 = vmatprep.subr.mxu0 0.0
    %2708 = vmatpush1.msra.mxu0 0.0
    %2709 = vmatprep.subr.mxu0 0.0
    %2710 = vmatpush1.msra.mxu0 0.0
    %2711 = vmatprep.subr.mxu0 0.0
    %2712 = vmatpush1.msra.mxu0 0.0
    %2713 = vmatprep.subr.mxu0 0.0
    %2714 = vmatpush1.msra.mxu0 0.0
    %2715 = vmatprep.subr.mxu0 0.0
    %2716 = vmatpush1.msra.mxu0 0.0
    %2717 = vmatprep.subr.mxu0 0.0
    %2718 = vmatpush1.msra.mxu0 0.0
    %2719 = vmatprep.subr.mxu0 0.0
    %2720 = vmatpush1.msra.mxu0 0.0
    %2721 = vmatprep.subr.mxu0 0.0
    %2722 = vmatpush1.msra.mxu0 0.0
    %2723 = vmatprep.subr.mxu0 0.0
    %2724 = vmatpush1.msra.mxu0 0.0
    %2725 = vmatprep.subr.mxu0 0.0
    %2726 = vmatpush1.msra.mxu0 0.0
    %2727 = vmatprep.subr.mxu0 0.0
    %2728 = vmatpush1.msra.mxu0 0.0
    %2729 = vmatprep.subr.mxu0 0.0
    %2730 = vmatpush1.msra.mxu0 0.0
    %2731 = vmatprep.subr.mxu0 0.0
    %2732 = vmatpush1.msra.mxu0 0.0
    %2733 = vmatprep.subr.mxu0 0.0
    %2734 = vmatpush1.msra.mxu0 0.0
    %2735 = vmatprep.subr.mxu0 0.0
    %2736 = vmatpush1.msra.mxu0 0.0
    %2737 = vmatprep.subr.mxu0 0.0
    %2738 = vmatpush1.msra.mxu0 0.0
    %2739 = vmatprep.subr.mxu0 0.0
    %2740 = vmatpush1.msra.mxu0 0.0
    %2741 = vmatprep.subr.mxu0 0.0
    %2742 = vmatpush1.msra.mxu0 0.0
    %2743 = vmatprep.subr.mxu0 0.0
    %2744 = vmatpush1.msra.mxu0 0.0
    %2745 = vmatprep.subr.mxu0 0.0
    %2746 = vmatpush1.msra.mxu0 0.0
    %2747 = vmatprep.subr.mxu0 0.0
    %2748 = vmatpush1.msra.mxu0 0.0
    %2749 = vmatprep.mubr.f32.mxu0 0.0
    %2750 = vmatmul.mubr.f32.gmra.mrb[0].mxu0 %v2584
    %v2751 = vpop.f32.mrb[0].mxu0
    %v2752 = vadd.f32 0.0, %v2751
    %v2753 = vpop.f32.mrb[0].mxu0
    %2754 = vmatprep.mubr.f32.mxu0 0.0
    %2755 = vmatmul.mubr.f32.gmra.mrb[0].mxu0 %v2587
    %v2756 = vpop.f32.mrb[0].mxu0
    %v2757 = vadd.f32 0.0, %v2756
    %v2758 = vpop.f32.mrb[0].mxu0
    %2759 = vmatprep.mubr.f32.mxu0 0.0
    %2760 = vmatmul.mubr.f32.gmra.mrb[0].mxu0 %v2590
    %v2761 = vpop.f32.mrb[0].mxu0
    %v2762 = vadd.f32 0.0, %v2761
    %v2763 = vpop.f32.mrb[0].mxu0
    %2764 = vmatprep.mubr.f32.mxu0 0.0
    %2765 = vmatmul.mubr.f32.gmra.mrb[0].mxu0 %v2593
    %v2766 = vpop.f32.mrb[0].mxu0
    %v2767 = vadd.f32 0.0, %v2766
    %v2768 = vpop.f32.mrb[0].mxu0
    %2769 = vdwg.mxu0
    %s2770 = scalar_lea.vmem [#allocation16], 64
    %v2771 = vld [vmem:[%s2770] sm:$0xff]
    %v2772 = vld [vmem:[%s2770 + $0x8] sm:$0xff]
    %v2773 = vld [vmem:[%s2770 + $0x10] sm:$0xff]
    %v2774 = vld [vmem:[%s2770 + $0x18] sm:$0xff]
    %2775 = vmatprep.subr.mxu0 0.0
    %2776 = vmatpush1.msra.mxu0 %v2771
    %2777 = vmatprep.subr.mxu0 0.0
    %2778 = vmatpush1.msra.mxu0 %v2772
    %2779 = vmatprep.subr.mxu0 0.0
    %2780 = vmatpush1.msra.mxu0 %v2773
    %2781 = vmatprep.subr.mxu0 0.0
    %2782 = vmatpush1.msra.mxu0 %v2774
    %2783 = vmatprep.subr.mxu0 0.0
    %2784 = vmatpush1.msra.mxu0 0.0
    %2785 = vmatprep.subr.mxu0 0.0
    %2786 = vmatpush1.msra.mxu0 0.0
    %2787 = vmatprep.subr.mxu0 0.0
    %2788 = vmatpush1.msra.mxu0 0.0
    %2789 = vmatprep.subr.mxu0 0.0
    %2790 = vmatpush1.msra.mxu0 0.0
    %2791 = vmatprep.subr.mxu0 0.0
    %2792 = vmatpush1.msra.mxu0 0.0
    %2793 = vmatprep.subr.mxu0 0.0
    %2794 = vmatpush1.msra.mxu0 0.0
    %2795 = vmatprep.subr.mxu0 0.0
    %2796 = vmatpush1.msra.mxu0 0.0
    %2797 = vmatprep.subr.mxu0 0.0
    %2798 = vmatpush1.msra.mxu0 0.0
    %2799 = vmatprep.subr.mxu0 0.0
    %2800 = vmatpush1.msra.mxu0 0.0
    %2801 = vmatprep.subr.mxu0 0.0
    %2802 = vmatpush1.msra.mxu0 0.0
    %2803 = vmatprep.subr.mxu0 0.0
    %2804 = vmatpush1.msra.mxu0 0.0
    %2805 = vmatprep.subr.mxu0 0.0
    %2806 = vmatpush1.msra.mxu0 0.0
    %2807 = vmatprep.subr.mxu0 0.0
    %2808 = vmatpush1.msra.mxu0 0.0
    %2809 = vmatprep.subr.mxu0 0.0
    %2810 = vmatpush1.msra.mxu0 0.0
    %2811 = vmatprep.subr.mxu0 0.0
    %2812 = vmatpush1.msra.mxu0 0.0
    %2813 = vmatprep.subr.mxu0 0.0
    %2814 = vmatpush1.msra.mxu0 0.0
    %2815 = vmatprep.subr.mxu0 0.0
    %2816 = vmatpush1.msra.mxu0 0.0
    %2817 = vmatprep.subr.mxu0 0.0
    %2818 = vmatpush1.msra.mxu0 0.0
    %2819 = vmatprep.subr.mxu0 0.0
    %2820 = vmatpush1.msra.mxu0 0.0
    %2821 = vmatprep.subr.mxu0 0.0
    %2822 = vmatpush1.msra.mxu0 0.0
    %2823 = vmatprep.subr.mxu0 0.0
    %2824 = vmatpush1.msra.mxu0 0.0
    %2825 = vmatprep.subr.mxu0 0.0
    %2826 = vmatpush1.msra.mxu0 0.0
    %2827 = vmatprep.subr.mxu0 0.0
    %2828 = vmatpush1.msra.mxu0 0.0
    %2829 = vmatprep.subr.mxu0 0.0
    %2830 = vmatpush1.msra.mxu0 0.0
    %2831 = vmatprep.subr.mxu0 0.0
    %2832 = vmatpush1.msra.mxu0 0.0
    %2833 = vmatprep.subr.mxu0 0.0
    %2834 = vmatpush1.msra.mxu0 0.0
    %2835 = vmatprep.subr.mxu0 0.0
    %2836 = vmatpush1.msra.mxu0 0.0
    %2837 = vmatprep.subr.mxu0 0.0
    %2838 = vmatpush1.msra.mxu0 0.0
    %2839 = vmatprep.mubr.f32.mxu0 0.0
    %2840 = vmatmul.mubr.f32.gmra.mrb[0].mxu0 %v2584
    %v2841 = vpop.f32.mrb[0].mxu0
    %v2842 = vadd.f32 0.0, %v2841
    %v2843 = vpop.f32.mrb[0].mxu0
    %2844 = vmatprep.mubr.f32.mxu0 0.0
    %2845 = vmatmul.mubr.f32.gmra.mrb[0].mxu0 %v2587
    %v2846 = vpop.f32.mrb[0].mxu0
    %v2847 = vadd.f32 0.0, %v2846
    %v2848 = vpop.f32.mrb[0].mxu0
    %2849 = vmatprep.mubr.f32.mxu0 0.0
    %2850 = vmatmul.mubr.f32.gmra.mrb[0].mxu0 %v2590
    %v2851 = vpop.f32.mrb[0].mxu0
    %v2852 = vadd.f32 0.0, %v2851
    %v2853 = vpop.f32.mrb[0].mxu0
    %2854 = vmatprep.mubr.f32.mxu0 0.0
    %2855 = vmatmul.mubr.f32.gmra.mrb[0].mxu0 %v2593
    %v2856 = vpop.f32.mrb[0].mxu0
    %v2857 = vadd.f32 0.0, %v2856
    %v2858 = vpop.f32.mrb[0].mxu0
    %2859 = vdwg.mxu0
    %v2860 = vld [vmem:[#allocation21] sm:$0xff]
    %v2861 = vld [vmem:[#allocation21 + $0x8] sm:$0xff]
    %v2862 = vld [vmem:[#allocation21 + $0x10] sm:$0xff]
    %v2863 = vld [vmem:[#allocation21 + $0x18] sm:$0xff]
    %v2864 = vld [vmem:[#allocation22] sm:$0xff]
    %v2865 = vld [vmem:[#allocation22 + $0x8] sm:$0xff]
    %v2866 = vld [vmem:[#allocation22 + $0x10] sm:$0xff]
    %v2867 = vld [vmem:[#allocation22 + $0x18] sm:$0xff]
    %2868 = vmatprep.subr.mxu0 0.0
    %2869 = vmatpush1.msra.mxu0 %v2864
    %2870 = vmatprep.subr.mxu0 0.0
    %2871 = vmatpush1.msra.mxu0 %v2865
    %2872 = vmatprep.subr.mxu0 0.0
    %2873 = vmatpush1.msra.mxu0 %v2866
    %2874 = vmatprep.subr.mxu0 0.0
    %2875 = vmatpush1.msra.mxu0 %v2867
    %2876 = vmatprep.subr.mxu0 0.0
    %2877 = vmatpush1.msra.mxu0 0.0
    %2878 = vmatprep.subr.mxu0 0.0
    %2879 = vmatpush1.msra.mxu0 0.0
    %2880 = vmatprep.subr.mxu0 0.0
    %2881 = vmatpush1.msra.mxu0 0.0
    %2882 = vmatprep.subr.mxu0 0.0
    %2883 = vmatpush1.msra.mxu0 0.0
    %2884 = vmatprep.subr.mxu0 0.0
    %2885 = vmatpush1.msra.mxu0 0.0
    %2886 = vmatprep.subr.mxu0 0.0
    %2887 = vmatpush1.msra.mxu0 0.0
    %2888 = vmatprep.subr.mxu0 0.0
    %2889 = vmatpush1.msra.mxu0 0.0
    %2890 = vmatprep.subr.mxu0 0.0
    %2891 = vmatpush1.msra.mxu0 0.0
    %2892 = vmatprep.subr.mxu0 0.0
    %2893 = vmatpush1.msra.mxu0 0.0
    %2894 = vmatprep.subr.mxu0 0.0
    %2895 = vmatpush1.msra.mxu0 0.0
    %2896 = vmatprep.subr.mxu0 0.0
    %2897 = vmatpush1.msra.mxu0 0.0
    %2898 = vmatprep.subr.mxu0 0.0
    %2899 = vmatpush1.msra.mxu0 0.0
    %2900 = vmatprep.subr.mxu0 0.0
    %2901 = vmatpush1.msra.mxu0 0.0
    %2902 = vmatprep.subr.mxu0 0.0
    %2903 = vmatpush1.msra.mxu0 0.0
    %2904 = vmatprep.subr.mxu0 0.0
    %2905 = vmatpush1.msra.mxu0 0.0
    %2906 = vmatprep.subr.mxu0 0.0
    %2907 = vmatpush1.msra.mxu0 0.0
    %2908 = vmatprep.subr.mxu0 0.0
    %2909 = vmatpush1.msra.mxu0 0.0
    %2910 = vmatprep.subr.mxu0 0.0
    %2911 = vmatpush1.msra.mxu0 0.0
    %2912 = vmatprep.subr.mxu0 0.0
    %2913 = vmatpush1.msra.mxu0 0.0
    %2914 = vmatprep.subr.mxu0 0.0
    %2915 = vmatpush1.msra.mxu0 0.0
    %2916 = vmatprep.subr.mxu0 0.0
    %2917 = vmatpush1.msra.mxu0 0.0
    %2918 = vmatprep.subr.mxu0 0.0
    %2919 = vmatpush1.msra.mxu0 0.0
    %2920 = vmatprep.subr.mxu0 0.0
    %2921 = vmatpush1.msra.mxu0 0.0
    %2922 = vmatprep.subr.mxu0 0.0
    %2923 = vmatpush1.msra.mxu0 0.0
    %2924 = vmatprep.subr.mxu0 0.0
    %2925 = vmatpush1.msra.mxu0 0.0
    %2926 = vmatprep.subr.mxu0 0.0
    %2927 = vmatpush1.msra.mxu0 0.0
    %2928 = vmatprep.subr.mxu0 0.0
    %2929 = vmatpush1.msra.mxu0 0.0
    %2930 = vmatprep.subr.mxu0 0.0
    %2931 = vmatpush1.msra.mxu0 0.0
    %2932 = vmatprep.mubr.f32.mxu0 0.0
    %2933 = vmatmul.mubr.f32.gmra.mrb[0].mxu0 %v276
    %v2934 = vpop.f32.mrb[0].mxu0
    %v2935 = vadd.f32 0.0, %v2934
    %v2936 = vpop.f32.mrb[0].mxu0
    %2937 = vmatprep.mubr.f32.mxu0 0.0
    %2938 = vmatmul.mubr.f32.gmra.mrb[0].mxu0 %v279
    %v2939 = vpop.f32.mrb[0].mxu0
    %v2940 = vadd.f32 0.0, %v2939
    %v2941 = vpop.f32.mrb[0].mxu0
    %2942 = vmatprep.mubr.f32.mxu0 0.0
    %2943 = vmatmul.mubr.f32.gmra.mrb[0].mxu0 %v282
    %v2944 = vpop.f32.mrb[0].mxu0
    %v2945 = vadd.f32 0.0, %v2944
    %v2946 = vpop.f32.mrb[0].mxu0
    %2947 = vmatprep.mubr.f32.mxu0 0.0
    %2948 = vmatmul.mubr.f32.gmra.mrb[0].mxu0 %v285
    %v2949 = vpop.f32.mrb[0].mxu0
    %v2950 = vadd.f32 0.0, %v2949
    %v2951 = vpop.f32.mrb[0].mxu0
    %2952 = vdwg.mxu0
    %2953 = vmatprep.subr.mxu0 0.0
    %2954 = vmatpush1.msra.mxu0 %v2860
    %2955 = vmatprep.subr.mxu0 0.0
    %2956 = vmatpush1.msra.mxu0 %v2861
    %2957 = vmatprep.subr.mxu0 0.0
    %2958 = vmatpush1.msra.mxu0 %v2862
    %2959 = vmatprep.subr.mxu0 0.0
    %2960 = vmatpush1.msra.mxu0 %v2863
    %2961 = vmatprep.subr.mxu0 0.0
    %2962 = vmatpush1.msra.mxu0 0.0
    %2963 = vmatprep.subr.mxu0 0.0
    %2964 = vmatpush1.msra.mxu0 0.0
    %2965 = vmatprep.subr.mxu0 0.0
    %2966 = vmatpush1.msra.mxu0 0.0
    %2967 = vmatprep.subr.mxu0 0.0
    %2968 = vmatpush1.msra.mxu0 0.0
    %2969 = vmatprep.subr.mxu0 0.0
    %2970 = vmatpush1.msra.mxu0 0.0
    %2971 = vmatprep.subr.mxu0 0.0
    %2972 = vmatpush1.msra.mxu0 0.0
    %2973 = vmatprep.subr.mxu0 0.0
    %2974 = vmatpush1.msra.mxu0 0.0
    %2975 = vmatprep.subr.mxu0 0.0
    %2976 = vmatpush1.msra.mxu0 0.0
    %2977 = vmatprep.subr.mxu0 0.0
    %2978 = vmatpush1.msra.mxu0 0.0
    %2979 = vmatprep.subr.mxu0 0.0
    %2980 = vmatpush1.msra.mxu0 0.0
    %2981 = vmatprep.subr.mxu0 0.0
    %2982 = vmatpush1.msra.mxu0 0.0
    %2983 = vmatprep.subr.mxu0 0.0
    %2984 = vmatpush1.msra.mxu0 0.0
    %2985 = vmatprep.subr.mxu0 0.0
    %2986 = vmatpush1.msra.mxu0 0.0
    %2987 = vmatprep.subr.mxu0 0.0
    %2988 = vmatpush1.msra.mxu0 0.0
    %2989 = vmatprep.subr.mxu0 0.0
    %2990 = vmatpush1.msra.mxu0 0.0
    %2991 = vmatprep.subr.mxu0 0.0
    %2992 = vmatpush1.msra.mxu0 0.0
    %2993 = vmatprep.subr.mxu0 0.0
    %2994 = vmatpush1.msra.mxu0 0.0
    %2995 = vmatprep.subr.mxu0 0.0
    %2996 = vmatpush1.msra.mxu0 0.0
    %2997 = vmatprep.subr.mxu0 0.0
    %2998 = vmatpush1.msra.mxu0 0.0
    %2999 = vmatprep.subr.mxu0 0.0
    %3000 = vmatpush1.msra.mxu0 0.0
    %3001 = vmatprep.subr.mxu0 0.0
    %3002 = vmatpush1.msra.mxu0 0.0
    %3003 = vmatprep.subr.mxu0 0.0
    %3004 = vmatpush1.msra.mxu0 0.0
    %3005 = vmatprep.subr.mxu0 0.0
    %3006 = vmatpush1.msra.mxu0 0.0
    %3007 = vmatprep.subr.mxu0 0.0
    %3008 = vmatpush1.msra.mxu0 0.0
    %3009 = vmatprep.subr.mxu0 0.0
    %3010 = vmatpush1.msra.mxu0 0.0
    %3011 = vmatprep.subr.mxu0 0.0
    %3012 = vmatpush1.msra.mxu0 0.0
    %3013 = vmatprep.subr.mxu0 0.0
    %3014 = vmatpush1.msra.mxu0 0.0
    %3015 = vmatprep.subr.mxu0 0.0
    %3016 = vmatpush1.msra.mxu0 0.0
    %3017 = vmatprep.mubr.f32.mxu0 0.0
    %3018 = vmatmul.mubr.f32.gmra.mrb[0].mxu0 %v2584
    %v3019 = vpop.f32.mrb[0].mxu0
    %v3020 = vadd.f32 %v2935, %v3019
    %v3021 = vpop.f32.mrb[0].mxu0
    %3022 = vmatprep.mubr.f32.mxu0 0.0
    %3023 = vmatmul.mubr.f32.gmra.mrb[0].mxu0 %v2587
    %v3024 = vpop.f32.mrb[0].mxu0
    %v3025 = vadd.f32 %v2940, %v3024
    %v3026 = vpop.f32.mrb[0].mxu0
    %3027 = vmatprep.mubr.f32.mxu0 0.0
    %3028 = vmatmul.mubr.f32.gmra.mrb[0].mxu0 %v2590
    %v3029 = vpop.f32.mrb[0].mxu0
    %v3030 = vadd.f32 %v2945, %v3029
    %v3031 = vpop.f32.mrb[0].mxu0
    %3032 = vmatprep.mubr.f32.mxu0 0.0
    %3033 = vmatmul.mubr.f32.gmra.mrb[0].mxu0 %v2593
    %v3034 = vpop.f32.mrb[0].mxu0
    %v3035 = vadd.f32 %v2950, %v3034
    %v3036 = vpop.f32.mrb[0].mxu0
    %3037 = vdwg.mxu0
    %s3038 = scalar_lea.vmem [#allocation21], 32
    %v3039 = vld [vmem:[%s3038] sm:$0xff]
    %v3040 = vld [vmem:[%s3038 + $0x8] sm:$0xff]
    %v3041 = vld [vmem:[%s3038 + $0x10] sm:$0xff]
    %v3042 = vld [vmem:[%s3038 + $0x18] sm:$0xff]
    %s3043 = scalar_lea.vmem [#allocation22], 32
    %v3044 = vld [vmem:[%s3043] sm:$0xff]
    %v3045 = vld [vmem:[%s3043 + $0x8] sm:$0xff]
    %v3046 = vld [vmem:[%s3043 + $0x10] sm:$0xff]
    %v3047 = vld [vmem:[%s3043 + $0x18] sm:$0xff]
    %3048 = vmatprep.subr.mxu0 0.0
    %3049 = vmatpush1.msra.mxu0 %v3044
    %3050 = vmatprep.subr.mxu0 0.0
    %3051 = vmatpush1.msra.mxu0 %v3045
    %3052 = vmatprep.subr.mxu0 0.0
    %3053 = vmatpush1.msra.mxu0 %v3046
    %3054 = vmatprep.subr.mxu0 0.0
    %3055 = vmatpush1.msra.mxu0 %v3047
    %3056 = vmatprep.subr.mxu0 0.0
    %3057 = vmatpush1.msra.mxu0 0.0
    %3058 = vmatprep.subr.mxu0 0.0
    %3059 = vmatpush1.msra.mxu0 0.0
    %3060 = vmatprep.subr.mxu0 0.0
    %3061 = vmatpush1.msra.mxu0 0.0
    %3062 = vmatprep.subr.mxu0 0.0
    %3063 = vmatpush1.msra.mxu0 0.0
    %3064 = vmatprep.subr.mxu0 0.0
    %3065 = vmatpush1.msra.mxu0 0.0
    %3066 = vmatprep.subr.mxu0 0.0
    %3067 = vmatpush1.msra.mxu0 0.0
    %3068 = vmatprep.subr.mxu0 0.0
    %3069 = vmatpush1.msra.mxu0 0.0
    %3070 = vmatprep.subr.mxu0 0.0
    %3071 = vmatpush1.msra.mxu0 0.0
    %3072 = vmatprep.subr.mxu0 0.0
    %3073 = vmatpush1.msra.mxu0 0.0
    %3074 = vmatprep.subr.mxu0 0.0
    %3075 = vmatpush1.msra.mxu0 0.0
    %3076 = vmatprep.subr.mxu0 0.0
    %3077 = vmatpush1.msra.mxu0 0.0
    %3078 = vmatprep.subr.mxu0 0.0
    %3079 = vmatpush1.msra.mxu0 0.0
    %3080 = vmatprep.subr.mxu0 0.0
    %3081 = vmatpush1.msra.mxu0 0.0
    %3082 = vmatprep.subr.mxu0 0.0
    %3083 = vmatpush1.msra.mxu0 0.0
    %3084 = vmatprep.subr.mxu0 0.0
    %3085 = vmatpush1.msra.mxu0 0.0
    %3086 = vmatprep.subr.mxu0 0.0
    %3087 = vmatpush1.msra.mxu0 0.0
    %3088 = vmatprep.subr.mxu0 0.0
    %3089 = vmatpush1.msra.mxu0 0.0
    %3090 = vmatprep.subr.mxu0 0.0
    %3091 = vmatpush1.msra.mxu0 0.0
    %3092 = vmatprep.subr.mxu0 0.0
    %3093 = vmatpush1.msra.mxu0 0.0
    %3094 = vmatprep.subr.mxu0 0.0
    %3095 = vmatpush1.msra.mxu0 0.0
    %3096 = vmatprep.subr.mxu0 0.0
    %3097 = vmatpush1.msra.mxu0 0.0
    %3098 = vmatprep.subr.mxu0 0.0
    %3099 = vmatpush1.msra.mxu0 0.0
    %3100 = vmatprep.subr.mxu0 0.0
    %3101 = vmatpush1.msra.mxu0 0.0
    %3102 = vmatprep.subr.mxu0 0.0
    %3103 = vmatpush1.msra.mxu0 0.0
    %3104 = vmatprep.subr.mxu0 0.0
    %3105 = vmatpush1.msra.mxu0 0.0
    %3106 = vmatprep.subr.mxu0 0.0
    %3107 = vmatpush1.msra.mxu0 0.0
    %3108 = vmatprep.subr.mxu0 0.0
    %3109 = vmatpush1.msra.mxu0 0.0
    %3110 = vmatprep.subr.mxu0 0.0
    %3111 = vmatpush1.msra.mxu0 0.0
    %3112 = vmatprep.mubr.f32.mxu0 0.0
    %3113 = vmatmul.mubr.f32.gmra.mrb[0].mxu0 %v276
    %v3114 = vpop.f32.mrb[0].mxu0
    %v3115 = vadd.f32 0.0, %v3114
    %v3116 = vpop.f32.mrb[0].mxu0
    %3117 = vmatprep.mubr.f32.mxu0 0.0
    %3118 = vmatmul.mubr.f32.gmra.mrb[0].mxu0 %v279
    %v3119 = vpop.f32.mrb[0].mxu0
    %v3120 = vadd.f32 0.0, %v3119
    %v3121 = vpop.f32.mrb[0].mxu0
    %3122 = vmatprep.mubr.f32.mxu0 0.0
    %3123 = vmatmul.mubr.f32.gmra.mrb[0].mxu0 %v282
    %v3124 = vpop.f32.mrb[0].mxu0
    %v3125 = vadd.f32 0.0, %v3124
    %v3126 = vpop.f32.mrb[0].mxu0
    %3127 = vmatprep.mubr.f32.mxu0 0.0
    %3128 = vmatmul.mubr.f32.gmra.mrb[0].mxu0 %v285
    %v3129 = vpop.f32.mrb[0].mxu0
    %v3130 = vadd.f32 0.0, %v3129
    %v3131 = vpop.f32.mrb[0].mxu0
    %3132 = vdwg.mxu0
    %3133 = vmatprep.subr.mxu0 0.0
    %3134 = vmatpush1.msra.mxu0 %v3039
    %3135 = vmatprep.subr.mxu0 0.0
    %3136 = vmatpush1.msra.mxu0 %v3040
    %3137 = vmatprep.subr.mxu0 0.0
    %3138 = vmatpush1.msra.mxu0 %v3041
    %3139 = vmatprep.subr.mxu0 0.0
    %3140 = vmatpush1.msra.mxu0 %v3042
    %3141 = vmatprep.subr.mxu0 0.0
    %3142 = vmatpush1.msra.mxu0 0.0
    %3143 = vmatprep.subr.mxu0 0.0
    %3144 = vmatpush1.msra.mxu0 0.0
    %3145 = vmatprep.subr.mxu0 0.0
    %3146 = vmatpush1.msra.mxu0 0.0
    %3147 = vmatprep.subr.mxu0 0.0
    %3148 = vmatpush1.msra.mxu0 0.0
    %3149 = vmatprep.subr.mxu0 0.0
    %3150 = vmatpush1.msra.mxu0 0.0
    %3151 = vmatprep.subr.mxu0 0.0
    %3152 = vmatpush1.msra.mxu0 0.0
    %3153 = vmatprep.subr.mxu0 0.0
    %3154 = vmatpush1.msra.mxu0 0.0
    %3155 = vmatprep.subr.mxu0 0.0
    %3156 = vmatpush1.msra.mxu0 0.0
    %3157 = vmatprep.subr.mxu0 0.0
    %3158 = vmatpush1.msra.mxu0 0.0
    %3159 = vmatprep.subr.mxu0 0.0
    %3160 = vmatpush1.msra.mxu0 0.0
    %3161 = vmatprep.subr.mxu0 0.0
    %3162 = vmatpush1.msra.mxu0 0.0
    %3163 = vmatprep.subr.mxu0 0.0
    %3164 = vmatpush1.msra.mxu0 0.0
    %3165 = vmatprep.subr.mxu0 0.0
    %3166 = vmatpush1.msra.mxu0 0.0
    %3167 = vmatprep.subr.mxu0 0.0
    %3168 = vmatpush1.msra.mxu0 0.0
    %3169 = vmatprep.subr.mxu0 0.0
    %3170 = vmatpush1.msra.mxu0 0.0
    %3171 = vmatprep.subr.mxu0 0.0
    %3172 = vmatpush1.msra.mxu0 0.0
    %3173 = vmatprep.subr.mxu0 0.0
    %3174 = vmatpush1.msra.mxu0 0.0
    %3175 = vmatprep.subr.mxu0 0.0
    %3176 = vmatpush1.msra.mxu0 0.0
    %3177 = vmatprep.subr.mxu0 0.0
    %3178 = vmatpush1.msra.mxu0 0.0
    %3179 = vmatprep.subr.mxu0 0.0
    %3180 = vmatpush1.msra.mxu0 0.0
    %3181 = vmatprep.subr.mxu0 0.0
    %3182 = vmatpush1.msra.mxu0 0.0
    %3183 = vmatprep.subr.mxu0 0.0
    %3184 = vmatpush1.msra.mxu0 0.0
    %3185 = vmatprep.subr.mxu0 0.0
    %3186 = vmatpush1.msra.mxu0 0.0
    %3187 = vmatprep.subr.mxu0 0.0
    %3188 = vmatpush1.msra.mxu0 0.0
    %3189 = vmatprep.subr.mxu0 0.0
    %3190 = vmatpush1.msra.mxu0 0.0
    %3191 = vmatprep.subr.mxu0 0.0
    %3192 = vmatpush1.msra.mxu0 0.0
    %3193 = vmatprep.subr.mxu0 0.0
    %3194 = vmatpush1.msra.mxu0 0.0
    %3195 = vmatprep.subr.mxu0 0.0
    %3196 = vmatpush1.msra.mxu0 0.0
    %3197 = vmatprep.mubr.f32.mxu0 0.0
    %3198 = vmatmul.mubr.f32.gmra.mrb[0].mxu0 %v2584
    %v3199 = vpop.f32.mrb[0].mxu0
    %v3200 = vadd.f32 %v3115, %v3199
    %v3201 = vpop.f32.mrb[0].mxu0
    %3202 = vmatprep.mubr.f32.mxu0 0.0
    %3203 = vmatmul.mubr.f32.gmra.mrb[0].mxu0 %v2587
    %v3204 = vpop.f32.mrb[0].mxu0
    %v3205 = vadd.f32 %v3120, %v3204
    %v3206 = vpop.f32.mrb[0].mxu0
    %3207 = vmatprep.mubr.f32.mxu0 0.0
    %3208 = vmatmul.mubr.f32.gmra.mrb[0].mxu0 %v2590
    %v3209 = vpop.f32.mrb[0].mxu0
    %v3210 = vadd.f32 %v3125, %v3209
    %v3211 = vpop.f32.mrb[0].mxu0
    %3212 = vmatprep.mubr.f32.mxu0 0.0
    %3213 = vmatmul.mubr.f32.gmra.mrb[0].mxu0 %v2593
    %v3214 = vpop.f32.mrb[0].mxu0
    %v3215 = vadd.f32 %v3130, %v3214
    %v3216 = vpop.f32.mrb[0].mxu0
    %3217 = vdwg.mxu0
    %s3218 = scalar_lea.vmem [#allocation21], 64
    %v3219 = vld [vmem:[%s3218] sm:$0xff]
    %v3220 = vld [vmem:[%s3218 + $0x8] sm:$0xff]
    %v3221 = vld [vmem:[%s3218 + $0x10] sm:$0xff]
    %v3222 = vld [vmem:[%s3218 + $0x18] sm:$0xff]
    %s3223 = scalar_lea.vmem [#allocation22], 64
    %v3224 = vld [vmem:[%s3223] sm:$0xff]
    %v3225 = vld [vmem:[%s3223 + $0x8] sm:$0xff]
    %v3226 = vld [vmem:[%s3223 + $0x10] sm:$0xff]
    %v3227 = vld [vmem:[%s3223 + $0x18] sm:$0xff]
    %3228 = vmatprep.subr.mxu0 0.0
    %3229 = vmatpush1.msra.mxu0 %v3224
    %3230 = vmatprep.subr.mxu0 0.0
    %3231 = vmatpush1.msra.mxu0 %v3225
    %3232 = vmatprep.subr.mxu0 0.0
    %3233 = vmatpush1.msra.mxu0 %v3226
    %3234 = vmatprep.subr.mxu0 0.0
    %3235 = vmatpush1.msra.mxu0 %v3227
    %3236 = vmatprep.subr.mxu0 0.0
    %3237 = vmatpush1.msra.mxu0 0.0
    %3238 = vmatprep.subr.mxu0 0.0
    %3239 = vmatpush1.msra.mxu0 0.0
    %3240 = vmatprep.subr.mxu0 0.0
    %3241 = vmatpush1.msra.mxu0 0.0
    %3242 = vmatprep.subr.mxu0 0.0
    %3243 = vmatpush1.msra.mxu0 0.0
    %3244 = vmatprep.subr.mxu0 0.0
    %3245 = vmatpush1.msra.mxu0 0.0
    %3246 = vmatprep.subr.mxu0 0.0
    %3247 = vmatpush1.msra.mxu0 0.0
    %3248 = vmatprep.subr.mxu0 0.0
    %3249 = vmatpush1.msra.mxu0 0.0
    %3250 = vmatprep.subr.mxu0 0.0
    %3251 = vmatpush1.msra.mxu0 0.0
    %3252 = vmatprep.subr.mxu0 0.0
    %3253 = vmatpush1.msra.mxu0 0.0
    %3254 = vmatprep.subr.mxu0 0.0
    %3255 = vmatpush1.msra.mxu0 0.0
    %3256 = vmatprep.subr.mxu0 0.0
    %3257 = vmatpush1.msra.mxu0 0.0
    %3258 = vmatprep.subr.mxu0 0.0
    %3259 = vmatpush1.msra.mxu0 0.0
    %3260 = vmatprep.subr.mxu0 0.0
    %3261 = vmatpush1.msra.mxu0 0.0
    %3262 = vmatprep.subr.mxu0 0.0
    %3263 = vmatpush1.msra.mxu0 0.0
    %3264 = vmatprep.subr.mxu0 0.0
    %3265 = vmatpush1.msra.mxu0 0.0
    %3266 = vmatprep.subr.mxu0 0.0
    %3267 = vmatpush1.msra.mxu0 0.0
    %3268 = vmatprep.subr.mxu0 0.0
    %3269 = vmatpush1.msra.mxu0 0.0
    %3270 = vmatprep.subr.mxu0 0.0
    %3271 = vmatpush1.msra.mxu0 0.0
    %3272 = vmatprep.subr.mxu0 0.0
    %3273 = vmatpush1.msra.mxu0 0.0
    %3274 = vmatprep.subr.mxu0 0.0
    %3275 = vmatpush1.msra.mxu0 0.0
    %3276 = vmatprep.subr.mxu0 0.0
    %3277 = vmatpush1.msra.mxu0 0.0
    %3278 = vmatprep.subr.mxu0 0.0
    %3279 = vmatpush1.msra.mxu0 0.0
    %3280 = vmatprep.subr.mxu0 0.0
    %3281 = vmatpush1.msra.mxu0 0.0
    %3282 = vmatprep.subr.mxu0 0.0
    %3283 = vmatpush1.msra.mxu0 0.0
    %3284 = vmatprep.subr.mxu0 0.0
    %3285 = vmatpush1.msra.mxu0 0.0
    %3286 = vmatprep.subr.mxu0 0.0
    %3287 = vmatpush1.msra.mxu0 0.0
    %3288 = vmatprep.subr.mxu0 0.0
    %3289 = vmatpush1.msra.mxu0 0.0
    %3290 = vmatprep.subr.mxu0 0.0
    %3291 = vmatpush1.msra.mxu0 0.0
    %3292 = vmatprep.mubr.f32.mxu0 0.0
    %3293 = vmatmul.mubr.f32.gmra.mrb[0].mxu0 %v276
    %v3294 = vpop.f32.mrb[0].mxu0
    %v3295 = vadd.f32 0.0, %v3294
    %v3296 = vpop.f32.mrb[0].mxu0
    %3297 = vmatprep.mubr.f32.mxu0 0.0
    %3298 = vmatmul.mubr.f32.gmra.mrb[0].mxu0 %v279
    %v3299 = vpop.f32.mrb[0].mxu0
    %v3300 = vadd.f32 0.0, %v3299
    %v3301 = vpop.f32.mrb[0].mxu0
    %3302 = vmatprep.mubr.f32.mxu0 0.0
    %3303 = vmatmul.mubr.f32.gmra.mrb[0].mxu0 %v282
    %v3304 = vpop.f32.mrb[0].mxu0
    %v3305 = vadd.f32 0.0, %v3304
    %v3306 = vpop.f32.mrb[0].mxu0
    %3307 = vmatprep.mubr.f32.mxu0 0.0
    %3308 = vmatmul.mubr.f32.gmra.mrb[0].mxu0 %v285
    %v3309 = vpop.f32.mrb[0].mxu0
    %v3310 = vadd.f32 0.0, %v3309
    %v3311 = vpop.f32.mrb[0].mxu0
    %3312 = vdwg.mxu0
    %3313 = vmatprep.subr.mxu0 0.0
    %3314 = vmatpush1.msra.mxu0 %v3219
    %3315 = vmatprep.subr.mxu0 0.0
    %3316 = vmatpush1.msra.mxu0 %v3220
    %3317 = vmatprep.subr.mxu0 0.0
    %3318 = vmatpush1.msra.mxu0 %v3221
    %3319 = vmatprep.subr.mxu0 0.0
    %3320 = vmatpush1.msra.mxu0 %v3222
    %3321 = vmatprep.subr.mxu0 0.0
    %3322 = vmatpush1.msra.mxu0 0.0
    %3323 = vmatprep.subr.mxu0 0.0
    %3324 = vmatpush1.msra.mxu0 0.0
    %3325 = vmatprep.subr.mxu0 0.0
    %3326 = vmatpush1.msra.mxu0 0.0
    %3327 = vmatprep.subr.mxu0 0.0
    %3328 = vmatpush1.msra.mxu0 0.0
    %3329 = vmatprep.subr.mxu0 0.0
    %3330 = vmatpush1.msra.mxu0 0.0
    %3331 = vmatprep.subr.mxu0 0.0
    %3332 = vmatpush1.msra.mxu0 0.0
    %3333 = vmatprep.subr.mxu0 0.0
    %3334 = vmatpush1.msra.mxu0 0.0
    %3335 = vmatprep.subr.mxu0 0.0
    %3336 = vmatpush1.msra.mxu0 0.0
    %3337 = vmatprep.subr.mxu0 0.0
    %3338 = vmatpush1.msra.mxu0 0.0
    %3339 = vmatprep.subr.mxu0 0.0
    %3340 = vmatpush1.msra.mxu0 0.0
    %3341 = vmatprep.subr.mxu0 0.0
    %3342 = vmatpush1.msra.mxu0 0.0
    %3343 = vmatprep.subr.mxu0 0.0
    %3344 = vmatpush1.msra.mxu0 0.0
    %3345 = vmatprep.subr.mxu0 0.0
    %3346 = vmatpush1.msra.mxu0 0.0
    %3347 = vmatprep.subr.mxu0 0.0
    %3348 = vmatpush1.msra.mxu0 0.0
    %3349 = vmatprep.subr.mxu0 0.0
    %3350 = vmatpush1.msra.mxu0 0.0
    %3351 = vmatprep.subr.mxu0 0.0
    %3352 = vmatpush1.msra.mxu0 0.0
    %3353 = vmatprep.subr.mxu0 0.0
    %3354 = vmatpush1.msra.mxu0 0.0
    %3355 = vmatprep.subr.mxu0 0.0
    %3356 = vmatpush1.msra.mxu0 0.0
    %3357 = vmatprep.subr.mxu0 0.0
    %3358 = vmatpush1.msra.mxu0 0.0
    %3359 = vmatprep.subr.mxu0 0.0
    %3360 = vmatpush1.msra.mxu0 0.0
    %3361 = vmatprep.subr.mxu0 0.0
    %3362 = vmatpush1.msra.mxu0 0.0
    %3363 = vmatprep.subr.mxu0 0.0
    %3364 = vmatpush1.msra.mxu0 0.0
    %3365 = vmatprep.subr.mxu0 0.0
    %3366 = vmatpush1.msra.mxu0 0.0
    %3367 = vmatprep.subr.mxu0 0.0
    %3368 = vmatpush1.msra.mxu0 0.0
    %3369 = vmatprep.subr.mxu0 0.0
    %3370 = vmatpush1.msra.mxu0 0.0
    %3371 = vmatprep.subr.mxu0 0.0
    %3372 = vmatpush1.msra.mxu0 0.0
    %3373 = vmatprep.subr.mxu0 0.0
    %3374 = vmatpush1.msra.mxu0 0.0
    %3375 = vmatprep.subr.mxu0 0.0
    %3376 = vmatpush1.msra.mxu0 0.0
    %3377 = vmatprep.mubr.f32.mxu0 0.0
    %3378 = vmatmul.mubr.f32.gmra.mrb[0].mxu0 %v2584
    %v3379 = vpop.f32.mrb[0].mxu0
    %v3380 = vadd.f32 %v3295, %v3379
    %v3381 = vpop.f32.mrb[0].mxu0
    %3382 = vmatprep.mubr.f32.mxu0 0.0
    %3383 = vmatmul.mubr.f32.gmra.mrb[0].mxu0 %v2587
    %v3384 = vpop.f32.mrb[0].mxu0
    %v3385 = vadd.f32 %v3300, %v3384
    %v3386 = vpop.f32.mrb[0].mxu0
    %3387 = vmatprep.mubr.f32.mxu0 0.0
    %3388 = vmatmul.mubr.f32.gmra.mrb[0].mxu0 %v2590
    %v3389 = vpop.f32.mrb[0].mxu0
    %v3390 = vadd.f32 %v3305, %v3389
    %v3391 = vpop.f32.mrb[0].mxu0
    %3392 = vmatprep.mubr.f32.mxu0 0.0
    %3393 = vmatmul.mubr.f32.gmra.mrb[0].mxu0 %v2593
    %v3394 = vpop.f32.mrb[0].mxu0
    %v3395 = vadd.f32 %v3310, %v3394
    %v3396 = vpop.f32.mrb[0].mxu0
    %3397 = vdwg.mxu0
    %v3398 = vld [vmem:[%s21] sm:$0x3f]
    %v3399 = vld [vmem:[%s22] sm:$0x7]
    %v3400 = vld [vmem:[%s9] sm:$0x1]
    %v3401 = vld [vmem:[#allocation18] sm:$0xff]
    %v3402 = vld [vmem:[#allocation18 + $0x8] sm:$0xff]
    %v3403 = vld [vmem:[#allocation18 + $0x10] sm:$0xff]
    %v3404 = vld [vmem:[#allocation18 + $0x18] sm:$0xff]
    %v3405 = vld [vmem:[#allocation19] sm:$0x1]
    %v3406 = vld [vmem:[#allocation24] sm:$0x1]
    %v3407 = vld [vmem:[%s15] sm:$0xff]
    %v3408 = vld [vmem:[%s15 + $0x8] sm:$0xff]
    %v3409 = vld [vmem:[%s15 + $0x10] sm:$0xff]
    %v3410 = vld [vmem:[%s15 + $0x18] sm:$0xff]
    %v3411 = vld [vmem:[%s15 + $0x20] sm:$0xff]
    %v3412 = vld [vmem:[%s15 + $0x28] sm:$0xff]
    %v3413 = vld [vmem:[%s16] sm:$0x1]
    %v3414 = vld [vmem:[%s17] sm:$0x1]
    %v3415 = vld [vmem:[#allocation2] sm:$0x1]
    %v3416 = vld [vmem:[%s19] sm:$0x1]
    %v3417 = vld [vmem:[#allocation3] sm:$0x1]
    %vm3420 = vcmask 1046528
    %v3421 = vrot.slane %v2752, 1
    %v3422 = vrot.slane %v2757, 1
    %v3423 = vsel %vm3420, %v3421, %v3422
    %v3426 = vadd.f32 %v2662, %v3423
    %v3427 = vadd.f32 %v2667, %v3422
    %vm3430 = vcmask 1045504
    %v3431 = vrot.slane %v2842, 2
    %v3432 = vrot.slane %v2847, 2
    %v3433 = vsel %vm3430, %v3431, %v3432
    %v3436 = vadd.f32 %v3426, %v3433
    %v3437 = vadd.f32 %v3427, %v3432
    %v3439 = vlaneseq
    %v3440 = vshrl.u32 %v3439, 7
    %v3441 = vsub.s32 0, %v3440
    %v3442 = vrot.slane %v3400, %v3441
    %v3444 = vadd.f32 %v3436, %v3442
    %v3445 = vadd.f32 %v3437, %v3442
    %v3446 = vmax.f32 %v3444, 0.0
    %v3447 = vmax.f32 %v3445, 0.0
    %v3450 = vrot.slane %v3200, 1
    %v3451 = vrot.slane %v3205, 1
    %v3452 = vsel %vm3420, %v3450, %v3451
    %v3455 = vadd.f32 %v3020, %v3452
    %v3456 = vadd.f32 %v3025, %v3451
    %v3459 = vrot.slane %v3380, 2
    %v3460 = vrot.slane %v3385, 2
    %v3461 = vsel %vm3430, %v3459, %v3460
    %v3464 = vadd.f32 %v3455, %v3461
    %v3465 = vadd.f32 %v3456, %v3460
    %v3467 = vlaneseq
    %v3468 = vshrl.u32 %v3467, 7
    %v3469 = vsub.s32 0, %v3468
    %v3470 = vrot.slane %v3406, %v3469
    %v3472 = vadd.f32 %v3464, %v3470
    %v3473 = vadd.f32 %v3465, %v3470
    %v3474 = vmax.f32 %v3472, 0.0
    %v3475 = vmax.f32 %v3473, 0.0
    %v3478 = vrot.slane %v3446, 1
    %v3479 = vrot.slane %v3447, 1
    %v3480 = vsel %vm3420, %v3478, %v3479
    %v3483 = vmax.f32 %v3446, %v3480
    %v3484 = vmax.f32 %v3447, %v3479
    %v3487 = vrot.slane %v3483, 1
    %v3488 = vrot.slane %v3484, 1
    %v3489 = vsel %vm3420, %v3487, %v3488
    %v3492 = vmax.f32 %v3446, %v3489
    %v3493 = vmax.f32 %v3447, %v3488
    %vm3494 = vcmask 97280
    %v3496 = vsel %vm3494, %v3398, 0
    %vm3498 = vcmask 1043456
    %v3500 = vsel %vm3498, %v3493, 0
    %3502 = vmatprep.subr.mxu0 0.0
    %3503 = vmatpush1.msra.mxu0 %v3492
    %3504 = vmatprep.subr.mxu0 0.0
    %3505 = vmatpush1.msra.mxu0 %v3500
    %3506 = vmatprep.subr.mxu0 0.0
    %3507 = vmatpush1.msra.mxu0 0.0
    %3508 = vmatprep.subr.mxu0 0.0
    %3509 = vmatpush1.msra.mxu0 0.0
    %3510 = vmatprep.subr.mxu0 0.0
    %3511 = vmatpush1.msra.mxu0 0.0
    %3512 = vmatprep.subr.mxu0 0.0
    %3513 = vmatpush1.msra.mxu0 0.0
    %3514 = vmatprep.subr.mxu0 0.0
    %3515 = vmatpush1.msra.mxu0 0.0
    %3516 = vmatprep.subr.mxu0 0.0
    %3517 = vmatpush1.msra.mxu0 0.0
    %3518 = vmatprep.subr.mxu0 0.0
    %3519 = vmatpush1.msra.mxu0 0.0
    %3520 = vmatprep.subr.mxu0 0.0
    %3521 = vmatpush1.msra.mxu0 0.0
    %3522 = vmatprep.subr.mxu0 0.0
    %3523 = vmatpush1.msra.mxu0 0.0
    %3524 = vmatprep.subr.mxu0 0.0
    %3525 = vmatpush1.msra.mxu0 0.0
    %3526 = vmatprep.subr.mxu0 0.0
    %3527 = vmatpush1.msra.mxu0 0.0
    %3528 = vmatprep.subr.mxu0 0.0
    %3529 = vmatpush1.msra.mxu0 0.0
    %3530 = vmatprep.subr.mxu0 0.0
    %3531 = vmatpush1.msra.mxu0 0.0
    %3532 = vmatprep.subr.mxu0 0.0
    %3533 = vmatpush1.msra.mxu0 0.0
    %3534 = vmatprep.subr.mxu0 0.0
    %3535 = vmatpush1.msra.mxu0 0.0
    %3536 = vmatprep.subr.mxu0 0.0
    %3537 = vmatpush1.msra.mxu0 0.0
    %3538 = vmatprep.subr.mxu0 0.0
    %3539 = vmatpush1.msra.mxu0 0.0
    %3540 = vmatprep.subr.mxu0 0.0
    %3541 = vmatpush1.msra.mxu0 0.0
    %3542 = vmatprep.subr.mxu0 0.0
    %3543 = vmatpush1.msra.mxu0 0.0
    %3544 = vmatprep.subr.mxu0 0.0
    %3545 = vmatpush1.msra.mxu0 0.0
    %3546 = vmatprep.subr.mxu0 0.0
    %3547 = vmatpush1.msra.mxu0 0.0
    %3548 = vmatprep.subr.mxu0 0.0
    %3549 = vmatpush1.msra.mxu0 0.0
    %3550 = vmatprep.subr.mxu0 0.0
    %3551 = vmatpush1.msra.mxu0 0.0
    %3552 = vmatprep.subr.mxu0 0.0
    %3553 = vmatpush1.msra.mxu0 0.0
    %3554 = vmatprep.subr.mxu0 0.0
    %3555 = vmatpush1.msra.mxu0 0.0
    %3556 = vmatprep.subr.mxu0 0.0
    %3557 = vmatpush1.msra.mxu0 0.0
    %3558 = vmatprep.subr.mxu0 0.0
    %3559 = vmatpush1.msra.mxu0 0.0
    %3560 = vmatprep.subr.mxu0 0.0
    %3561 = vmatpush1.msra.mxu0 0.0
    %3562 = vmatprep.subr.mxu0 0.0
    %3563 = vmatpush1.msra.mxu0 0.0
    %3564 = vmatprep.subr.mxu0 0.0
    %3565 = vmatpush1.msra.mxu0 0.0
    %3566 = vmatprep.mubr.f32.mxu0 0.0
    %3567 = vmatmul.mubr.f32.gmra.mrb[0].mxu0 %v3496
    %v3568 = vpop.f32.mrb[0].mxu0
    %v3569 = vadd.f32 0.0, %v3568
    %v3570 = vpop.f32.mrb[0].mxu0
    %3571 = vdwg.mxu0
    %v3573 = vlaneseq
    %v3574 = vshrl.u32 %v3573, 7
    %v3575 = vsub.s32 0, %v3574
    %v3576 = vrot.slane %v3405, %v3575
    %v3579 = vsel %vm274, %v3569, 0
    %3581 = vmatprep.subr.mxu0 0.0
    %3582 = vmatpush1.msra.mxu0 %v3401
    %3583 = vmatprep.subr.mxu0 0.0
    %3584 = vmatpush1.msra.mxu0 %v3402
    %3585 = vmatprep.subr.mxu0 0.0
    %3586 = vmatpush1.msra.mxu0 %v3403
    %3587 = vmatprep.subr.mxu0 0.0
    %3588 = vmatpush1.msra.mxu0 %v3404
    %3589 = vmatprep.subr.mxu0 0.0
    %3590 = vmatpush1.msra.mxu0 0.0
    %3591 = vmatprep.subr.mxu0 0.0
    %3592 = vmatpush1.msra.mxu0 0.0
    %3593 = vmatprep.subr.mxu0 0.0
    %3594 = vmatpush1.msra.mxu0 0.0
    %3595 = vmatprep.subr.mxu0 0.0
    %3596 = vmatpush1.msra.mxu0 0.0
    %3597 = vmatprep.subr.mxu0 0.0
    %3598 = vmatpush1.msra.mxu0 0.0
    %3599 = vmatprep.subr.mxu0 0.0
    %3600 = vmatpush1.msra.mxu0 0.0
    %3601 = vmatprep.subr.mxu0 0.0
    %3602 = vmatpush1.msra.mxu0 0.0
    %3603 = vmatprep.subr.mxu0 0.0
    %3604 = vmatpush1.msra.mxu0 0.0
    %3605 = vmatprep.subr.mxu0 0.0
    %3606 = vmatpush1.msra.mxu0 0.0
    %3607 = vmatprep.subr.mxu0 0.0
    %3608 = vmatpush1.msra.mxu0 0.0
    %3609 = vmatprep.subr.mxu0 0.0
    %3610 = vmatpush1.msra.mxu0 0.0
    %3611 = vmatprep.subr.mxu0 0.0
    %3612 = vmatpush1.msra.mxu0 0.0
    %3613 = vmatprep.subr.mxu0 0.0
    %3614 = vmatpush1.msra.mxu0 0.0
    %3615 = vmatprep.subr.mxu0 0.0
    %3616 = vmatpush1.msra.mxu0 0.0
    %3617 = vmatprep.subr.mxu0 0.0
    %3618 = vmatpush1.msra.mxu0 0.0
    %3619 = vmatprep.subr.mxu0 0.0
    %3620 = vmatpush1.msra.mxu0 0.0
    %3621 = vmatprep.subr.mxu0 0.0
    %3622 = vmatpush1.msra.mxu0 0.0
    %3623 = vmatprep.subr.mxu0 0.0
    %3624 = vmatpush1.msra.mxu0 0.0
    %3625 = vmatprep.subr.mxu0 0.0
    %3626 = vmatpush1.msra.mxu0 0.0
    %3627 = vmatprep.subr.mxu0 0.0
    %3628 = vmatpush1.msra.mxu0 0.0
    %3629 = vmatprep.subr.mxu0 0.0
    %3630 = vmatpush1.msra.mxu0 0.0
    %3631 = vmatprep.subr.mxu0 0.0
    %3632 = vmatpush1.msra.mxu0 0.0
    %3633 = vmatprep.subr.mxu0 0.0
    %3634 = vmatpush1.msra.mxu0 0.0
    %3635 = vmatprep.subr.mxu0 0.0
    %3636 = vmatpush1.msra.mxu0 0.0
    %3637 = vmatprep.subr.mxu0 0.0
    %3638 = vmatpush1.msra.mxu0 0.0
    %3639 = vmatprep.subr.mxu0 0.0
    %3640 = vmatpush1.msra.mxu0 0.0
    %3641 = vmatprep.subr.mxu0 0.0
    %3642 = vmatpush1.msra.mxu0 0.0
    %3643 = vmatprep.subr.mxu0 0.0
    %3644 = vmatpush1.msra.mxu0 0.0
    %3645 = vmatprep.mubr.f32.mxu0 0.0
    %3646 = vmatmul.mubr.f32.gmra.mrb[0].mxu0 %v3579
    %v3647 = vpop.f32.mrb[0].mxu0
    %v3648 = vadd.f32 %v3576, %v3647
    %v3649 = vpop.f32.mrb[0].mxu0
    %3650 = vdwg.mxu0
    %v3651 = vmax.f32 %v3648, 0.0
    %v3653 = vrot.slane %v3651, 1
    %v3655 = vmax.f32 %v3651, %v3653
    %vm3656 = vcmask 39936
    %v3658 = vsel %vm3656, %v3399, 0
    %vm3660 = vcmask 1044480
    %v3662 = vsel %vm3660, %v3655, 0
    %3664 = vmatprep.subr.mxu0 0.0
    %3665 = vmatpush1.msra.mxu0 %v3662
    %3666 = vmatprep.subr.mxu0 0.0
    %3667 = vmatpush1.msra.mxu0 0.0
    %3668 = vmatprep.subr.mxu0 0.0
    %3669 = vmatpush1.msra.mxu0 0.0
    %3670 = vmatprep.subr.mxu0 0.0
    %3671 = vmatpush1.msra.mxu0 0.0
    %3672 = vmatprep.subr.mxu0 0.0
    %3673 = vmatpush1.msra.mxu0 0.0
    %3674 = vmatprep.subr.mxu0 0.0
    %3675 = vmatpush1.msra.mxu0 0.0
    %3676 = vmatprep.subr.mxu0 0.0
    %3677 = vmatpush1.msra.mxu0 0.0
    %3678 = vmatprep.subr.mxu0 0.0
    %3679 = vmatpush1.msra.mxu0 0.0
    %3680 = vmatprep.subr.mxu0 0.0
    %3681 = vmatpush1.msra.mxu0 0.0
    %3682 = vmatprep.subr.mxu0 0.0
    %3683 = vmatpush1.msra.mxu0 0.0
    %3684 = vmatprep.subr.mxu0 0.0
    %3685 = vmatpush1.msra.mxu0 0.0
    %3686 = vmatprep.subr.mxu0 0.0
    %3687 = vmatpush1.msra.mxu0 0.0
    %3688 = vmatprep.subr.mxu0 0.0
    %3689 = vmatpush1.msra.mxu0 0.0
    %3690 = vmatprep.subr.mxu0 0.0
    %3691 = vmatpush1.msra.mxu0 0.0
    %3692 = vmatprep.subr.mxu0 0.0
    %3693 = vmatpush1.msra.mxu0 0.0
    %3694 = vmatprep.subr.mxu0 0.0
    %3695 = vmatpush1.msra.mxu0 0.0
    %3696 = vmatprep.subr.mxu0 0.0
    %3697 = vmatpush1.msra.mxu0 0.0
    %3698 = vmatprep.subr.mxu0 0.0
    %3699 = vmatpush1.msra.mxu0 0.0
    %3700 = vmatprep.subr.mxu0 0.0
    %3701 = vmatpush1.msra.mxu0 0.0
    %3702 = vmatprep.subr.mxu0 0.0
    %3703 = vmatpush1.msra.mxu0 0.0
    %3704 = vmatprep.subr.mxu0 0.0
    %3705 = vmatpush1.msra.mxu0 0.0
    %3706 = vmatprep.subr.mxu0 0.0
    %3707 = vmatpush1.msra.mxu0 0.0
    %3708 = vmatprep.subr.mxu0 0.0
    %3709 = vmatpush1.msra.mxu0 0.0
    %3710 = vmatprep.subr.mxu0 0.0
    %3711 = vmatpush1.msra.mxu0 0.0
    %3712 = vmatprep.subr.mxu0 0.0
    %3713 = vmatpush1.msra.mxu0 0.0
    %3714 = vmatprep.subr.mxu0 0.0
    %3715 = vmatpush1.msra.mxu0 0.0
    %3716 = vmatprep.subr.mxu0 0.0
    %3717 = vmatpush1.msra.mxu0 0.0
    %3718 = vmatprep.subr.mxu0 0.0
    %3719 = vmatpush1.msra.mxu0 0.0
    %3720 = vmatprep.subr.mxu0 0.0
    %3721 = vmatpush1.msra.mxu0 0.0
    %3722 = vmatprep.subr.mxu0 0.0
    %3723 = vmatpush1.msra.mxu0 0.0
    %3724 = vmatprep.subr.mxu0 0.0
    %3725 = vmatpush1.msra.mxu0 0.0
    %3726 = vmatprep.subr.mxu0 0.0
    %3727 = vmatpush1.msra.mxu0 0.0
    %3728 = vmatprep.mubr.f32.mxu0 0.0
    %3729 = vmatmul.mubr.f32.gmra.mrb[0].mxu0 %v3658
    %v3730 = vpop.f32.mrb[0].mxu0
    %v3731 = vadd.f32 0.0, %v3730
    %v3732 = vpop.f32.mrb[0].mxu0
    %3733 = vdwg.mxu0
    %v3736 = vrot.slane %v3474, 1
    %v3737 = vrot.slane %v3475, 1
    %v3738 = vsel %vm3420, %v3736, %v3737
    %v3741 = vmax.f32 %v3474, %v3738
    %v3742 = vmax.f32 %v3475, %v3737
    %v3745 = vrot.slane %v3741, 1
    %v3746 = vrot.slane %v3742, 1
    %v3747 = vsel %vm3420, %v3745, %v3746
    %v3750 = vmax.f32 %v3474, %v3747
    %v3751 = vmax.f32 %v3475, %v3746
    %v3753 = vsel %vm3498, %v3751, 0
    %3755 = vmatprep.subr.mxu0 0.0
    %3756 = vmatpush1.msra.mxu0 %v3750
    %3757 = vmatprep.subr.mxu0 0.0
    %3758 = vmatpush1.msra.mxu0 %v3753
    %3759 = vmatprep.subr.mxu0 0.0
    %3760 = vmatpush1.msra.mxu0 0.0
    %3761 = vmatprep.subr.mxu0 0.0
    %3762 = vmatpush1.msra.mxu0 0.0
    %3763 = vmatprep.subr.mxu0 0.0
    %3764 = vmatpush1.msra.mxu0 0.0
    %3765 = vmatprep.subr.mxu0 0.0
    %3766 = vmatpush1.msra.mxu0 0.0
    %3767 = vmatprep.subr.mxu0 0.0
    %3768 = vmatpush1.msra.mxu0 0.0
    %3769 = vmatprep.subr.mxu0 0.0
    %3770 = vmatpush1.msra.mxu0 0.0
    %3771 = vmatprep.subr.mxu0 0.0
    %3772 = vmatpush1.msra.mxu0 0.0
    %3773 = vmatprep.subr.mxu0 0.0
    %3774 = vmatpush1.msra.mxu0 0.0
    %3775 = vmatprep.subr.mxu0 0.0
    %3776 = vmatpush1.msra.mxu0 0.0
    %3777 = vmatprep.subr.mxu0 0.0
    %3778 = vmatpush1.msra.mxu0 0.0
    %3779 = vmatprep.subr.mxu0 0.0
    %3780 = vmatpush1.msra.mxu0 0.0
    %3781 = vmatprep.subr.mxu0 0.0
    %3782 = vmatpush1.msra.mxu0 0.0
    %3783 = vmatprep.subr.mxu0 0.0
    %3784 = vmatpush1.msra.mxu0 0.0
    %3785 = vmatprep.subr.mxu0 0.0
    %3786 = vmatpush1.msra.mxu0 0.0
    %3787 = vmatprep.subr.mxu0 0.0
    %3788 = vmatpush1.msra.mxu0 0.0
    %3789 = vmatprep.subr.mxu0 0.0
    %3790 = vmatpush1.msra.mxu0 0.0
    %3791 = vmatprep.subr.mxu0 0.0
    %3792 = vmatpush1.msra.mxu0 0.0
    %3793 = vmatprep.subr.mxu0 0.0
    %3794 = vmatpush1.msra.mxu0 0.0
    %3795 = vmatprep.subr.mxu0 0.0
    %3796 = vmatpush1.msra.mxu0 0.0
    %3797 = vmatprep.subr.mxu0 0.0
    %3798 = vmatpush1.msra.mxu0 0.0
    %3799 = vmatprep.subr.mxu0 0.0
    %3800 = vmatpush1.msra.mxu0 0.0
    %3801 = vmatprep.subr.mxu0 0.0
    %3802 = vmatpush1.msra.mxu0 0.0
    %3803 = vmatprep.subr.mxu0 0.0
    %3804 = vmatpush1.msra.mxu0 0.0
    %3805 = vmatprep.subr.mxu0 0.0
    %3806 = vmatpush1.msra.mxu0 0.0
    %3807 = vmatprep.subr.mxu0 0.0
    %3808 = vmatpush1.msra.mxu0 0.0
    %3809 = vmatprep.subr.mxu0 0.0
    %3810 = vmatpush1.msra.mxu0 0.0
    %3811 = vmatprep.subr.mxu0 0.0
    %3812 = vmatpush1.msra.mxu0 0.0
    %3813 = vmatprep.subr.mxu0 0.0
    %3814 = vmatpush1.msra.mxu0 0.0
    %3815 = vmatprep.subr.mxu0 0.0
    %3816 = vmatpush1.msra.mxu0 0.0
    %3817 = vmatprep.subr.mxu0 0.0
    %3818 = vmatpush1.msra.mxu0 0.0
    %3819 = vmatprep.mubr.f32.mxu0 0.0
    %3820 = vmatmul.mubr.f32.gmra.mrb[0].mxu0 %v3496
    %v3821 = vpop.f32.mrb[0].mxu0
    %v3822 = vadd.f32 0.0, %v3821
    %v3823 = vpop.f32.mrb[0].mxu0
    %3824 = vdwg.mxu0
    %v3826 = vlaneseq
    %v3827 = vshrl.u32 %v3826, 7
    %v3828 = vsub.s32 0, %v3827
    %v3829 = vrot.slane %v3413, %v3828
    %vm3831 = vcmask 392192
    %v3833 = vsel %vm3831, %v3822, 0
    %3835 = vmatprep.subr.mxu0 0.0
    %3836 = vmatpush1.msra.mxu0 %v3407
    %3837 = vmatprep.subr.mxu0 0.0
    %3838 = vmatpush1.msra.mxu0 %v3408
    %3839 = vmatprep.subr.mxu0 0.0
    %3840 = vmatpush1.msra.mxu0 %v3409
    %3841 = vmatprep.subr.mxu0 0.0
    %3842 = vmatpush1.msra.mxu0 %v3410
    %3843 = vmatprep.subr.mxu0 0.0
    %3844 = vmatpush1.msra.mxu0 %v3411
    %3845 = vmatprep.subr.mxu0 0.0
    %3846 = vmatpush1.msra.mxu0 %v3412
    %3847 = vmatprep.subr.mxu0 0.0
    %3848 = vmatpush1.msra.mxu0 0.0
    %3849 = vmatprep.subr.mxu0 0.0
    %3850 = vmatpush1.msra.mxu0 0.0
    %3851 = vmatprep.subr.mxu0 0.0
    %3852 = vmatpush1.msra.mxu0 0.0
    %3853 = vmatprep.subr.mxu0 0.0
    %3854 = vmatpush1.msra.mxu0 0.0
    %3855 = vmatprep.subr.mxu0 0.0
    %3856 = vmatpush1.msra.mxu0 0.0
    %3857 = vmatprep.subr.mxu0 0.0
    %3858 = vmatpush1.msra.mxu0 0.0
    %3859 = vmatprep.subr.mxu0 0.0
    %3860 = vmatpush1.msra.mxu0 0.0
    %3861 = vmatprep.subr.mxu0 0.0
    %3862 = vmatpush1.msra.mxu0 0.0
    %3863 = vmatprep.subr.mxu0 0.0
    %3864 = vmatpush1.msra.mxu0 0.0
    %3865 = vmatprep.subr.mxu0 0.0
    %3866 = vmatpush1.msra.mxu0 0.0
    %3867 = vmatprep.subr.mxu0 0.0
    %3868 = vmatpush1.msra.mxu0 0.0
    %3869 = vmatprep.subr.mxu0 0.0
    %3870 = vmatpush1.msra.mxu0 0.0
    %3871 = vmatprep.subr.mxu0 0.0
    %3872 = vmatpush1.msra.mxu0 0.0
    %3873 = vmatprep.subr.mxu0 0.0
    %3874 = vmatpush1.msra.mxu0 0.0
    %3875 = vmatprep.subr.mxu0 0.0
    %3876 = vmatpush1.msra.mxu0 0.0
    %3877 = vmatprep.subr.mxu0 0.0
    %3878 = vmatpush1.msra.mxu0 0.0
    %3879 = vmatprep.subr.mxu0 0.0
    %3880 = vmatpush1.msra.mxu0 0.0
    %3881 = vmatprep.subr.mxu0 0.0
    %3882 = vmatpush1.msra.mxu0 0.0
    %3883 = vmatprep.subr.mxu0 0.0
    %3884 = vmatpush1.msra.mxu0 0.0
    %3885 = vmatprep.subr.mxu0 0.0
    %3886 = vmatpush1.msra.mxu0 0.0
    %3887 = vmatprep.subr.mxu0 0.0
    %3888 = vmatpush1.msra.mxu0 0.0
    %3889 = vmatprep.subr.mxu0 0.0
    %3890 = vmatpush1.msra.mxu0 0.0
    %3891 = vmatprep.subr.mxu0 0.0
    %3892 = vmatpush1.msra.mxu0 0.0
    %3893 = vmatprep.subr.mxu0 0.0
    %3894 = vmatpush1.msra.mxu0 0.0
    %3895 = vmatprep.subr.mxu0 0.0
    %3896 = vmatpush1.msra.mxu0 0.0
    %3897 = vmatprep.subr.mxu0 0.0
    %3898 = vmatpush1.msra.mxu0 0.0
    %3899 = vmatprep.mubr.f32.mxu0 0.0
    %3900 = vmatmul.mubr.f32.gmra.mrb[0].mxu0 %v3833
    %v3901 = vpop.f32.mrb[0].mxu0
    %v3902 = vadd.f32 %v3829, %v3901
    %v3903 = vpop.f32.mrb[0].mxu0
    %3904 = vdwg.mxu0
    %v3905 = vmax.f32 %v3902, 0.0
    %v3907 = vrot.slane %v3905, 1
    %v3909 = vmax.f32 %v3905, %v3907
    %v3911 = vsel %vm3660, %v3909, 0
    %3913 = vmatprep.subr.mxu0 0.0
    %3914 = vmatpush1.msra.mxu0 %v3911
    %3915 = vmatprep.subr.mxu0 0.0
    %3916 = vmatpush1.msra.mxu0 0.0
    %3917 = vmatprep.subr.mxu0 0.0
    %3918 = vmatpush1.msra.mxu0 0.0
    %3919 = vmatprep.subr.mxu0 0.0
    %3920 = vmatpush1.msra.mxu0 0.0
    %3921 = vmatprep.subr.mxu0 0.0
    %3922 = vmatpush1.msra.mxu0 0.0
    %3923 = vmatprep.subr.mxu0 0.0
    %3924 = vmatpush1.msra.mxu0 0.0
    %3925 = vmatprep.subr.mxu0 0.0
    %3926 = vmatpush1.msra.mxu0 0.0
    %3927 = vmatprep.subr.mxu0 0.0
    %3928 = vmatpush1.msra.mxu0 0.0
    %3929 = vmatprep.subr.mxu0 0.0
    %3930 = vmatpush1.msra.mxu0 0.0
    %3931 = vmatprep.subr.mxu0 0.0
    %3932 = vmatpush1.msra.mxu0 0.0
    %3933 = vmatprep.subr.mxu0 0.0
    %3934 = vmatpush1.msra.mxu0 0.0
    %3935 = vmatprep.subr.mxu0 0.0
    %3936 = vmatpush1.msra.mxu0 0.0
    %3937 = vmatprep.subr.mxu0 0.0
    %3938 = vmatpush1.msra.mxu0 0.0
    %3939 = vmatprep.subr.mxu0 0.0
    %3940 = vmatpush1.msra.mxu0 0.0
    %3941 = vmatprep.subr.mxu0 0.0
    %3942 = vmatpush1.msra.mxu0 0.0
    %3943 = vmatprep.subr.mxu0 0.0
    %3944 = vmatpush1.msra.mxu0 0.0
    %3945 = vmatprep.subr.mxu0 0.0
    %3946 = vmatpush1.msra.mxu0 0.0
    %3947 = vmatprep.subr.mxu0 0.0
    %3948 = vmatpush1.msra.mxu0 0.0
    %3949 = vmatprep.subr.mxu0 0.0
    %3950 = vmatpush1.msra.mxu0 0.0
    %3951 = vmatprep.subr.mxu0 0.0
    %3952 = vmatpush1.msra.mxu0 0.0
    %3953 = vmatprep.subr.mxu0 0.0
    %3954 = vmatpush1.msra.mxu0 0.0
    %3955 = vmatprep.subr.mxu0 0.0
    %3956 = vmatpush1.msra.mxu0 0.0
    %3957 = vmatprep.subr.mxu0 0.0
    %3958 = vmatpush1.msra.mxu0 0.0
    %3959 = vmatprep.subr.mxu0 0.0
    %3960 = vmatpush1.msra.mxu0 0.0
    %3961 = vmatprep.subr.mxu0 0.0
    %3962 = vmatpush1.msra.mxu0 0.0
    %3963 = vmatprep.subr.mxu0 0.0
    %3964 = vmatpush1.msra.mxu0 0.0
    %3965 = vmatprep.subr.mxu0 0.0
    %3966 = vmatpush1.msra.mxu0 0.0
    %3967 = vmatprep.subr.mxu0 0.0
    %3968 = vmatpush1.msra.mxu0 0.0
    %3969 = vmatprep.subr.mxu0 0.0
    %3970 = vmatpush1.msra.mxu0 0.0
    %3971 = vmatprep.subr.mxu0 0.0
    %3972 = vmatpush1.msra.mxu0 0.0
    %3973 = vmatprep.subr.mxu0 0.0
    %3974 = vmatpush1.msra.mxu0 0.0
    %3975 = vmatprep.subr.mxu0 0.0
    %3976 = vmatpush1.msra.mxu0 0.0
    %3977 = vmatprep.mubr.f32.mxu0 0.0
    %3978 = vmatmul.mubr.f32.gmra.mrb[0].mxu0 %v3658
    %v3979 = vpop.f32.mrb[0].mxu0
    %v3980 = vadd.f32 0.0, %v3979
    %v3981 = vpop.f32.mrb[0].mxu0
    %3982 = vdwg.mxu0
    %v3984 = vlaneseq
    %v3985 = vshrl.u32 %v3984, 7
    %v3986 = vsub.s32 0, %v3985
    %v3987 = vrot.slane %v3414, %v3986
    %v3989 = vmul.f32 %v3731, %v3987
    %vm3990 = vcmask 256000
    %v3991 = vsel %vm3990, %v3989, 0.0
    %3992 = vadd.xlane.f32.xlu0 %v3991
    %v3993 = vpop.xlane.xlu0 %3992
    %v3995 = vlaneseq
    %v3996 = vshrl.u32 %v3995, 7
    %v3997 = vsub.s32 0, %v3996
    %v3998 = vrot.slane %v3415, %v3997
    %v4000 = vadd.f32 %v3993, %v3998
    %v4002 = vlaneseq
    %v4003 = vshrl.u32 %v4002, 7
    %v4004 = vsub.s32 0, %v4003
    %v4005 = vrot.slane %v3416, %v4004
    %v4007 = vmul.f32 %v3980, %v4005
    %vm4008 = vcmask 387072
    %v4009 = vsel %vm4008, %v4007, 0.0
    %4010 = vadd.xlane.f32.xlu0 %v4009
    %v4011 = vpop.xlane.xlu0 %4010
    %v4013 = vlaneseq
    %v4014 = vshrl.u32 %v4013, 7
    %v4015 = vsub.s32 0, %v4014
    %v4016 = vrot.slane %v3417, %v4015
    %v4018 = vadd.f32 %v4011, %v4016
    %v4019 = vmul.f32 %v4000, %v4018
    %vm4020 = vcmask 2048
    %v4021 = vsel %vm4020, %v4019, 0.0
    %v4022 = vrot.slane %v4021, 4
    %v4023 = vadd.f32 %v4021, %v4022
    %v4024 = vrot.slane %v4023, 2
    %v4025 = vadd.f32 %v4023, %v4024
    %v4026 = vrot.slane %v4025, 1
    %v4027 = vadd.f32 %v4025, %v4026
    %v4028 = vrcp.pop 3.0
    %v4029 = vmul.f32 %v4027, %v4028
    %v4030 = vxor.u32 %v4029, 2147483648
    %v4031 = vmul.f32 %v4030, 1.442695
    %v4032 = vpow.pop %v4031
    %v4033 = vadd.f32 %v4032, 1.0
    %v4034 = vrcp.pop %v4033
    %v4035 = vmul.f32 1.0, %v4034
    %4037 = vset.pattern.permute.xlu0 0
    %4038 = vperm.xlu0 %4037, %v4035
    %v4039 = vpop.permute.xlu0 %4038
    %4041 = vst [vmem:[#allocation25] sm:$0xff] %v4039
    %v4044 = vrot.slane %v2762, 1
    %v4045 = vrot.slane %v2767, 1
    %v4046 = vsel %vm3420, %v4044, %v4045
    %v4049 = vadd.f32 %v2672, %v4046
    %v4050 = vadd.f32 %v2677, %v4045
    %v4053 = vrot.slane %v2852, 2
    %v4054 = vrot.slane %v2857, 2
    %v4055 = vsel %vm3430, %v4053, %v4054
    %v4058 = vadd.f32 %v4049, %v4055
    %v4059 = vadd.f32 %v4050, %v4054
    %v4060 = vadd.f32 %v4058, %v3442
    %v4061 = vadd.f32 %v4059, %v3442
    %v4062 = vmax.f32 %v4060, 0.0
    %v4063 = vmax.f32 %v4061, 0.0
    %v4066 = vrot.slane %v3210, 1
    %v4067 = vrot.slane %v3215, 1
    %v4068 = vsel %vm3420, %v4066, %v4067
    %v4071 = vadd.f32 %v3030, %v4068
    %v4072 = vadd.f32 %v3035, %v4067
    %v4075 = vrot.slane %v3390, 2
    %v4076 = vrot.slane %v3395, 2
    %v4077 = vsel %vm3430, %v4075, %v4076
    %v4080 = vadd.f32 %v4071, %v4077
    %v4081 = vadd.f32 %v4072, %v4076
    %v4082 = vadd.f32 %v4080, %v3470
    %v4083 = vadd.f32 %v4081, %v3470
    %v4084 = vmax.f32 %v4082, 0.0
    %v4085 = vmax.f32 %v4083, 0.0
    %v4088 = vrot.slane %v4062, 1
    %v4089 = vrot.slane %v4063, 1
    %v4090 = vsel %vm3420, %v4088, %v4089
    %v4093 = vmax.f32 %v4062, %v4090
    %v4094 = vmax.f32 %v4063, %v4089
    %v4097 = vrot.slane %v4093, 1
    %v4098 = vrot.slane %v4094, 1
    %v4099 = vsel %vm3420, %v4097, %v4098
    %v4102 = vmax.f32 %v4062, %v4099
    %v4103 = vmax.f32 %v4063, %v4098
    %v4105 = vsel %vm3498, %v4103, 0
    %4107 = vmatprep.subr.mxu0 0.0
    %4108 = vmatpush1.msra.mxu0 %v4102
    %4109 = vmatprep.subr.mxu0 0.0
    %4110 = vmatpush1.msra.mxu0 %v4105
    %4111 = vmatprep.subr.mxu0 0.0
    %4112 = vmatpush1.msra.mxu0 0.0
    %4113 = vmatprep.subr.mxu0 0.0
    %4114 = vmatpush1.msra.mxu0 0.0
    %4115 = vmatprep.subr.mxu0 0.0
    %4116 = vmatpush1.msra.mxu0 0.0
    %4117 = vmatprep.subr.mxu0 0.0
    %4118 = vmatpush1.msra.mxu0 0.0
    %4119 = vmatprep.subr.mxu0 0.0
    %4120 = vmatpush1.msra.mxu0 0.0
    %4121 = vmatprep.subr.mxu0 0.0
    %4122 = vmatpush1.msra.mxu0 0.0
    %4123 = vmatprep.subr.mxu0 0.0
    %4124 = vmatpush1.msra.mxu0 0.0
    %4125 = vmatprep.subr.mxu0 0.0
    %4126 = vmatpush1.msra.mxu0 0.0
    %4127 = vmatprep.subr.mxu0 0.0
    %4128 = vmatpush1.msra.mxu0 0.0
    %4129 = vmatprep.subr.mxu0 0.0
    %4130 = vmatpush1.msra.mxu0 0.0
    %4131 = vmatprep.subr.mxu0 0.0
    %4132 = vmatpush1.msra.mxu0 0.0
    %4133 = vmatprep.subr.mxu0 0.0
    %4134 = vmatpush1.msra.mxu0 0.0
    %4135 = vmatprep.subr.mxu0 0.0
    %4136 = vmatpush1.msra.mxu0 0.0
    %4137 = vmatprep.subr.mxu0 0.0
    %4138 = vmatpush1.msra.mxu0 0.0
    %4139 = vmatprep.subr.mxu0 0.0
    %4140 = vmatpush1.msra.mxu0 0.0
    %4141 = vmatprep.subr.mxu0 0.0
    %4142 = vmatpush1.msra.mxu0 0.0
    %4143 = vmatprep.subr.mxu0 0.0
    %4144 = vmatpush1.msra.mxu0 0.0
    %4145 = vmatprep.subr.mxu0 0.0
    %4146 = vmatpush1.msra.mxu0 0.0
    %4147 = vmatprep.subr.mxu0 0.0
    %4148 = vmatpush1.msra.mxu0 0.0
    %4149 = vmatprep.subr.mxu0 0.0
    %4150 = vmatpush1.msra.mxu0 0.0
    %4151 = vmatprep.subr.mxu0 0.0
    %4152 = vmatpush1.msra.mxu0 0.0
    %4153 = vmatprep.subr.mxu0 0.0
    %4154 = vmatpush1.msra.mxu0 0.0
    %4155 = vmatprep.subr.mxu0 0.0
    %4156 = vmatpush1.msra.mxu0 0.0
    %4157 = vmatprep.subr.mxu0 0.0
    %4158 = vmatpush1.msra.mxu0 0.0
    %4159 = vmatprep.subr.mxu0 0.0
    %4160 = vmatpush1.msra.mxu0 0.0
    %4161 = vmatprep.subr.mxu0 0.0
    %4162 = vmatpush1.msra.mxu0 0.0
    %4163 = vmatprep.subr.mxu0 0.0
    %4164 = vmatpush1.msra.mxu0 0.0
    %4165 = vmatprep.subr.mxu0 0.0
    %4166 = vmatpush1.msra.mxu0 0.0
    %4167 = vmatprep.subr.mxu0 0.0
    %4168 = vmatpush1.msra.mxu0 0.0
    %4169 = vmatprep.subr.mxu0 0.0
    %4170 = vmatpush1.msra.mxu0 0.0
    %4171 = vmatprep.mubr.f32.mxu0 0.0
    %4172 = vmatmul.mubr.f32.gmra.mrb[0].mxu0 %v3496
    %v4173 = vpop.f32.mrb[0].mxu0
    %v4174 = vadd.f32 0.0, %v4173
    %v4175 = vpop.f32.mrb[0].mxu0
    %4176 = vdwg.mxu0
    %v4178 = vsel %vm274, %v4174, 0
    %4180 = vmatprep.subr.mxu0 0.0
    %4181 = vmatpush1.msra.mxu0 %v3401
    %4182 = vmatprep.subr.mxu0 0.0
    %4183 = vmatpush1.msra.mxu0 %v3402
    %4184 = vmatprep.subr.mxu0 0.0
    %4185 = vmatpush1.msra.mxu0 %v3403
    %4186 = vmatprep.subr.mxu0 0.0
    %4187 = vmatpush1.msra.mxu0 %v3404
    %4188 = vmatprep.subr.mxu0 0.0
    %4189 = vmatpush1.msra.mxu0 0.0
    %4190 = vmatprep.subr.mxu0 0.0
    %4191 = vmatpush1.msra.mxu0 0.0
    %4192 = vmatprep.subr.mxu0 0.0
    %4193 = vmatpush1.msra.mxu0 0.0
    %4194 = vmatprep.subr.mxu0 0.0
    %4195 = vmatpush1.msra.mxu0 0.0
    %4196 = vmatprep.subr.mxu0 0.0
    %4197 = vmatpush1.msra.mxu0 0.0
    %4198 = vmatprep.subr.mxu0 0.0
    %4199 = vmatpush1.msra.mxu0 0.0
    %4200 = vmatprep.subr.mxu0 0.0
    %4201 = vmatpush1.msra.mxu0 0.0
    %4202 = vmatprep.subr.mxu0 0.0
    %4203 = vmatpush1.msra.mxu0 0.0
    %4204 = vmatprep.subr.mxu0 0.0
    %4205 = vmatpush1.msra.mxu0 0.0
    %4206 = vmatprep.subr.mxu0 0.0
    %4207 = vmatpush1.msra.mxu0 0.0
    %4208 = vmatprep.subr.mxu0 0.0
    %4209 = vmatpush1.msra.mxu0 0.0
    %4210 = vmatprep.subr.mxu0 0.0
    %4211 = vmatpush1.msra.mxu0 0.0
    %4212 = vmatprep.subr.mxu0 0.0
    %4213 = vmatpush1.msra.mxu0 0.0
    %4214 = vmatprep.subr.mxu0 0.0
    %4215 = vmatpush1.msra.mxu0 0.0
    %4216 = vmatprep.subr.mxu0 0.0
    %4217 = vmatpush1.msra.mxu0 0.0
    %4218 = vmatprep.subr.mxu0 0.0
    %4219 = vmatpush1.msra.mxu0 0.0
    %4220 = vmatprep.subr.mxu0 0.0
    %4221 = vmatpush1.msra.mxu0 0.0
    %4222 = vmatprep.subr.mxu0 0.0
    %4223 = vmatpush1.msra.mxu0 0.0
    %4224 = vmatprep.subr.mxu0 0.0
    %4225 = vmatpush1.msra.mxu0 0.0
    %4226 = vmatprep.subr.mxu0 0.0
    %4227 = vmatpush1.msra.mxu0 0.0
    %4228 = vmatprep.subr.mxu0 0.0
    %4229 = vmatpush1.msra.mxu0 0.0
    %4230 = vmatprep.subr.mxu0 0.0
    %4231 = vmatpush1.msra.mxu0 0.0
    %4232 = vmatprep.subr.mxu0 0.0
    %4233 = vmatpush1.msra.mxu0 0.0
    %4234 = vmatprep.subr.mxu0 0.0
    %4235 = vmatpush1.msra.mxu0 0.0
    %4236 = vmatprep.subr.mxu0 0.0
    %4237 = vmatpush1.msra.mxu0 0.0
    %4238 = vmatprep.subr.mxu0 0.0
    %4239 = vmatpush1.msra.mxu0 0.0
    %4240 = vmatprep.subr.mxu0 0.0
    %4241 = vmatpush1.msra.mxu0 0.0
    %4242 = vmatprep.subr.mxu0 0.0
    %4243 = vmatpush1.msra.mxu0 0.0
    %4244 = vmatprep.mubr.f32.mxu0 0.0
    %4245 = vmatmul.mubr.f32.gmra.mrb[0].mxu0 %v4178
    %v4246 = vpop.f32.mrb[0].mxu0
    %v4247 = vadd.f32 %v3576, %v4246
    %v4248 = vpop.f32.mrb[0].mxu0
    %4249 = vdwg.mxu0
    %v4250 = vmax.f32 %v4247, 0.0
    %v4252 = vrot.slane %v4250, 1
    %v4254 = vmax.f32 %v4250, %v4252
    %v4256 = vsel %vm3660, %v4254, 0
    %4258 = vmatprep.subr.mxu0 0.0
    %4259 = vmatpush1.msra.mxu0 %v4256
    %4260 = vmatprep.subr.mxu0 0.0
    %4261 = vmatpush1.msra.mxu0 0.0
    %4262 = vmatprep.subr.mxu0 0.0
    %4263 = vmatpush1.msra.mxu0 0.0
    %4264 = vmatprep.subr.mxu0 0.0
    %4265 = vmatpush1.msra.mxu0 0.0
    %4266 = vmatprep.subr.mxu0 0.0
    %4267 = vmatpush1.msra.mxu0 0.0
    %4268 = vmatprep.subr.mxu0 0.0
    %4269 = vmatpush1.msra.mxu0 0.0
    %4270 = vmatprep.subr.mxu0 0.0
    %4271 = vmatpush1.msra.mxu0 0.0
    %4272 = vmatprep.subr.mxu0 0.0
    %4273 = vmatpush1.msra.mxu0 0.0
    %4274 = vmatprep.subr.mxu0 0.0
    %4275 = vmatpush1.msra.mxu0 0.0
    %4276 = vmatprep.subr.mxu0 0.0
    %4277 = vmatpush1.msra.mxu0 0.0
    %4278 = vmatprep.subr.mxu0 0.0
    %4279 = vmatpush1.msra.mxu0 0.0
    %4280 = vmatprep.subr.mxu0 0.0
    %4281 = vmatpush1.msra.mxu0 0.0
    %4282 = vmatprep.subr.mxu0 0.0
    %4283 = vmatpush1.msra.mxu0 0.0
    %4284 = vmatprep.subr.mxu0 0.0
    %4285 = vmatpush1.msra.mxu0 0.0
    %4286 = vmatprep.subr.mxu0 0.0
    %4287 = vmatpush1.msra.mxu0 0.0
    %4288 = vmatprep.subr.mxu0 0.0
    %4289 = vmatpush1.msra.mxu0 0.0
    %4290 = vmatprep.subr.mxu0 0.0
    %4291 = vmatpush1.msra.mxu0 0.0
    %4292 = vmatprep.subr.mxu0 0.0
    %4293 = vmatpush1.msra.mxu0 0.0
    %4294 = vmatprep.subr.mxu0 0.0
    %4295 = vmatpush1.msra.mxu0 0.0
    %4296 = vmatprep.subr.mxu0 0.0
    %4297 = vmatpush1.msra.mxu0 0.0
    %4298 = vmatprep.subr.mxu0 0.0
    %4299 = vmatpush1.msra.mxu0 0.0
    %4300 = vmatprep.subr.mxu0 0.0
    %4301 = vmatpush1.msra.mxu0 0.0
    %4302 = vmatprep.subr.mxu0 0.0
    %4303 = vmatpush1.msra.mxu0 0.0
    %4304 = vmatprep.subr.mxu0 0.0
    %4305 = vmatpush1.msra.mxu0 0.0
    %4306 = vmatprep.subr.mxu0 0.0
    %4307 = vmatpush1.msra.mxu0 0.0
    %4308 = vmatprep.subr.mxu0 0.0
    %4309 = vmatpush1.msra.mxu0 0.0
    %4310 = vmatprep.subr.mxu0 0.0
    %4311 = vmatpush1.msra.mxu0 0.0
    %4312 = vmatprep.subr.mxu0 0.0
    %4313 = vmatpush1.msra.mxu0 0.0
    %4314 = vmatprep.subr.mxu0 0.0
    %4315 = vmatpush1.msra.mxu0 0.0
    %4316 = vmatprep.subr.mxu0 0.0
    %4317 = vmatpush1.msra.mxu0 0.0
    %4318 = vmatprep.subr.mxu0 0.0
    %4319 = vmatpush1.msra.mxu0 0.0
    %4320 = vmatprep.subr.mxu0 0.0
    %4321 = vmatpush1.msra.mxu0 0.0
    %4322 = vmatprep.mubr.f32.mxu0 0.0
    %4323 = vmatmul.mubr.f32.gmra.mrb[0].mxu0 %v3658
    %v4324 = vpop.f32.mrb[0].mxu0
    %v4325 = vadd.f32 0.0, %v4324
    %v4326 = vpop.f32.mrb[0].mxu0
    %4327 = vdwg.mxu0
    %v4330 = vrot.slane %v4084, 1
    %v4331 = vrot.slane %v4085, 1
    %v4332 = vsel %vm3420, %v4330, %v4331
    %v4335 = vmax.f32 %v4084, %v4332
    %v4336 = vmax.f32 %v4085, %v4331
    %v4339 = vrot.slane %v4335, 1
    %v4340 = vrot.slane %v4336, 1
    %v4341 = vsel %vm3420, %v4339, %v4340
    %v4344 = vmax.f32 %v4084, %v4341
    %v4345 = vmax.f32 %v4085, %v4340
    %v4347 = vsel %vm3498, %v4345, 0
    %4349 = vmatprep.subr.mxu0 0.0
    %4350 = vmatpush1.msra.mxu0 %v4344
    %4351 = vmatprep.subr.mxu0 0.0
    %4352 = vmatpush1.msra.mxu0 %v4347
    %4353 = vmatprep.subr.mxu0 0.0
    %4354 = vmatpush1.msra.mxu0 0.0
    %4355 = vmatprep.subr.mxu0 0.0
    %4356 = vmatpush1.msra.mxu0 0.0
    %4357 = vmatprep.subr.mxu0 0.0
    %4358 = vmatpush1.msra.mxu0 0.0
    %4359 = vmatprep.subr.mxu0 0.0
    %4360 = vmatpush1.msra.mxu0 0.0
    %4361 = vmatprep.subr.mxu0 0.0
    %4362 = vmatpush1.msra.mxu0 0.0
    %4363 = vmatprep.subr.mxu0 0.0
    %4364 = vmatpush1.msra.mxu0 0.0
    %4365 = vmatprep.subr.mxu0 0.0
    %4366 = vmatpush1.msra.mxu0 0.0
    %4367 = vmatprep.subr.mxu0 0.0
    %4368 = vmatpush1.msra.mxu0 0.0
    %4369 = vmatprep.subr.mxu0 0.0
    %4370 = vmatpush1.msra.mxu0 0.0
    %4371 = vmatprep.subr.mxu0 0.0
    %4372 = vmatpush1.msra.mxu0 0.0
    %4373 = vmatprep.subr.mxu0 0.0
    %4374 = vmatpush1.msra.mxu0 0.0
    %4375 = vmatprep.subr.mxu0 0.0
    %4376 = vmatpush1.msra.mxu0 0.0
    %4377 = vmatprep.subr.mxu0 0.0
    %4378 = vmatpush1.msra.mxu0 0.0
    %4379 = vmatprep.subr.mxu0 0.0
    %4380 = vmatpush1.msra.mxu0 0.0
    %4381 = vmatprep.subr.mxu0 0.0
    %4382 = vmatpush1.msra.mxu0 0.0
    %4383 = vmatprep.subr.mxu0 0.0
    %4384 = vmatpush1.msra.mxu0 0.0
    %4385 = vmatprep.subr.mxu0 0.0
    %4386 = vmatpush1.msra.mxu0 0.0
    %4387 = vmatprep.subr.mxu0 0.0
    %4388 = vmatpush1.msra.mxu0 0.0
    %4389 = vmatprep.subr.mxu0 0.0
    %4390 = vmatpush1.msra.mxu0 0.0
    %4391 = vmatprep.subr.mxu0 0.0
    %4392 = vmatpush1.msra.mxu0 0.0
    %4393 = vmatprep.subr.mxu0 0.0
    %4394 = vmatpush1.msra.mxu0 0.0
    %4395 = vmatprep.subr.mxu0 0.0
    %4396 = vmatpush1.msra.mxu0 0.0
    %4397 = vmatprep.subr.mxu0 0.0
    %4398 = vmatpush1.msra.mxu0 0.0
    %4399 = vmatprep.subr.mxu0 0.0
    %4400 = vmatpush1.msra.mxu0 0.0
    %4401 = vmatprep.subr.mxu0 0.0
    %4402 = vmatpush1.msra.mxu0 0.0
    %4403 = vmatprep.subr.mxu0 0.0
    %4404 = vmatpush1.msra.mxu0 0.0
    %4405 = vmatprep.subr.mxu0 0.0
    %4406 = vmatpush1.msra.mxu0 0.0
    %4407 = vmatprep.subr.mxu0 0.0
    %4408 = vmatpush1.msra.mxu0 0.0
    %4409 = vmatprep.subr.mxu0 0.0
    %4410 = vmatpush1.msra.mxu0 0.0
    %4411 = vmatprep.subr.mxu0 0.0
    %4412 = vmatpush1.msra.mxu0 0.0
    %4413 = vmatprep.mubr.f32.mxu0 0.0
    %4414 = vmatmul.mubr.f32.gmra.mrb[0].mxu0 %v3496
    %v4415 = vpop.f32.mrb[0].mxu0
    %v4416 = vadd.f32 0.0, %v4415
    %v4417 = vpop.f32.mrb[0].mxu0
    %4418 = vdwg.mxu0
    %v4420 = vsel %vm3831, %v4416, 0
    %4422 = vmatprep.subr.mxu0 0.0
    %4423 = vmatpush1.msra.mxu0 %v3407
    %4424 = vmatprep.subr.mxu0 0.0
    %4425 = vmatpush1.msra.mxu0 %v3408
    %4426 = vmatprep.subr.mxu0 0.0
    %4427 = vmatpush1.msra.mxu0 %v3409
    %4428 = vmatprep.subr.mxu0 0.0
    %4429 = vmatpush1.msra.mxu0 %v3410
    %4430 = vmatprep.subr.mxu0 0.0
    %4431 = vmatpush1.msra.mxu0 %v3411
    %4432 = vmatprep.subr.mxu0 0.0
    %4433 = vmatpush1.msra.mxu0 %v3412
    %4434 = vmatprep.subr.mxu0 0.0
    %4435 = vmatpush1.msra.mxu0 0.0
    %4436 = vmatprep.subr.mxu0 0.0
    %4437 = vmatpush1.msra.mxu0 0.0
    %4438 = vmatprep.subr.mxu0 0.0
    %4439 = vmatpush1.msra.mxu0 0.0
    %4440 = vmatprep.subr.mxu0 0.0
    %4441 = vmatpush1.msra.mxu0 0.0
    %4442 = vmatprep.subr.mxu0 0.0
    %4443 = vmatpush1.msra.mxu0 0.0
    %4444 = vmatprep.subr.mxu0 0.0
    %4445 = vmatpush1.msra.mxu0 0.0
    %4446 = vmatprep.subr.mxu0 0.0
    %4447 = vmatpush1.msra.mxu0 0.0
    %4448 = vmatprep.subr.mxu0 0.0
    %4449 = vmatpush1.msra.mxu0 0.0
    %4450 = vmatprep.subr.mxu0 0.0
    %4451 = vmatpush1.msra.mxu0 0.0
    %4452 = vmatprep.subr.mxu0 0.0
    %4453 = vmatpush1.msra.mxu0 0.0
    %4454 = vmatprep.subr.mxu0 0.0
    %4455 = vmatpush1.msra.mxu0 0.0
    %4456 = vmatprep.subr.mxu0 0.0
    %4457 = vmatpush1.msra.mxu0 0.0
    %4458 = vmatprep.subr.mxu0 0.0
    %4459 = vmatpush1.msra.mxu0 0.0
    %4460 = vmatprep.subr.mxu0 0.0
    %4461 = vmatpush1.msra.mxu0 0.0
    %4462 = vmatprep.subr.mxu0 0.0
    %4463 = vmatpush1.msra.mxu0 0.0
    %4464 = vmatprep.subr.mxu0 0.0
    %4465 = vmatpush1.msra.mxu0 0.0
    %4466 = vmatprep.subr.mxu0 0.0
    %4467 = vmatpush1.msra.mxu0 0.0
    %4468 = vmatprep.subr.mxu0 0.0
    %4469 = vmatpush1.msra.mxu0 0.0
    %4470 = vmatprep.subr.mxu0 0.0
    %4471 = vmatpush1.msra.mxu0 0.0
    %4472 = vmatprep.subr.mxu0 0.0
    %4473 = vmatpush1.msra.mxu0 0.0
    %4474 = vmatprep.subr.mxu0 0.0
    %4475 = vmatpush1.msra.mxu0 0.0
    %4476 = vmatprep.subr.mxu0 0.0
    %4477 = vmatpush1.msra.mxu0 0.0
    %4478 = vmatprep.subr.mxu0 0.0
    %4479 = vmatpush1.msra.mxu0 0.0
    %4480 = vmatprep.subr.mxu0 0.0
    %4481 = vmatpush1.msra.mxu0 0.0
    %4482 = vmatprep.subr.mxu0 0.0
    %4483 = vmatpush1.msra.mxu0 0.0
    %4484 = vmatprep.subr.mxu0 0.0
    %4485 = vmatpush1.msra.mxu0 0.0
    %4486 = vmatprep.mubr.f32.mxu0 0.0
    %4487 = vmatmul.mubr.f32.gmra.mrb[0].mxu0 %v4420
    %v4488 = vpop.f32.mrb[0].mxu0
    %v4489 = vadd.f32 %v3829, %v4488
    %v4490 = vpop.f32.mrb[0].mxu0
    %4491 = vdwg.mxu0
    %v4492 = vmax.f32 %v4489, 0.0
    %v4494 = vrot.slane %v4492, 1
    %v4496 = vmax.f32 %v4492, %v4494
    %v4498 = vsel %vm3660, %v4496, 0
    %4500 = vmatprep.subr.mxu0 0.0
    %4501 = vmatpush1.msra.mxu0 %v4498
    %4502 = vmatprep.subr.mxu0 0.0
    %4503 = vmatpush1.msra.mxu0 0.0
    %4504 = vmatprep.subr.mxu0 0.0
    %4505 = vmatpush1.msra.mxu0 0.0
    %4506 = vmatprep.subr.mxu0 0.0
    %4507 = vmatpush1.msra.mxu0 0.0
    %4508 = vmatprep.subr.mxu0 0.0
    %4509 = vmatpush1.msra.mxu0 0.0
    %4510 = vmatprep.subr.mxu0 0.0
    %4511 = vmatpush1.msra.mxu0 0.0
    %4512 = vmatprep.subr.mxu0 0.0
    %4513 = vmatpush1.msra.mxu0 0.0
    %4514 = vmatprep.subr.mxu0 0.0
    %4515 = vmatpush1.msra.mxu0 0.0
    %4516 = vmatprep.subr.mxu0 0.0
    %4517 = vmatpush1.msra.mxu0 0.0
    %4518 = vmatprep.subr.mxu0 0.0
    %4519 = vmatpush1.msra.mxu0 0.0
    %4520 = vmatprep.subr.mxu0 0.0
    %4521 = vmatpush1.msra.mxu0 0.0
    %4522 = vmatprep.subr.mxu0 0.0
    %4523 = vmatpush1.msra.mxu0 0.0
    %4524 = vmatprep.subr.mxu0 0.0
    %4525 = vmatpush1.msra.mxu0 0.0
    %4526 = vmatprep.subr.mxu0 0.0
    %4527 = vmatpush1.msra.mxu0 0.0
    %4528 = vmatprep.subr.mxu0 0.0
    %4529 = vmatpush1.msra.mxu0 0.0
    %4530 = vmatprep.subr.mxu0 0.0
    %4531 = vmatpush1.msra.mxu0 0.0
    %4532 = vmatprep.subr.mxu0 0.0
    %4533 = vmatpush1.msra.mxu0 0.0
    %4534 = vmatprep.subr.mxu0 0.0
    %4535 = vmatpush1.msra.mxu0 0.0
    %4536 = vmatprep.subr.mxu0 0.0
    %4537 = vmatpush1.msra.mxu0 0.0
    %4538 = vmatprep.subr.mxu0 0.0
    %4539 = vmatpush1.msra.mxu0 0.0
    %4540 = vmatprep.subr.mxu0 0.0
    %4541 = vmatpush1.msra.mxu0 0.0
    %4542 = vmatprep.subr.mxu0 0.0
    %4543 = vmatpush1.msra.mxu0 0.0
    %4544 = vmatprep.subr.mxu0 0.0
    %4545 = vmatpush1.msra.mxu0 0.0
    %4546 = vmatprep.subr.mxu0 0.0
    %4547 = vmatpush1.msra.mxu0 0.0
    %4548 = vmatprep.subr.mxu0 0.0
    %4549 = vmatpush1.msra.mxu0 0.0
    %4550 = vmatprep.subr.mxu0 0.0
    %4551 = vmatpush1.msra.mxu0 0.0
    %4552 = vmatprep.subr.mxu0 0.0
    %4553 = vmatpush1.msra.mxu0 0.0
    %4554 = vmatprep.subr.mxu0 0.0
    %4555 = vmatpush1.msra.mxu0 0.0
    %4556 = vmatprep.subr.mxu0 0.0
    %4557 = vmatpush1.msra.mxu0 0.0
    %4558 = vmatprep.subr.mxu0 0.0
    %4559 = vmatpush1.msra.mxu0 0.0
    %4560 = vmatprep.subr.mxu0 0.0
    %4561 = vmatpush1.msra.mxu0 0.0
    %4562 = vmatprep.subr.mxu0 0.0
    %4563 = vmatpush1.msra.mxu0 0.0
    %4564 = vmatprep.mubr.f32.mxu0 0.0
    %4565 = vmatmul.mubr.f32.gmra.mrb[0].mxu0 %v3658
    %v4566 = vpop.f32.mrb[0].mxu0
    %v4567 = vadd.f32 0.0, %v4566
    %v4568 = vpop.f32.mrb[0].mxu0
    %4569 = vdwg.mxu0
    %v4570 = vmul.f32 %v4325, %v3987
    %v4571 = vsel %vm3990, %v4570, 0.0
    %4572 = vadd.xlane.f32.xlu0 %v4571
    %v4573 = vpop.xlane.xlu0 %4572
    %v4574 = vadd.f32 %v4573, %v3998
    %v4575 = vmul.f32 %v4567, %v4005
    %v4576 = vsel %vm4008, %v4575, 0.0
    %4577 = vadd.xlane.f32.xlu0 %v4576
    %v4578 = vpop.xlane.xlu0 %4577
    %v4579 = vadd.f32 %v4578, %v4016
    %v4580 = vmul.f32 %v4574, %v4579
    %v4581 = vsel %vm4020, %v4580, 0.0
    %v4582 = vrot.slane %v4581, 4
    %v4583 = vadd.f32 %v4581, %v4582
    %v4584 = vrot.slane %v4583, 2
    %v4585 = vadd.f32 %v4583, %v4584
    %v4586 = vrot.slane %v4585, 1
    %v4587 = vadd.f32 %v4585, %v4586
    %v4588 = vmul.f32 %v4587, %v4028
    %v4589 = vxor.u32 %v4588, 2147483648
    %v4590 = vmul.f32 %v4589, 1.442695
    %v4591 = vpow.pop %v4590
    %v4592 = vadd.f32 %v4591, 1.0
    %v4593 = vrcp.pop %v4592
    %v4594 = vmul.f32 1.0, %v4593
    %4596 = vset.pattern.permute.xlu0 0
    %4597 = vperm.xlu0 %4596, %v4594
    %v4598 = vpop.permute.xlu0 %4597
    %s4600 = scalar_lea.vmem [#allocation25], 8
    %4601 = vst [vmem:[%s4600] sm:$0xff] %v4598
    // Predicated region
    $region146: #{tpu_custom_call.1} parent=1 // pred_check
      _
    $region147: #{tpu_custom_call.1} parent=1 // pred_check_branch
      %4603 = sbr.rel (0) target = $region149
    $region148: #{tpu_custom_call.1} parent=1 // pred_region
      %s4605 = ssub.s32 256, 256
      %4606 = vsyncadd [#allocation6], %s4605
      %s4607 = sshll.u32 [#allocation25], 4
      %s4608 = int_to_ptr.vmem [resolvable:$true] %s4607
      %4613 = dma.vmem_to_hbm [thread:$0]  %s4608, 256, %s23, [#allocation6], 128, 128, 8
    $region149: #{tpu_custom_call.1} parent=1 // pred_fallthru
      _
    // Predicated region
    $region150: #{tpu_custom_call.1} parent=1 // pred_check
      _
    $region151: #{tpu_custom_call.1} parent=1 // pred_check_branch
      %4615 = sbr.rel (0) target = $region153
    $region152: #{tpu_custom_call.1} parent=1 // pred_region
      %4616 = dma.done [#allocation6], 256
    $region153: #{tpu_custom_call.1} parent=1 // pred_fallthru
      _
    %4617 = vsyncpa [#allocation5], 1
    %4618 = vsyncpa [#allocation8], 1
    %4619 = vsyncpa [#allocation11], 1
    %4620 = vsyncpa [#allocation14], 1
    %4621 = vsyncpa [#allocation17], 1
    %4622 = vsyncpa [#allocation20], 1
    %4623 = vsyncpa [#allocation23], 1
    %4624 = vsyncpa [#allocation6], 1

</llo_original>
